<compile_context>
chip_gen: v6e
topology: v6e:2x2x1
jax: 0.10.0
libtpu: 0.0.40
codegen_flags: <defaults>
</compile_context>

<pallas_src>
import functools
import math

import jax
import jax.numpy as jnp
from jax.experimental import pallas as pl
from jax.experimental.pallas import tpu as pltpu

C_IN = 3      # image channels
C_MID = 64    # hidden channels
_K = 9 * C_IN                    # 27 = 3x3 taps x 3 (in channels / out channels)
_TARGET_TILE_PIXELS = 8192       # ~rows*W per grid step for the auto chooser


def _pick_tile_h(H, W):
    """Pick a row-tile height: whole image for small frames, else a tile with
    (tile_h * W) % 128 == 0 so the lane-dense output block stays legal."""
    if H * W <= 128 * 128:
        return H
    base = 128 // math.gcd(W, 16)
    tile_h = base * max(1, _TARGET_TILE_PIXELS // (base * W))
    return H if tile_h >= H else tile_h


def aggnet_kernel(x_ref, w1_ref, w2_ref, o_ref, y_ref, *, tile_h, img_h, img_w):
    """One (image, row-strip) step of the fused AGGNet forward.

    x_ref : (tile_h+4, W+4, 3)   zero-padded input window (2-px halo)
    w1_ref: (27, 64)             stage1 weights, rows ordered (kh, kw, cin)
    w2_ref: (64, 27)             stage2 scatter weights, cols (kh, kw, cout)
    o_ref : (3, tile_h*W)        NCHW output strip (lane-dense store)
    y_ref : (tile_h+2, W+2, 27)  scratch: per-pixel scatter contributions
    """
    R, W, H = tile_h, img_w, img_h
    Re, We = R + 2, W + 2          # x1 strip incl. 1-px halo for stage 2
    P = Re * W                     # x1 pixels computed (valid columns only)
    t = pl.program_id(1)

    # ---- stage 1: fused K=27 im2col matmul + ReLU --------------------------
    # patch column order = (kh, kw, cin); matches w1 packing in the wrapper.
    pieces = []
    for a in range(3):
        for b in range(3):
            pieces.append(x_ref[a:a + Re, b + 1:b + 1 + W, :].reshape(P, C_IN))
    patches = jnp.concatenate(pieces, axis=-1).astype(jnp.float32)   # (P, 27)
    x1 = jnp.maximum(
        jnp.dot(patches, w1_ref[...].astype(jnp.float32),
                preferred_element_type=jnp.float32),
        0.0)                                                         # (P, 64)

    # Zero the x1 halo rows that fall outside the real image (this is the
    # zero padding stage2's ConvTranspose implies).  A sublane-iota mask on
    # the flattened pixel index replaces any scratch zeroing sweep.
    p_idx = jax.lax.broadcasted_iota(jnp.int32, (P, 1), 0)
    row_lo = jnp.where(t == 0, W, 0)          # mask local row 0 (global -1)
    row_hi = (H - t * R + 1) * W              # mask rows at/under global H
    keep = (p_idx >= row_lo) & (p_idx < row_hi)
    x1 = jnp.where(keep, x1, 0.0)

    # ---- stage 2: ConvTranspose as scatter = ONE (P,64)@(64,27) matmul -----
    y = jnp.dot(x1, w2_ref[...].astype(jnp.float32),
                preferred_element_type=jnp.float32)                  # (P, 27)
    # Border columns of the scatter buffer are the zero padding of x1;
    # zero only those two strips (never the whole scratch).
    y_ref[:, 0:1, :] = jnp.zeros((Re, 1, _K), jnp.float32)
    y_ref[:, W + 1:W + 2, :] = jnp.zeros((Re, 1, _K), jnp.float32)
    y_ref[:, 1:1 + W, :] = y.reshape(Re, W, _K)

    # residual + 9 shifted scatter adds (cheap VPU work, all slices on refs)
    out = x_ref[2:2 + R, 2:2 + W, :].astype(jnp.float32)             # (R,W,3)
    for a in range(3):
        for b in range(3):
            k = 3 * (3 * a + b)
            out = out + y_ref[a:a + R, b:b + W, k:k + 3]

    # ---- lane-dense NCHW store: (R*W, 3) -> (3, R*W) via a tiny MXU matmul -
    out_flat = out.reshape(R * W, C_IN)
    rr = jax.lax.broadcasted_iota(jnp.int32, (C_IN, C_IN), 0)
    cc = jax.lax.broadcasted_iota(jnp.int32, (C_IN, C_IN), 1)
    eye = (rr == cc).astype(jnp.float32)
    out_t = jax.lax.dot_general(eye, out_flat, (((1,), (1,)), ((), ())),
                                preferred_element_type=jnp.float32)  # (3, R*W)
    o_ref[...] = out_t.astype(o_ref.dtype)


def aggnet_forward(x_nchw, w_conv, w_convt, *, tile_h=None):
    """AGGNet forward: x + ConvT(ReLU(Conv(x))).

    x_nchw : (N, 3, H, W)   PyTorch-layout input
    w_conv : (64, 3, 3, 3)  Conv2d weight, OIHW
    w_convt: (64, 3, 3, 3)  ConvTranspose2d weight, (in, out, kH, kW)
    """
    N, C, H, W = x_nchw.shape
    assert C == C_IN
    if tile_h is None:
        tile_h = _pick_tile_h(H, W)
    nt = -(-H // tile_h)
    if nt > 1 and (tile_h * W) % 128 != 0:
        raise ValueError("tile_h * W must be a multiple of 128 when row-tiling")
    hp = nt * tile_h

    # NCHW -> NHWC, zero-pad by 2 (1 for stage1's own padding + 1 so each
    # strip can recompute its x1 halo rows), pad H up to a multiple of tile_h,
    # then gather overlapping (tile_h+4)-row windows so plain Blocked
    # BlockSpecs (with automatic double-buffered pipelining) cover the halo.
    x = jnp.transpose(x_nchw, (0, 2, 3, 1))
    x = jnp.pad(x, ((0, 0), (2, hp - H + 2), (2, 2), (0, 0)))
    rows = jnp.arange(nt)[:, None] * tile_h + jnp.arange(tile_h + 4)[None, :]
    x_tiles = x[:, rows]                             # (N, nt, tile_h+4, W+4, 3)

    # stage1 weights -> (27, 64), rows ordered (kh, kw, cin).
    w1 = jnp.transpose(w_conv, (2, 3, 1, 0)).reshape(_K, C_MID)
    # stage2: ConvTranspose(pad=1, stride=1) == conv with flipped taps.  Pack
    # as (64, 27) so one matmul yields, per x1 pixel, its contribution to the
    # 3x3 output neighbourhood x 3 output channels (cols = (kh, kw, cout)).
    w2f = jnp.transpose(jnp.flip(w_convt, (2, 3)), (2, 3, 0, 1))     # (3,3,64,3)
    w2 = jnp.transpose(w2f, (2, 0, 1, 3)).reshape(C_MID, _K)

    kernel = functools.partial(aggnet_kernel, tile_h=tile_h, img_h=H, img_w=W)
    out = pl.pallas_call(
        kernel,
        out_shape=jax.ShapeDtypeStruct((N, C_IN, hp * W), x_nchw.dtype),
        grid_spec=pltpu.PrefetchScalarGridSpec(
            num_scalar_prefetch=0,
            grid=(N, nt),
            in_specs=[
                pl.BlockSpec(
                    (pl.Squeezed(), pl.Squeezed(), tile_h + 4, W + 4, C_IN),
                    lambda n, t: (n, t, 0, 0, 0)),
                pl.BlockSpec((_K, C_MID), lambda n, t: (0, 0)),
                pl.BlockSpec((C_MID, _K), lambda n, t: (0, 0)),
            ],
            out_specs=pl.BlockSpec((pl.Squeezed(), C_IN, tile_h * W),
                                   lambda n, t: (n, 0, t)),
            scratch_shapes=[
                pltpu.VMEM((tile_h + 2, W + 2, _K), jnp.float32)],
        ),
        compiler_params=pltpu.CompilerParams(
            dimension_semantics=("parallel", "parallel"),
            vmem_limit_bytes=48 * 1024 * 1024),
    )(x_tiles, w1, w2)

    # Free reshape + row slice back to NCHW (no output transpose needed).
    return out.reshape(N, C_IN, hp, W)[:, :, :H, :]


def aggnet_reference(x_nchw, w_conv, w_convt):
    """Pure-JAX reference (XLA convs) with identical math."""
    x = jnp.transpose(x_nchw, (0, 2, 3, 1))
    w1 = jnp.transpose(w_conv, (2, 3, 1, 0))
    w2 = jnp.transpose(jnp.flip(w_convt, (2, 3)), (2, 3, 0, 1))
    dn = ("NHWC", "HWIO", "NHWC")
    x1 = jax.nn.relu(jax.lax.conv_general_dilated(
        x, w1, (1, 1), "SAME", dimension_numbers=dn))
    x2 = jax.lax.conv_general_dilated(
        x1, w2, (1, 1), "SAME", dimension_numbers=dn)
    return jnp.transpose(x + x2, (0, 3, 1, 2))


if __name__ == "__main__":
    key = jax.random.PRNGKey(0)
    k1, k2, k3, k4 = jax.random.split(key, 4)

    # Deterministic synthetic parameters (shapes from AGGNet.__init__):
    w_conv = jax.random.normal(k1, (C_MID, C_IN, 3, 3), jnp.float32) * 0.1
    w_convt = jax.random.normal(k2, (C_MID, C_IN, 3, 3), jnp.float32) * 0.1

    # Small NCHW input (single-tile path).
    x = jax.random.normal(k3, (2, C_IN, 16, 16), jnp.float32)
    out = jax.block_until_ready(aggnet_forward(x, w_conv, w_convt))
    ref = jax.block_until_ready(aggnet_reference(x, w_conv, w_convt))
    assert out.shape == x.shape and out.dtype == x.dtype
    assert jnp.allclose(out, ref, atol=1e-3, rtol=1e-3), (
        float(jnp.max(jnp.abs(out - ref))))

    # Row-tiled path (tile_h=8 -> 4 strips: halo recompute + boundary masks).
    x2 = jax.random.normal(k4, (1, C_IN, 32, 16), jnp.float32)
    out2 = jax.block_until_ready(aggnet_forward(x2, w_conv, w_convt, tile_h=8))
    ref2 = jax.block_until_ready(aggnet_reference(x2, w_conv, w_convt))
    assert out2.shape == x2.shape
    assert jnp.allclose(out2, ref2, atol=1e-3, rtol=1e-3), (
        float(jnp.max(jnp.abs(out2 - ref2))))

    print("KERNEL_OK")
</pallas_src>

<mosaic_0001>
module attributes {stable_mosaic.version = 11 : i64} {
  func.func @aggnet_kernel(%arg0: i32, %arg1: i32, %arg2: memref<1x1x20x20x3xf32, #tpu.memory_space<vmem>>, %arg3: memref<27x64xf32, #tpu.memory_space<vmem>>, %arg4: memref<64x27xf32, #tpu.memory_space<vmem>>, %arg5: memref<1x3x256xf32, #tpu.memory_space<vmem>>, %arg6: memref<18x18x27xf32, #tpu.memory_space<vmem>>) attributes {dimension_semantics = [#tpu.dimension_semantics<parallel>, #tpu.dimension_semantics<parallel>], iteration_bounds = array<i64: 2, 1>, scalar_prefetch = 0 : i64, scratch_operands = 1 : i64, tpu.core_type = #tpu.core_type<tc>, window_params = [{transform_indices = @transform_0, window_bounds = array<i64: 1, 1, 20, 20, 3>}, {pipeline_mode = #tpu.pipeline_mode<synchronous>, transform_indices = @transform_1, window_bounds = array<i64: 27, 64>}, {pipeline_mode = #tpu.pipeline_mode<synchronous>, transform_indices = @transform_2, window_bounds = array<i64: 64, 27>}, {transform_indices = @transform_3, window_bounds = array<i64: 1, 3, 256>}]} {
    %c0 = arith.constant 0 : index
    %c0_0 = arith.constant 0 : index
    %c0_1 = arith.constant 0 : index
    %c1 = arith.constant 1 : index
    %c0_2 = arith.constant 0 : index
    %0 = vector.load %arg2[%c0, %c0_0, %c0_1, %c1, %c0_2] : memref<1x1x20x20x3xf32, #tpu.memory_space<vmem>>, vector<1x1x18x16x3xf32>
    %1 = vector.shape_cast %0 : vector<1x1x18x16x3xf32> to vector<18x16x3xf32>
    %2 = vector.shape_cast %1 : vector<18x16x3xf32> to vector<288x3xf32>
    %c0_3 = arith.constant 0 : index
    %c0_4 = arith.constant 0 : index
    %c0_5 = arith.constant 0 : index
    %c2 = arith.constant 2 : index
    %c0_6 = arith.constant 0 : index
    %3 = vector.load %arg2[%c0_3, %c0_4, %c0_5, %c2, %c0_6] : memref<1x1x20x20x3xf32, #tpu.memory_space<vmem>>, vector<1x1x18x16x3xf32>
    %4 = vector.shape_cast %3 : vector<1x1x18x16x3xf32> to vector<18x16x3xf32>
    %5 = vector.shape_cast %4 : vector<18x16x3xf32> to vector<288x3xf32>
    %c0_7 = arith.constant 0 : index
    %c0_8 = arith.constant 0 : index
    %c0_9 = arith.constant 0 : index
    %c3 = arith.constant 3 : index
    %c0_10 = arith.constant 0 : index
    %6 = vector.load %arg2[%c0_7, %c0_8, %c0_9, %c3, %c0_10] : memref<1x1x20x20x3xf32, #tpu.memory_space<vmem>>, vector<1x1x18x16x3xf32>
    %7 = vector.shape_cast %6 : vector<1x1x18x16x3xf32> to vector<18x16x3xf32>
    %8 = vector.shape_cast %7 : vector<18x16x3xf32> to vector<288x3xf32>
    %c0_11 = arith.constant 0 : index
    %c0_12 = arith.constant 0 : index
    %c1_13 = arith.constant 1 : index
    %c1_14 = arith.constant 1 : index
    %c0_15 = arith.constant 0 : index
    %9 = vector.load %arg2[%c0_11, %c0_12, %c1_13, %c1_14, %c0_15] : memref<1x1x20x20x3xf32, #tpu.memory_space<vmem>>, vector<1x1x18x16x3xf32>
    %10 = vector.shape_cast %9 : vector<1x1x18x16x3xf32> to vector<18x16x3xf32>
    %11 = vector.shape_cast %10 : vector<18x16x3xf32> to vector<288x3xf32>
    %c0_16 = arith.constant 0 : index
    %c0_17 = arith.constant 0 : index
    %c1_18 = arith.constant 1 : index
    %c2_19 = arith.constant 2 : index
    %c0_20 = arith.constant 0 : index
    %12 = vector.load %arg2[%c0_16, %c0_17, %c1_18, %c2_19, %c0_20] : memref<1x1x20x20x3xf32, #tpu.memory_space<vmem>>, vector<1x1x18x16x3xf32>
    %13 = vector.shape_cast %12 : vector<1x1x18x16x3xf32> to vector<18x16x3xf32>
    %14 = vector.shape_cast %13 : vector<18x16x3xf32> to vector<288x3xf32>
    %c0_21 = arith.constant 0 : index
    %c0_22 = arith.constant 0 : index
    %c1_23 = arith.constant 1 : index
    %c3_24 = arith.constant 3 : index
    %c0_25 = arith.constant 0 : index
    %15 = vector.load %arg2[%c0_21, %c0_22, %c1_23, %c3_24, %c0_25] : memref<1x1x20x20x3xf32, #tpu.memory_space<vmem>>, vector<1x1x18x16x3xf32>
    %16 = vector.shape_cast %15 : vector<1x1x18x16x3xf32> to vector<18x16x3xf32>
    %17 = vector.shape_cast %16 : vector<18x16x3xf32> to vector<288x3xf32>
    %c0_26 = arith.constant 0 : index
    %c0_27 = arith.constant 0 : index
    %c2_28 = arith.constant 2 : index
    %c1_29 = arith.constant 1 : index
    %c0_30 = arith.constant 0 : index
    %18 = vector.load %arg2[%c0_26, %c0_27, %c2_28, %c1_29, %c0_30] : memref<1x1x20x20x3xf32, #tpu.memory_space<vmem>>, vector<1x1x18x16x3xf32>
    %19 = vector.shape_cast %18 : vector<1x1x18x16x3xf32> to vector<18x16x3xf32>
    %20 = vector.shape_cast %19 : vector<18x16x3xf32> to vector<288x3xf32>
    %c0_31 = arith.constant 0 : index
    %c0_32 = arith.constant 0 : index
    %c2_33 = arith.constant 2 : index
    %c2_34 = arith.constant 2 : index
    %c0_35 = arith.constant 0 : index
    %21 = vector.load %arg2[%c0_31, %c0_32, %c2_33, %c2_34, %c0_35] : memref<1x1x20x20x3xf32, #tpu.memory_space<vmem>>, vector<1x1x18x16x3xf32>
    %22 = vector.shape_cast %21 : vector<1x1x18x16x3xf32> to vector<18x16x3xf32>
    %23 = vector.shape_cast %22 : vector<18x16x3xf32> to vector<288x3xf32>
    %c0_36 = arith.constant 0 : index
    %c0_37 = arith.constant 0 : index
    %c2_38 = arith.constant 2 : index
    %c3_39 = arith.constant 3 : index
    %c0_40 = arith.constant 0 : index
    %24 = vector.load %arg2[%c0_36, %c0_37, %c2_38, %c3_39, %c0_40] : memref<1x1x20x20x3xf32, #tpu.memory_space<vmem>>, vector<1x1x18x16x3xf32>
    %25 = vector.shape_cast %24 : vector<1x1x18x16x3xf32> to vector<18x16x3xf32>
    %26 = vector.shape_cast %25 : vector<18x16x3xf32> to vector<288x3xf32>
    %27 = tpu.concatenate %2, %5, %8, %11, %14, %17, %20, %23, %26 in 1 : vector<288x3xf32>, vector<288x3xf32>, vector<288x3xf32>, vector<288x3xf32>, vector<288x3xf32>, vector<288x3xf32>, vector<288x3xf32>, vector<288x3xf32>, vector<288x3xf32> -> vector<288x27xf32>
    %c0_41 = arith.constant 0 : index
    %c0_42 = arith.constant 0 : index
    %28 = vector.load %arg3[%c0_41, %c0_42] : memref<27x64xf32, #tpu.memory_space<vmem>>, vector<27x64xf32>
    %cst = arith.constant dense<0.000000e+00> : vector<288x64xf32>
    %29 = tpu.matmul %27, %28, %cst {dimension_numbers = #tpu.dot_dimension_numbers<[1], [0], [0], [1], [0, 0, 1, 1], [], []>} : vector<288x27xf32>, vector<27x64xf32>, vector<288x64xf32> -> vector<288x64xf32>
    %cst_43 = arith.constant 0.000000e+00 : f32
    %30 = vector.broadcast %cst_43 : f32 to vector<288x64xf32>
    %31 = arith.maximumf %29, %30 : vector<288x64xf32>
    %32 = tpu.iota {dimensions = array<i32: 0>} : vector<288x1xi32>
    %c0_i32 = arith.constant 0 : i32
    %33 = arith.cmpi eq, %arg1, %c0_i32 : i32
    %c16_i32 = arith.constant 16 : i32
    %c0_i32_44 = arith.constant 0 : i32
    %34 = arith.select %33, %c16_i32, %c0_i32_44 : i32
    %c16_i32_45 = arith.constant 16 : i32
    %35 = arith.muli %arg1, %c16_i32_45 : i32
    %c16_i32_46 = arith.constant 16 : i32
    %36 = arith.subi %c16_i32_46, %35 : i32
    %c1_i32 = arith.constant 1 : i32
    %37 = arith.addi %36, %c1_i32 : i32
    %c16_i32_47 = arith.constant 16 : i32
    %38 = arith.muli %37, %c16_i32_47 : i32
    %39 = vector.broadcast %34 : i32 to vector<288x1xi32>
    %40 = arith.cmpi sge, %32, %39 : vector<288x1xi32>
    %41 = vector.broadcast %38 : i32 to vector<288x1xi32>
    %42 = arith.cmpi slt, %32, %41 : vector<288x1xi32>
    %43 = arith.andi %40, %42 : vector<288x1xi1>
    %cst_48 = arith.constant 0.000000e+00 : f32
    %44 = vector.shape_cast %43 : vector<288x1xi1> to vector<288x1xi1>
    %45 = vector.broadcast %44 : vector<288x1xi1> to vector<288x64xi1>
    %46 = vector.broadcast %cst_48 : f32 to vector<288x64xf32>
    %47 = arith.select %45, %31, %46 : vector<288x64xi1>, vector<288x64xf32>
    %c0_49 = arith.constant 0 : index
    %c0_50 = arith.constant 0 : index
    %48 = vector.load %arg4[%c0_49, %c0_50] : memref<64x27xf32, #tpu.memory_space<vmem>>, vector<64x27xf32>
    %cst_51 = arith.constant dense<0.000000e+00> : vector<288x27xf32>
    %49 = tpu.matmul %47, %48, %cst_51 {dimension_numbers = #tpu.dot_dimension_numbers<[1], [0], [0], [1], [0, 0, 1, 1], [], []>} : vector<288x64xf32>, vector<64x27xf32>, vector<288x27xf32> -> vector<288x27xf32>
    %cst_52 = arith.constant 0.000000e+00 : f32
    %50 = vector.broadcast %cst_52 : f32 to vector<18x1x27xf32>
    %c0_53 = arith.constant 0 : index
    %c0_54 = arith.constant 0 : index
    %c0_55 = arith.constant 0 : index
    %51 = vector.load %arg6[%c0_53, %c0_54, %c0_55] : memref<18x18x27xf32, #tpu.memory_space<vmem>>, vector<18x1x27xf32>
    tpu.vector_store %arg6[%c0_53, %c0_54, %c0_55], %50 {strides = array<i32>} : memref<18x18x27xf32, #tpu.memory_space<vmem>>, vector<18x1x27xf32>,
    %cst_56 = arith.constant 0.000000e+00 : f32
    %52 = vector.broadcast %cst_56 : f32 to vector<18x1x27xf32>
    %c0_57 = arith.constant 0 : index
    %c17 = arith.constant 17 : index
    %c0_58 = arith.constant 0 : index
    %53 = vector.load %arg6[%c0_57, %c17, %c0_58] : memref<18x18x27xf32, #tpu.memory_space<vmem>>, vector<18x1x27xf32>
    tpu.vector_store %arg6[%c0_57, %c17, %c0_58], %52 {strides = array<i32>} : memref<18x18x27xf32, #tpu.memory_space<vmem>>, vector<18x1x27xf32>,
    %54 = vector.shape_cast %49 : vector<288x27xf32> to vector<18x16x27xf32>
    %c0_59 = arith.constant 0 : index
    %c1_60 = arith.constant 1 : index
    %c0_61 = arith.constant 0 : index
    %55 = vector.load %arg6[%c0_59, %c1_60, %c0_61] : memref<18x18x27xf32, #tpu.memory_space<vmem>>, vector<18x16x27xf32>
    tpu.vector_store %arg6[%c0_59, %c1_60, %c0_61], %54 {strides = array<i32>} : memref<18x18x27xf32, #tpu.memory_space<vmem>>, vector<18x16x27xf32>,
    %c0_62 = arith.constant 0 : index
    %c0_63 = arith.constant 0 : index
    %c2_64 = arith.constant 2 : index
    %c2_65 = arith.constant 2 : index
    %c0_66 = arith.constant 0 : index
    %56 = vector.load %arg2[%c0_62, %c0_63, %c2_64, %c2_65, %c0_66] : memref<1x1x20x20x3xf32, #tpu.memory_space<vmem>>, vector<1x1x16x16x3xf32>
    %57 = vector.shape_cast %56 : vector<1x1x16x16x3xf32> to vector<16x16x3xf32>
    %c0_67 = arith.constant 0 : index
    %c0_68 = arith.constant 0 : index
    %c0_69 = arith.constant 0 : index
    %58 = vector.load %arg6[%c0_67, %c0_68, %c0_69] : memref<18x18x27xf32, #tpu.memory_space<vmem>>, vector<16x16x3xf32>
    %59 = arith.addf %57, %58 : vector<16x16x3xf32>
    %c0_70 = arith.constant 0 : index
    %c1_71 = arith.constant 1 : index
    %c3_72 = arith.constant 3 : index
    %60 = vector.load %arg6[%c0_70, %c1_71, %c3_72] : memref<18x18x27xf32, #tpu.memory_space<vmem>>, vector<16x16x3xf32>
    %61 = arith.addf %59, %60 : vector<16x16x3xf32>
    %c0_73 = arith.constant 0 : index
    %c2_74 = arith.constant 2 : index
    %c6 = arith.constant 6 : index
    %62 = vector.load %arg6[%c0_73, %c2_74, %c6] : memref<18x18x27xf32, #tpu.memory_space<vmem>>, vector<16x16x3xf32>
    %63 = arith.addf %61, %62 : vector<16x16x3xf32>
    %c1_75 = arith.constant 1 : index
    %c0_76 = arith.constant 0 : index
    %c9 = arith.constant 9 : index
    %64 = vector.load %arg6[%c1_75, %c0_76, %c9] : memref<18x18x27xf32, #tpu.memory_space<vmem>>, vector<16x16x3xf32>
    %65 = arith.addf %63, %64 : vector<16x16x3xf32>
    %c1_77 = arith.constant 1 : index
    %c1_78 = arith.constant 1 : index
    %c12 = arith.constant 12 : index
    %66 = vector.load %arg6[%c1_77, %c1_78, %c12] : memref<18x18x27xf32, #tpu.memory_space<vmem>>, vector<16x16x3xf32>
    %67 = arith.addf %65, %66 : vector<16x16x3xf32>
    %c1_79 = arith.constant 1 : index
    %c2_80 = arith.constant 2 : index
    %c15 = arith.constant 15 : index
    %68 = vector.load %arg6[%c1_79, %c2_80, %c15] : memref<18x18x27xf32, #tpu.memory_space<vmem>>, vector<16x16x3xf32>
    %69 = arith.addf %67, %68 : vector<16x16x3xf32>
    %c2_81 = arith.constant 2 : index
    %c0_82 = arith.constant 0 : index
    %c18 = arith.constant 18 : index
    %70 = vector.load %arg6[%c2_81, %c0_82, %c18] : memref<18x18x27xf32, #tpu.memory_space<vmem>>, vector<16x16x3xf32>
    %71 = arith.addf %69, %70 : vector<16x16x3xf32>
    %c2_83 = arith.constant 2 : index
    %c1_84 = arith.constant 1 : index
    %c21 = arith.constant 21 : index
    %72 = vector.load %arg6[%c2_83, %c1_84, %c21] : memref<18x18x27xf32, #tpu.memory_space<vmem>>, vector<16x16x3xf32>
    %73 = arith.addf %71, %72 : vector<16x16x3xf32>
    %c2_85 = arith.constant 2 : index
    %c2_86 = arith.constant 2 : index
    %c24 = arith.constant 24 : index
    %74 = vector.load %arg6[%c2_85, %c2_86, %c24] : memref<18x18x27xf32, #tpu.memory_space<vmem>>, vector<16x16x3xf32>
    %75 = arith.addf %73, %74 : vector<16x16x3xf32>
    %76 = vector.shape_cast %75 : vector<16x16x3xf32> to vector<256x3xf32>
    %77 = tpu.iota {dimensions = array<i32: 0>} : vector<3x3xi32>
    %78 = tpu.iota {dimensions = array<i32: 1>} : vector<3x3xi32>
    %79 = arith.cmpi eq, %77, %78 : vector<3x3xi32>
    %80 = arith.extui %79 : vector<3x3xi1> to vector<3x3xi32>
    %81 = arith.sitofp %80 : vector<3x3xi32> to vector<3x3xf32>
    %cst_87 = arith.constant dense<0.000000e+00> : vector<3x256xf32>
    %82 = tpu.matmul %81, %76, %cst_87 {dimension_numbers = #tpu.dot_dimension_numbers<[1], [1], [0], [0], [0, 0, 1, 0], [], []>} : vector<3x3xf32>, vector<256x3xf32>, vector<3x256xf32> -> vector<3x256xf32>
    %c0_88 = arith.constant 0 : index
    %c0_89 = arith.constant 0 : index
    %c0_90 = arith.constant 0 : index
    %83 = vector.load %arg5[%c0_88, %c0_89, %c0_90] : memref<1x3x256xf32, #tpu.memory_space<vmem>>, vector<1x3x256xf32>
    %84 = vector.shape_cast %83 : vector<1x3x256xf32> to vector<3x256xf32>
    %85 = vector.shape_cast %82 : vector<3x256xf32> to vector<1x3x256xf32>
    tpu.vector_store %arg5[%c0_88, %c0_89, %c0_90], %85 {strides = array<i32>} : memref<1x3x256xf32, #tpu.memory_space<vmem>>, vector<1x3x256xf32>,
    return
  }
  func.func @transform_0(%arg0: i32, %arg1: i32) -> (i32, i32, i32, i32, i32) {
    %c0_i32 = arith.constant 0 : i32
    %c0_i32_0 = arith.constant 0 : i32
    %c0_i32_1 = arith.constant 0 : i32
    %c0_i32_2 = arith.constant 0 : i32
    return %arg0, %arg1, %c0_i32, %c0_i32_0, %c0_i32_1 : i32, i32, i32, i32, i32
  }
  func.func @transform_1(%arg0: i32, %arg1: i32) -> (i32, i32) {
    %c0_i32 = arith.constant 0 : i32
    %c0_i32_0 = arith.constant 0 : i32
    %c0_i32_1 = arith.constant 0 : i32
    return %c0_i32, %c0_i32_0 : i32, i32
  }
  func.func @transform_2(%arg0: i32, %arg1: i32) -> (i32, i32) {
    %c0_i32 = arith.constant 0 : i32
    %c0_i32_0 = arith.constant 0 : i32
    %c0_i32_1 = arith.constant 0 : i32
    return %c0_i32, %c0_i32_0 : i32, i32
  }
  func.func @transform_3(%arg0: i32, %arg1: i32) -> (i32, i32, i32) {
    %c0_i32 = arith.constant 0 : i32
    %c0_i32_0 = arith.constant 0 : i32
    return %arg0, %c0_i32, %arg1 : i32, i32, i32
  }
}

</mosaic_0001>

<llo_original>
// kernel: tpu_custom_call.1
$region0: #{tpu_custom_call.1}
  #allocation0 [shape = 'u32[]', space=smem, size = 0x4, offset = 0x4, fixed_abs, tag = 'smem constant byte address 0x4 - core index']
  #allocation1 [shape = 'u32[144,128]{1,0:T(1,128)}', space=vmem, size = 0x12000, scoped, tag = 'internal scratch']
  #allocation2 [shape = 'f32[18,18,27]{2,1,0:T(8,128)}', space=vmem, size = 0x36000, scoped, tag = 'scratch operand']
  %s0 = inlined_call_operand.vmem [shape: f32[2,1,20,20,3], index: 0, kind: input, shape index: {}]
  %s1 = inlined_call_operand.vmem [shape: f32[27,64], index: 1, kind: input, shape index: {}]
  %s2 = inlined_call_operand.vmem [shape: f32[64,27], index: 2, kind: input, shape index: {}]
  %s3 = inlined_call_operand.vmem [shape: f32[2,3,256], index: 3, kind: output, shape index: {}]
  %s4 = sld [smem:[#allocation0]]
  $region45: #{tpu_custom_call.1} parent=0
    _
  %s6 = ssub.s32 1, %s4
  %s7 = scalar_select 0, %s6, %s4
  loop: start=0, step=1, limit=4
  $region2: #{tpu_custom_call.1} parent=0 // loop_pre_header
    _
  $region3: #{tpu_custom_call.1} parent=0 // loop_header
    %s9 = sphi 0, %s13
    %p10 = scmp.ge.s32.totalorder %s9, 4
    %s16 = sphi 0, %s28
    %s17 = sphi 0, %s24
    %s18 = sphi 0, %s16
    %s19 = sphi 0, %s17
    %s20 = sphi 0, %s18
    %s21 = sphi 0, %s19
    %s33 = sphi 0, %s35
    %s36 = sphi 0, %s33
    %s37 = sphi 0, %s36
    %s53 = sphi 0, %s37
    %s57 = sphi 0, %s57
    %s59 = sphi 0, %s57
    %s60 = sphi 0, %s59
    %s74 = sphi 0, %s60
    %s78 = sphi 0, %s78
    %s80 = sphi 0, %s78
    %s81 = sphi 0, %s80
    %s95 = sphi 0, %s81
    %s103 = sphi 0, %s105
    %s106 = sphi 0, %s103
    %s107 = sphi 0, %s106
    %s123 = sphi 0, %s107
  $region4: #{tpu_custom_call.1} parent=0 // loop_header_branch
    %12 = sbr.rel (%p10) target = $region8
  $region5: #{tpu_custom_call.1} parent=0 // loop_body
    %s14 = ssub.s32 %s9, 1
    %s15 = ssub.s32 %s9, 2
    %s22 = sadd.s32 1, %s17
    %p23 = scmp.ge.s32.totalorder %s22, 1
    %s24 = scalar_select %p23, 0, %s22
    %s25 = sadd.s32 1, %s16
    %s26 = scalar_select %p23, %s25, %s16
    %p27 = scmp.ge.s32.totalorder %s26, 2
    %s28 = scalar_select %p27, 0, %s26
    %s29 = ssub.s32 %s16, %s28
    %s30 = ssub.s32 %s17, %s24
    %s31 = sor.u32 %s29, %s30
    %p32 = scmp.eq.s32.totalorder %s31, 0
    %s34 = sadd.s32 %s33, 1
    %s35 = scalar_select %p32, %s33, %s34
    %p38 = pneg %p32
    %p39 = scmp.eq.s32.totalorder %s9, 1
    %p40 = por %p38, %p39
    %p41 = scmp.ne.s32.totalorder %s33, %s36
    %p42 = scmp.eq.s32.totalorder %s9, 0
    %p43 = por %p41, %p42
    %p44 = scmp.ne.s32.totalorder %s33, %s36
    %p45 = scmp.eq.s32.totalorder %s14, 1
    %p46 = por %p44, %p45
    %p47 = scmp.ne.s32.totalorder %s36, %s37
    %p48 = scmp.eq.s32.totalorder %s14, 0
    %p49 = por %p47, %p48
    %p50 = scmp.ne.s32.totalorder %s36, %s37
    %p51 = scmp.eq.s32.totalorder %s15, 1
    %p52 = por %p50, %p51
    %p54 = scmp.ne.s32.totalorder %s37, %s53
    %p55 = scmp.eq.s32.totalorder %s15, 0
    %p56 = por %p54, %p55
    %s58 = sadd.s32 %s57, 1
    %p61 = scmp.eq.s32.totalorder %s9, 1
    %p62 = scmp.ne.s32.totalorder %s57, %s59
    %p63 = scmp.eq.s32.totalorder %s9, 0
    %p64 = por %p62, %p63
    %p65 = scmp.ne.s32.totalorder %s57, %s59
    %p66 = scmp.eq.s32.totalorder %s14, 1
    %p67 = por %p65, %p66
    %p68 = scmp.ne.s32.totalorder %s59, %s60
    %p69 = scmp.eq.s32.totalorder %s14, 0
    %p70 = por %p68, %p69
    %p71 = scmp.ne.s32.totalorder %s59, %s60
    %p72 = scmp.eq.s32.totalorder %s15, 1
    %p73 = por %p71, %p72
    %p75 = scmp.ne.s32.totalorder %s60, %s74
    %p76 = scmp.eq.s32.totalorder %s15, 0
    %p77 = por %p75, %p76
    %s79 = sadd.s32 %s78, 1
    %p82 = scmp.eq.s32.totalorder %s9, 1
    %p83 = scmp.ne.s32.totalorder %s78, %s80
    %p84 = scmp.eq.s32.totalorder %s9, 0
    %p85 = por %p83, %p84
    %p86 = scmp.ne.s32.totalorder %s78, %s80
    %p87 = scmp.eq.s32.totalorder %s14, 1
    %p88 = por %p86, %p87
    %p89 = scmp.ne.s32.totalorder %s80, %s81
    %p90 = scmp.eq.s32.totalorder %s14, 0
    %p91 = por %p89, %p90
    %p92 = scmp.ne.s32.totalorder %s80, %s81
    %p93 = scmp.eq.s32.totalorder %s15, 1
    %p94 = por %p92, %p93
    %p96 = scmp.ne.s32.totalorder %s81, %s95
    %p97 = scmp.eq.s32.totalorder %s15, 0
    %p98 = por %p96, %p97
    %s99 = ssub.s32 %s16, %s28
    %s100 = ssub.s32 %s17, %s24
    %s101 = sor.u32 %s99, %s100
    %p102 = scmp.eq.s32.totalorder %s101, 0
    %s104 = sadd.s32 %s103, 1
    %s105 = scalar_select %p102, %s103, %s104
    %p108 = pneg %p102
    %p109 = scmp.eq.s32.totalorder %s9, 1
    %p110 = por %p108, %p109
    %p111 = scmp.ne.s32.totalorder %s103, %s106
    %p112 = scmp.eq.s32.totalorder %s9, 0
    %p113 = por %p111, %p112
    %p114 = scmp.ne.s32.totalorder %s103, %s106
    %p115 = scmp.eq.s32.totalorder %s14, 1
    %p116 = por %p114, %p115
    %p117 = scmp.ne.s32.totalorder %s106, %s107
    %p118 = scmp.eq.s32.totalorder %s14, 0
    %p119 = por %p117, %p118
    %p120 = scmp.ne.s32.totalorder %s106, %s107
    %p121 = scmp.eq.s32.totalorder %s15, 1
    %p122 = por %p120, %p121
    %p124 = scmp.ne.s32.totalorder %s107, %s123
    %p125 = scmp.eq.s32.totalorder %s15, 0
    %p126 = por %p124, %p125
    %p127 = scmp.le.s32.totalorder 1, %s9
    %p128 = scmp.lt.s32.totalorder %s9, 3
    %p129 = pnand %p127, %p128
    %p130 = pneg %p129
    // Predicated region
    $region9: #{tpu_custom_call.1} parent=5 // pred_check
      _
    $region10: #{tpu_custom_call.1} parent=5 // pred_check_branch
      %132 = sbr.rel (%p129) target = $region12
    $region11: #{tpu_custom_call.1} parent=5 // pred_region
      %s133 = ssub.s32 %s9, 1
      // Predicated region
      $region13: #{tpu_custom_call.1} parent=11 // pred_check
        %p134 = pneg %p70
      $region14: #{tpu_custom_call.1} parent=11 // pred_check_branch
        %136 = sbr.rel (%p134) target = $region16
      $region15: #{tpu_custom_call.1} parent=11 // pred_region
        _
      $region16: #{tpu_custom_call.1} parent=11 // pred_fallthru
        _
      // Predicated region
      $region17: #{tpu_custom_call.1} parent=11 // pred_check
        %p137 = pneg %p91
      $region18: #{tpu_custom_call.1} parent=11 // pred_check_branch
        %139 = sbr.rel (%p137) target = $region20
      $region19: #{tpu_custom_call.1} parent=11 // pred_region
        _
      $region20: #{tpu_custom_call.1} parent=11 // pred_fallthru
        _
    $region12: #{tpu_custom_call.1} parent=5 // pred_fallthru
      _
    %p140 = scmp.lt.s32.totalorder %s9, 2
    // Predicated region
    $region21: #{tpu_custom_call.1} parent=5 // pred_check
      %p141 = pneg %p140
    $region22: #{tpu_custom_call.1} parent=5 // pred_check_branch
      %143 = sbr.rel (%p141) target = $region24
    $region23: #{tpu_custom_call.1} parent=5 // pred_region
      // Predicated region
      $region25: #{tpu_custom_call.1} parent=23 // pred_check
        %p144 = pneg %p43
      $region26: #{tpu_custom_call.1} parent=23 // pred_check_branch
        %146 = sbr.rel (%p144) target = $region28
      $region27: #{tpu_custom_call.1} parent=23 // pred_region
        %p147 = scmp.lt.s32.totalorder %s16, 1
        %s148 = scalar_select %p147, %s16, 1
        %p149 = scmp.lt.s32.totalorder %s17, 0
        %s150 = scalar_select %p149, %s17, 0
        %s151 = smul.addr %s150, 60
        %s152 = smul.addr %s148, 60
        %s153 = sadd.s32 %s151, %s152
        %s154 = smul.addr %s153, 8
        %s155 = scalar_lea.vmem %s0, %s154
      $region28: #{tpu_custom_call.1} parent=23 // pred_fallthru
        _
    $region24: #{tpu_custom_call.1} parent=5 // pred_fallthru
      _
    %p156 = scmp.le.s32.totalorder 1, %s9
    %p157 = scmp.lt.s32.totalorder %s9, 3
    %p158 = pnand %p156, %p157
    %p159 = pneg %p158
    // Predicated region
    $region29: #{tpu_custom_call.1} parent=5 // pred_check
      _
    $region30: #{tpu_custom_call.1} parent=5 // pred_check_branch
      %161 = sbr.rel (%p158) target = $region32
    $region31: #{tpu_custom_call.1} parent=5 // pred_region
      %s162 = ssub.s32 %s9, 1
      %p163 = scmp.lt.s32.totalorder %s18, 1
      %s164 = scalar_select %p163, %s18, 1
      %p165 = scmp.lt.s32.totalorder %s19, 0
      %s166 = scalar_select %p165, %s19, 0
      %s167 = smul.addr %s166, 60
      %s168 = smul.addr %s164, 60
      %s169 = sadd.s32 %s167, %s168
      %s170 = smul.addr %s169, 8
      %s171 = scalar_lea.vmem %s0, %s170
      %p172 = pneg %p49
      %p173 = pneg %p46
      %p174 = pneg %p70
      %p175 = pneg %p67
      %p176 = pneg %p91
      %p177 = pneg %p88
      %p178 = pneg %p119
      %p179 = pneg %p116
      %s180 = smul.u32 2, %s19
      %p181 = scmp.lt.s32.totalorder %s18, 1
      %s182 = scalar_select %p181, %s18, 1
      %p183 = scmp.lt.s32.totalorder %s180, 1
      %s184 = scalar_select %p183, %s180, 1
      %s185 = smul.addr %s182, 2
      %s186 = sadd.s32 %s184, %s185
      %s187 = smul.addr %s186, 4
      %s188 = scalar_lea.vmem %s3, %s187
      %p189 = scmp.lt.s32.totalorder %s18, 1
      %s190 = scalar_select %p189, %s18, 1
      %p191 = scmp.lt.s32.totalorder %s19, 0
      %s192 = scalar_select %p191, %s19, 0
      %s193 = smul.addr %s192, 60
      %s194 = smul.addr %s190, 60
      %s195 = sadd.s32 %s193, %s194
      %s196 = smul.addr %s195, 8
      %s197 = scalar_lea.vmem %s0, %s196
      %s198 = smul.u32 2, %s19
      %p199 = scmp.lt.s32.totalorder %s18, 1
      %s200 = scalar_select %p199, %s18, 1
      %p201 = scmp.lt.s32.totalorder %s198, 1
      %s202 = scalar_select %p201, %s198, 1
      %s203 = smul.addr %s200, 2
      %s204 = sadd.s32 %s202, %s203
      %s205 = smul.addr %s204, 4
      %s206 = scalar_lea.vmem %s3, %s205
      %s207 = smul.u32 2, %s19
      %v208 = vld [vmem:[%s197 + $0x1] sm:$0xff]
      %v209 = vld [vmem:[%s197 + $0x9] sm:$0xff]
      %v210 = vld [vmem:[%s197 + $0x19] sm:$0xff]
      %v211 = vld [vmem:[%s197 + $0x21] sm:$0xff]
      %v212 = vld [vmem:[%s197 + $0x31] sm:$0xff]
      %v213 = vld [vmem:[%s197 + $0x39] sm:$0xff]
      %v214 = vld [vmem:[%s197 + $0x49] sm:$0xff]
      %v215 = vld [vmem:[%s197 + $0x51] sm:$0xff]
      %v216 = vld [vmem:[%s197 + $0x61] sm:$0xff]
      %v217 = vld [vmem:[%s197 + $0x69] sm:$0xff]
      %v218 = vld [vmem:[%s197 + $0x79] sm:$0xff]
      %v219 = vld [vmem:[%s197 + $0x81] sm:$0xff]
      %v220 = vld [vmem:[%s197 + $0x91] sm:$0xff]
      %v221 = vld [vmem:[%s197 + $0x99] sm:$0xff]
      %v222 = vld [vmem:[%s197 + $0xa9] sm:$0xff]
      %v223 = vld [vmem:[%s197 + $0xb1] sm:$0xff]
      %v224 = vld [vmem:[%s197 + $0xc1] sm:$0xff]
      %v225 = vld [vmem:[%s197 + $0xc9] sm:$0xff]
      %v226 = vld [vmem:[%s197 + $0xd9] sm:$0xff]
      %v227 = vld [vmem:[%s197 + $0xe1] sm:$0xff]
      %v228 = vld [vmem:[%s197 + $0xf1] sm:$0xff]
      %v229 = vld [vmem:[%s197 + $0xf9] sm:$0xff]
      %v230 = vld [vmem:[%s197 + $0x109] sm:$0xff]
      %v231 = vld [vmem:[%s197 + $0x111] sm:$0xff]
      %v232 = vld [vmem:[%s197 + $0x121] sm:$0xff]
      %v233 = vld [vmem:[%s197 + $0x129] sm:$0xff]
      %v234 = vld [vmem:[%s197 + $0x139] sm:$0xff]
      %v235 = vld [vmem:[%s197 + $0x141] sm:$0xff]
      %v236 = vld [vmem:[%s197 + $0x151] sm:$0xff]
      %v237 = vld [vmem:[%s197 + $0x159] sm:$0xff]
      %v238 = vld [vmem:[%s197 + $0x169] sm:$0xff]
      %v239 = vld [vmem:[%s197 + $0x171] sm:$0xff]
      %v240 = vld [vmem:[%s197 + $0x181] sm:$0xff]
      %v241 = vld [vmem:[%s197 + $0x189] sm:$0xff]
      %v242 = vld [vmem:[%s197 + $0x199] sm:$0xff]
      %v243 = vld [vmem:[%s197 + $0x1a1] sm:$0xff]
      %v244 = vld [vmem:[%s197 + $0x2] sm:$0xff]
      %v245 = vld [vmem:[%s197 + $0xa] sm:$0xff]
      %v246 = vld [vmem:[%s197 + $0x1a] sm:$0xff]
      %v247 = vld [vmem:[%s197 + $0x22] sm:$0xff]
      %v248 = vld [vmem:[%s197 + $0x32] sm:$0xff]
      %v249 = vld [vmem:[%s197 + $0x3a] sm:$0xff]
      %v250 = vld [vmem:[%s197 + $0x4a] sm:$0xff]
      %v251 = vld [vmem:[%s197 + $0x52] sm:$0xff]
      %v252 = vld [vmem:[%s197 + $0x62] sm:$0xff]
      %v253 = vld [vmem:[%s197 + $0x6a] sm:$0xff]
      %v254 = vld [vmem:[%s197 + $0x7a] sm:$0xff]
      %v255 = vld [vmem:[%s197 + $0x82] sm:$0xff]
      %v256 = vld [vmem:[%s197 + $0x92] sm:$0xff]
      %v257 = vld [vmem:[%s197 + $0x9a] sm:$0xff]
      %v258 = vld [vmem:[%s197 + $0xaa] sm:$0xff]
      %v259 = vld [vmem:[%s197 + $0xb2] sm:$0xff]
      %v260 = vld [vmem:[%s197 + $0xc2] sm:$0xff]
      %v261 = vld [vmem:[%s197 + $0xca] sm:$0xff]
      %v262 = vld [vmem:[%s197 + $0xda] sm:$0xff]
      %v263 = vld [vmem:[%s197 + $0xe2] sm:$0xff]
      %v264 = vld [vmem:[%s197 + $0xf2] sm:$0xff]
      %v265 = vld [vmem:[%s197 + $0xfa] sm:$0xff]
      %v266 = vld [vmem:[%s197 + $0x10a] sm:$0xff]
      %v267 = vld [vmem:[%s197 + $0x112] sm:$0xff]
      %v268 = vld [vmem:[%s197 + $0x122] sm:$0xff]
      %v269 = vld [vmem:[%s197 + $0x12a] sm:$0xff]
      %v270 = vld [vmem:[%s197 + $0x13a] sm:$0xff]
      %v271 = vld [vmem:[%s197 + $0x142] sm:$0xff]
      %v272 = vld [vmem:[%s197 + $0x152] sm:$0xff]
      %v273 = vld [vmem:[%s197 + $0x15a] sm:$0xff]
      %v274 = vld [vmem:[%s197 + $0x16a] sm:$0xff]
      %v275 = vld [vmem:[%s197 + $0x172] sm:$0xff]
      %v276 = vld [vmem:[%s197 + $0x182] sm:$0xff]
      %v277 = vld [vmem:[%s197 + $0x18a] sm:$0xff]
      %v278 = vld [vmem:[%s197 + $0x19a] sm:$0xff]
      %v279 = vld [vmem:[%s197 + $0x1a2] sm:$0xff]
      %v280 = vld [vmem:[%s197 + $0x3] sm:$0xff]
      %v281 = vld [vmem:[%s197 + $0xb] sm:$0xff]
      %v282 = vld [vmem:[%s197 + $0x1b] sm:$0xff]
      %v283 = vld [vmem:[%s197 + $0x23] sm:$0xff]
      %v284 = vld [vmem:[%s197 + $0x33] sm:$0xff]
      %v285 = vld [vmem:[%s197 + $0x3b] sm:$0xff]
      %v286 = vld [vmem:[%s197 + $0x4b] sm:$0xff]
      %v287 = vld [vmem:[%s197 + $0x53] sm:$0xff]
      %v288 = vld [vmem:[%s197 + $0x63] sm:$0xff]
      %v289 = vld [vmem:[%s197 + $0x6b] sm:$0xff]
      %v290 = vld [vmem:[%s197 + $0x7b] sm:$0xff]
      %v291 = vld [vmem:[%s197 + $0x83] sm:$0xff]
      %v292 = vld [vmem:[%s197 + $0x93] sm:$0xff]
      %v293 = vld [vmem:[%s197 + $0x9b] sm:$0xff]
      %v294 = vld [vmem:[%s197 + $0xab] sm:$0xff]
      %v295 = vld [vmem:[%s197 + $0xb3] sm:$0xff]
      %v296 = vld [vmem:[%s197 + $0xc3] sm:$0xff]
      %v297 = vld [vmem:[%s197 + $0xcb] sm:$0xff]
      %v298 = vld [vmem:[%s197 + $0xdb] sm:$0xff]
      %v299 = vld [vmem:[%s197 + $0xe3] sm:$0xff]
      %v300 = vld [vmem:[%s197 + $0xf3] sm:$0xff]
      %v301 = vld [vmem:[%s197 + $0xfb] sm:$0xff]
      %v302 = vld [vmem:[%s197 + $0x10b] sm:$0xff]
      %v303 = vld [vmem:[%s197 + $0x113] sm:$0xff]
      %v304 = vld [vmem:[%s197 + $0x123] sm:$0xff]
      %v305 = vld [vmem:[%s197 + $0x12b] sm:$0xff]
      %v306 = vld [vmem:[%s197 + $0x13b] sm:$0xff]
      %v307 = vld [vmem:[%s197 + $0x143] sm:$0xff]
      %v308 = vld [vmem:[%s197 + $0x153] sm:$0xff]
      %v309 = vld [vmem:[%s197 + $0x15b] sm:$0xff]
      %v310 = vld [vmem:[%s197 + $0x16b] sm:$0xff]
      %v311 = vld [vmem:[%s197 + $0x173] sm:$0xff]
      %v312 = vld [vmem:[%s197 + $0x183] sm:$0xff]
      %v313 = vld [vmem:[%s197 + $0x18b] sm:$0xff]
      %v314 = vld [vmem:[%s197 + $0x19b] sm:$0xff]
      %v315 = vld [vmem:[%s197 + $0x1a3] sm:$0xff]
      %s316 = scalar_lea.vmem %s197, 24
      %v317 = vld [vmem:[%s316 + $0x1] sm:$0xff]
      %v318 = vld [vmem:[%s316 + $0x9] sm:$0xff]
      %v319 = vld [vmem:[%s316 + $0x19] sm:$0xff]
      %v320 = vld [vmem:[%s316 + $0x21] sm:$0xff]
      %v321 = vld [vmem:[%s316 + $0x31] sm:$0xff]
      %v322 = vld [vmem:[%s316 + $0x39] sm:$0xff]
      %v323 = vld [vmem:[%s316 + $0x49] sm:$0xff]
      %v324 = vld [vmem:[%s316 + $0x51] sm:$0xff]
      %v325 = vld [vmem:[%s316 + $0x61] sm:$0xff]
      %v326 = vld [vmem:[%s316 + $0x69] sm:$0xff]
      %v327 = vld [vmem:[%s316 + $0x79] sm:$0xff]
      %v328 = vld [vmem:[%s316 + $0x81] sm:$0xff]
      %v329 = vld [vmem:[%s316 + $0x91] sm:$0xff]
      %v330 = vld [vmem:[%s316 + $0x99] sm:$0xff]
      %v331 = vld [vmem:[%s316 + $0xa9] sm:$0xff]
      %v332 = vld [vmem:[%s316 + $0xb1] sm:$0xff]
      %v333 = vld [vmem:[%s316 + $0xc1] sm:$0xff]
      %v334 = vld [vmem:[%s316 + $0xc9] sm:$0xff]
      %v335 = vld [vmem:[%s316 + $0xd9] sm:$0xff]
      %v336 = vld [vmem:[%s316 + $0xe1] sm:$0xff]
      %v337 = vld [vmem:[%s316 + $0xf1] sm:$0xff]
      %v338 = vld [vmem:[%s316 + $0xf9] sm:$0xff]
      %v339 = vld [vmem:[%s316 + $0x109] sm:$0xff]
      %v340 = vld [vmem:[%s316 + $0x111] sm:$0xff]
      %v341 = vld [vmem:[%s316 + $0x121] sm:$0xff]
      %v342 = vld [vmem:[%s316 + $0x129] sm:$0xff]
      %v343 = vld [vmem:[%s316 + $0x139] sm:$0xff]
      %v344 = vld [vmem:[%s316 + $0x141] sm:$0xff]
      %v345 = vld [vmem:[%s316 + $0x151] sm:$0xff]
      %v346 = vld [vmem:[%s316 + $0x159] sm:$0xff]
      %v347 = vld [vmem:[%s316 + $0x169] sm:$0xff]
      %v348 = vld [vmem:[%s316 + $0x171] sm:$0xff]
      %v349 = vld [vmem:[%s316 + $0x181] sm:$0xff]
      %v350 = vld [vmem:[%s316 + $0x189] sm:$0xff]
      %v351 = vld [vmem:[%s316 + $0x199] sm:$0xff]
      %v352 = vld [vmem:[%s316 + $0x1a1] sm:$0xff]
      %v353 = vld [vmem:[%s316 + $0x2] sm:$0xff]
      %v354 = vld [vmem:[%s316 + $0xa] sm:$0xff]
      %v355 = vld [vmem:[%s316 + $0x1a] sm:$0xff]
      %v356 = vld [vmem:[%s316 + $0x22] sm:$0xff]
      %v357 = vld [vmem:[%s316 + $0x32] sm:$0xff]
      %v358 = vld [vmem:[%s316 + $0x3a] sm:$0xff]
      %v359 = vld [vmem:[%s316 + $0x4a] sm:$0xff]
      %v360 = vld [vmem:[%s316 + $0x52] sm:$0xff]
      %v361 = vld [vmem:[%s316 + $0x62] sm:$0xff]
      %v362 = vld [vmem:[%s316 + $0x6a] sm:$0xff]
      %v363 = vld [vmem:[%s316 + $0x7a] sm:$0xff]
      %v364 = vld [vmem:[%s316 + $0x82] sm:$0xff]
      %v365 = vld [vmem:[%s316 + $0x92] sm:$0xff]
      %v366 = vld [vmem:[%s316 + $0x9a] sm:$0xff]
      %v367 = vld [vmem:[%s316 + $0xaa] sm:$0xff]
      %v368 = vld [vmem:[%s316 + $0xb2] sm:$0xff]
      %v369 = vld [vmem:[%s316 + $0xc2] sm:$0xff]
      %v370 = vld [vmem:[%s316 + $0xca] sm:$0xff]
      %v371 = vld [vmem:[%s316 + $0xda] sm:$0xff]
      %v372 = vld [vmem:[%s316 + $0xe2] sm:$0xff]
      %v373 = vld [vmem:[%s316 + $0xf2] sm:$0xff]
      %v374 = vld [vmem:[%s316 + $0xfa] sm:$0xff]
      %v375 = vld [vmem:[%s316 + $0x10a] sm:$0xff]
      %v376 = vld [vmem:[%s316 + $0x112] sm:$0xff]
      %v377 = vld [vmem:[%s316 + $0x122] sm:$0xff]
      %v378 = vld [vmem:[%s316 + $0x12a] sm:$0xff]
      %v379 = vld [vmem:[%s316 + $0x13a] sm:$0xff]
      %v380 = vld [vmem:[%s316 + $0x142] sm:$0xff]
      %v381 = vld [vmem:[%s316 + $0x152] sm:$0xff]
      %v382 = vld [vmem:[%s316 + $0x15a] sm:$0xff]
      %v383 = vld [vmem:[%s316 + $0x16a] sm:$0xff]
      %v384 = vld [vmem:[%s316 + $0x172] sm:$0xff]
      %v385 = vld [vmem:[%s316 + $0x182] sm:$0xff]
      %v386 = vld [vmem:[%s316 + $0x18a] sm:$0xff]
      %v387 = vld [vmem:[%s316 + $0x19a] sm:$0xff]
      %v388 = vld [vmem:[%s316 + $0x1a2] sm:$0xff]
      %v389 = vld [vmem:[%s316 + $0x3] sm:$0xff]
      %v390 = vld [vmem:[%s316 + $0xb] sm:$0xff]
      %v391 = vld [vmem:[%s316 + $0x1b] sm:$0xff]
      %v392 = vld [vmem:[%s316 + $0x23] sm:$0xff]
      %v393 = vld [vmem:[%s316 + $0x33] sm:$0xff]
      %v394 = vld [vmem:[%s316 + $0x3b] sm:$0xff]
      %v395 = vld [vmem:[%s316 + $0x4b] sm:$0xff]
      %v396 = vld [vmem:[%s316 + $0x53] sm:$0xff]
      %v397 = vld [vmem:[%s316 + $0x63] sm:$0xff]
      %v398 = vld [vmem:[%s316 + $0x6b] sm:$0xff]
      %v399 = vld [vmem:[%s316 + $0x7b] sm:$0xff]
      %v400 = vld [vmem:[%s316 + $0x83] sm:$0xff]
      %v401 = vld [vmem:[%s316 + $0x93] sm:$0xff]
      %v402 = vld [vmem:[%s316 + $0x9b] sm:$0xff]
      %v403 = vld [vmem:[%s316 + $0xab] sm:$0xff]
      %v404 = vld [vmem:[%s316 + $0xb3] sm:$0xff]
      %v405 = vld [vmem:[%s316 + $0xc3] sm:$0xff]
      %v406 = vld [vmem:[%s316 + $0xcb] sm:$0xff]
      %v407 = vld [vmem:[%s316 + $0xdb] sm:$0xff]
      %v408 = vld [vmem:[%s316 + $0xe3] sm:$0xff]
      %v409 = vld [vmem:[%s316 + $0xf3] sm:$0xff]
      %v410 = vld [vmem:[%s316 + $0xfb] sm:$0xff]
      %v411 = vld [vmem:[%s316 + $0x10b] sm:$0xff]
      %v412 = vld [vmem:[%s316 + $0x113] sm:$0xff]
      %v413 = vld [vmem:[%s316 + $0x123] sm:$0xff]
      %v414 = vld [vmem:[%s316 + $0x12b] sm:$0xff]
      %v415 = vld [vmem:[%s316 + $0x13b] sm:$0xff]
      %v416 = vld [vmem:[%s316 + $0x143] sm:$0xff]
      %v417 = vld [vmem:[%s316 + $0x153] sm:$0xff]
      %v418 = vld [vmem:[%s316 + $0x15b] sm:$0xff]
      %v419 = vld [vmem:[%s316 + $0x16b] sm:$0xff]
      %v420 = vld [vmem:[%s316 + $0x173] sm:$0xff]
      %v421 = vld [vmem:[%s316 + $0x183] sm:$0xff]
      %v422 = vld [vmem:[%s316 + $0x18b] sm:$0xff]
      %v423 = vld [vmem:[%s316 + $0x19b] sm:$0xff]
      %v424 = vld [vmem:[%s316 + $0x1a3] sm:$0xff]
      %s425 = scalar_lea.vmem %s197, 48
      %v426 = vld [vmem:[%s425 + $0x1] sm:$0xff]
      %v427 = vld [vmem:[%s425 + $0x9] sm:$0xff]
      %v428 = vld [vmem:[%s425 + $0x19] sm:$0xff]
      %v429 = vld [vmem:[%s425 + $0x21] sm:$0xff]
      %v430 = vld [vmem:[%s425 + $0x31] sm:$0xff]
      %v431 = vld [vmem:[%s425 + $0x39] sm:$0xff]
      %v432 = vld [vmem:[%s425 + $0x49] sm:$0xff]
      %v433 = vld [vmem:[%s425 + $0x51] sm:$0xff]
      %v434 = vld [vmem:[%s425 + $0x61] sm:$0xff]
      %v435 = vld [vmem:[%s425 + $0x69] sm:$0xff]
      %v436 = vld [vmem:[%s425 + $0x79] sm:$0xff]
      %v437 = vld [vmem:[%s425 + $0x81] sm:$0xff]
      %v438 = vld [vmem:[%s425 + $0x91] sm:$0xff]
      %v439 = vld [vmem:[%s425 + $0x99] sm:$0xff]
      %v440 = vld [vmem:[%s425 + $0xa9] sm:$0xff]
      %v441 = vld [vmem:[%s425 + $0xb1] sm:$0xff]
      %v442 = vld [vmem:[%s425 + $0xc1] sm:$0xff]
      %v443 = vld [vmem:[%s425 + $0xc9] sm:$0xff]
      %v444 = vld [vmem:[%s425 + $0xd9] sm:$0xff]
      %v445 = vld [vmem:[%s425 + $0xe1] sm:$0xff]
      %v446 = vld [vmem:[%s425 + $0xf1] sm:$0xff]
      %v447 = vld [vmem:[%s425 + $0xf9] sm:$0xff]
      %v448 = vld [vmem:[%s425 + $0x109] sm:$0xff]
      %v449 = vld [vmem:[%s425 + $0x111] sm:$0xff]
      %v450 = vld [vmem:[%s425 + $0x121] sm:$0xff]
      %v451 = vld [vmem:[%s425 + $0x129] sm:$0xff]
      %v452 = vld [vmem:[%s425 + $0x139] sm:$0xff]
      %v453 = vld [vmem:[%s425 + $0x141] sm:$0xff]
      %v454 = vld [vmem:[%s425 + $0x151] sm:$0xff]
      %v455 = vld [vmem:[%s425 + $0x159] sm:$0xff]
      %v456 = vld [vmem:[%s425 + $0x169] sm:$0xff]
      %v457 = vld [vmem:[%s425 + $0x171] sm:$0xff]
      %v458 = vld [vmem:[%s425 + $0x181] sm:$0xff]
      %v459 = vld [vmem:[%s425 + $0x189] sm:$0xff]
      %v460 = vld [vmem:[%s425 + $0x199] sm:$0xff]
      %v461 = vld [vmem:[%s425 + $0x1a1] sm:$0xff]
      %v462 = vld [vmem:[%s425 + $0x2] sm:$0xff]
      %v463 = vld [vmem:[%s425 + $0xa] sm:$0xff]
      %v464 = vld [vmem:[%s425 + $0x1a] sm:$0xff]
      %v465 = vld [vmem:[%s425 + $0x22] sm:$0xff]
      %v466 = vld [vmem:[%s425 + $0x32] sm:$0xff]
      %v467 = vld [vmem:[%s425 + $0x3a] sm:$0xff]
      %v468 = vld [vmem:[%s425 + $0x4a] sm:$0xff]
      %v469 = vld [vmem:[%s425 + $0x52] sm:$0xff]
      %v470 = vld [vmem:[%s425 + $0x62] sm:$0xff]
      %v471 = vld [vmem:[%s425 + $0x6a] sm:$0xff]
      %v472 = vld [vmem:[%s425 + $0x7a] sm:$0xff]
      %v473 = vld [vmem:[%s425 + $0x82] sm:$0xff]
      %v474 = vld [vmem:[%s425 + $0x92] sm:$0xff]
      %v475 = vld [vmem:[%s425 + $0x9a] sm:$0xff]
      %v476 = vld [vmem:[%s425 + $0xaa] sm:$0xff]
      %v477 = vld [vmem:[%s425 + $0xb2] sm:$0xff]
      %v478 = vld [vmem:[%s425 + $0xc2] sm:$0xff]
      %v479 = vld [vmem:[%s425 + $0xca] sm:$0xff]
      %v480 = vld [vmem:[%s425 + $0xda] sm:$0xff]
      %v481 = vld [vmem:[%s425 + $0xe2] sm:$0xff]
      %v482 = vld [vmem:[%s425 + $0xf2] sm:$0xff]
      %v483 = vld [vmem:[%s425 + $0xfa] sm:$0xff]
      %v484 = vld [vmem:[%s425 + $0x10a] sm:$0xff]
      %v485 = vld [vmem:[%s425 + $0x112] sm:$0xff]
      %v486 = vld [vmem:[%s425 + $0x122] sm:$0xff]
      %v487 = vld [vmem:[%s425 + $0x12a] sm:$0xff]
      %v488 = vld [vmem:[%s425 + $0x13a] sm:$0xff]
      %v489 = vld [vmem:[%s425 + $0x142] sm:$0xff]
      %v490 = vld [vmem:[%s425 + $0x152] sm:$0xff]
      %v491 = vld [vmem:[%s425 + $0x15a] sm:$0xff]
      %v492 = vld [vmem:[%s425 + $0x16a] sm:$0xff]
      %v493 = vld [vmem:[%s425 + $0x172] sm:$0xff]
      %v494 = vld [vmem:[%s425 + $0x182] sm:$0xff]
      %v495 = vld [vmem:[%s425 + $0x18a] sm:$0xff]
      %v496 = vld [vmem:[%s425 + $0x19a] sm:$0xff]
      %v497 = vld [vmem:[%s425 + $0x1a2] sm:$0xff]
      %v498 = vld [vmem:[%s425 + $0x3] sm:$0xff]
      %v499 = vld [vmem:[%s425 + $0xb] sm:$0xff]
      %v500 = vld [vmem:[%s425 + $0x1b] sm:$0xff]
      %v501 = vld [vmem:[%s425 + $0x23] sm:$0xff]
      %v502 = vld [vmem:[%s425 + $0x33] sm:$0xff]
      %v503 = vld [vmem:[%s425 + $0x3b] sm:$0xff]
      %v504 = vld [vmem:[%s425 + $0x4b] sm:$0xff]
      %v505 = vld [vmem:[%s425 + $0x53] sm:$0xff]
      %v506 = vld [vmem:[%s425 + $0x63] sm:$0xff]
      %v507 = vld [vmem:[%s425 + $0x6b] sm:$0xff]
      %v508 = vld [vmem:[%s425 + $0x7b] sm:$0xff]
      %v509 = vld [vmem:[%s425 + $0x83] sm:$0xff]
      %v510 = vld [vmem:[%s425 + $0x93] sm:$0xff]
      %v511 = vld [vmem:[%s425 + $0x9b] sm:$0xff]
      %v512 = vld [vmem:[%s425 + $0xab] sm:$0xff]
      %v513 = vld [vmem:[%s425 + $0xb3] sm:$0xff]
      %v514 = vld [vmem:[%s425 + $0xc3] sm:$0xff]
      %v515 = vld [vmem:[%s425 + $0xcb] sm:$0xff]
      %v516 = vld [vmem:[%s425 + $0xdb] sm:$0xff]
      %v517 = vld [vmem:[%s425 + $0xe3] sm:$0xff]
      %v518 = vld [vmem:[%s425 + $0xf3] sm:$0xff]
      %v519 = vld [vmem:[%s425 + $0xfb] sm:$0xff]
      %v520 = vld [vmem:[%s425 + $0x10b] sm:$0xff]
      %v521 = vld [vmem:[%s425 + $0x113] sm:$0xff]
      %v522 = vld [vmem:[%s425 + $0x123] sm:$0xff]
      %v523 = vld [vmem:[%s425 + $0x12b] sm:$0xff]
      %v524 = vld [vmem:[%s425 + $0x13b] sm:$0xff]
      %v525 = vld [vmem:[%s425 + $0x143] sm:$0xff]
      %v526 = vld [vmem:[%s425 + $0x153] sm:$0xff]
      %v527 = vld [vmem:[%s425 + $0x15b] sm:$0xff]
      %v528 = vld [vmem:[%s425 + $0x16b] sm:$0xff]
      %v529 = vld [vmem:[%s425 + $0x173] sm:$0xff]
      %v530 = vld [vmem:[%s425 + $0x183] sm:$0xff]
      %v531 = vld [vmem:[%s425 + $0x18b] sm:$0xff]
      %v532 = vld [vmem:[%s425 + $0x19b] sm:$0xff]
      %v533 = vld [vmem:[%s425 + $0x1a3] sm:$0xff]
      %570 = vrot.lane.b32.xlu0 %v244, 3
      %v571 = vpop.permute.xlu0 %570
      %572 = vrot.lane.b32.xlu0 %v245, 3
      %v573 = vpop.permute.xlu0 %572
      %574 = vrot.lane.b32.xlu0 %v246, 3
      %v575 = vpop.permute.xlu0 %574
      %576 = vrot.lane.b32.xlu0 %v247, 3
      %v577 = vpop.permute.xlu0 %576
      %578 = vrot.lane.b32.xlu0 %v248, 3
      %v579 = vpop.permute.xlu0 %578
      %580 = vrot.lane.b32.xlu0 %v249, 3
      %v581 = vpop.permute.xlu0 %580
      %582 = vrot.lane.b32.xlu0 %v250, 3
      %v583 = vpop.permute.xlu0 %582
      %584 = vrot.lane.b32.xlu0 %v251, 3
      %v585 = vpop.permute.xlu0 %584
      %586 = vrot.lane.b32.xlu0 %v252, 3
      %v587 = vpop.permute.xlu0 %586
      %588 = vrot.lane.b32.xlu0 %v253, 3
      %v589 = vpop.permute.xlu0 %588
      %590 = vrot.lane.b32.xlu0 %v254, 3
      %v591 = vpop.permute.xlu0 %590
      %592 = vrot.lane.b32.xlu0 %v255, 3
      %v593 = vpop.permute.xlu0 %592
      %594 = vrot.lane.b32.xlu0 %v256, 3
      %v595 = vpop.permute.xlu0 %594
      %596 = vrot.lane.b32.xlu0 %v257, 3
      %v597 = vpop.permute.xlu0 %596
      %598 = vrot.lane.b32.xlu0 %v258, 3
      %v599 = vpop.permute.xlu0 %598
      %600 = vrot.lane.b32.xlu0 %v259, 3
      %v601 = vpop.permute.xlu0 %600
      %602 = vrot.lane.b32.xlu0 %v260, 3
      %v603 = vpop.permute.xlu0 %602
      %604 = vrot.lane.b32.xlu0 %v261, 3
      %v605 = vpop.permute.xlu0 %604
      %606 = vrot.lane.b32.xlu0 %v262, 3
      %v607 = vpop.permute.xlu0 %606
      %608 = vrot.lane.b32.xlu0 %v263, 3
      %v609 = vpop.permute.xlu0 %608
      %610 = vrot.lane.b32.xlu0 %v264, 3
      %v611 = vpop.permute.xlu0 %610
      %612 = vrot.lane.b32.xlu0 %v265, 3
      %v613 = vpop.permute.xlu0 %612
      %614 = vrot.lane.b32.xlu0 %v266, 3
      %v615 = vpop.permute.xlu0 %614
      %616 = vrot.lane.b32.xlu0 %v267, 3
      %v617 = vpop.permute.xlu0 %616
      %618 = vrot.lane.b32.xlu0 %v268, 3
      %v619 = vpop.permute.xlu0 %618
      %620 = vrot.lane.b32.xlu0 %v269, 3
      %v621 = vpop.permute.xlu0 %620
      %622 = vrot.lane.b32.xlu0 %v270, 3
      %v623 = vpop.permute.xlu0 %622
      %624 = vrot.lane.b32.xlu0 %v271, 3
      %v625 = vpop.permute.xlu0 %624
      %626 = vrot.lane.b32.xlu0 %v272, 3
      %v627 = vpop.permute.xlu0 %626
      %628 = vrot.lane.b32.xlu0 %v273, 3
      %v629 = vpop.permute.xlu0 %628
      %630 = vrot.lane.b32.xlu0 %v274, 3
      %v631 = vpop.permute.xlu0 %630
      %632 = vrot.lane.b32.xlu0 %v275, 3
      %v633 = vpop.permute.xlu0 %632
      %634 = vrot.lane.b32.xlu0 %v276, 3
      %v635 = vpop.permute.xlu0 %634
      %636 = vrot.lane.b32.xlu0 %v277, 3
      %v637 = vpop.permute.xlu0 %636
      %638 = vrot.lane.b32.xlu0 %v278, 3
      %v639 = vpop.permute.xlu0 %638
      %640 = vrot.lane.b32.xlu0 %v279, 3
      %v641 = vpop.permute.xlu0 %640
      %714 = vrot.lane.b32.xlu0 %v280, 6
      %v715 = vpop.permute.xlu0 %714
      %716 = vrot.lane.b32.xlu0 %v281, 6
      %v717 = vpop.permute.xlu0 %716
      %718 = vrot.lane.b32.xlu0 %v282, 6
      %v719 = vpop.permute.xlu0 %718
      %720 = vrot.lane.b32.xlu0 %v283, 6
      %v721 = vpop.permute.xlu0 %720
      %722 = vrot.lane.b32.xlu0 %v284, 6
      %v723 = vpop.permute.xlu0 %722
      %724 = vrot.lane.b32.xlu0 %v285, 6
      %v725 = vpop.permute.xlu0 %724
      %726 = vrot.lane.b32.xlu0 %v286, 6
      %v727 = vpop.permute.xlu0 %726
      %728 = vrot.lane.b32.xlu0 %v287, 6
      %v729 = vpop.permute.xlu0 %728
      %730 = vrot.lane.b32.xlu0 %v288, 6
      %v731 = vpop.permute.xlu0 %730
      %732 = vrot.lane.b32.xlu0 %v289, 6
      %v733 = vpop.permute.xlu0 %732
      %734 = vrot.lane.b32.xlu0 %v290, 6
      %v735 = vpop.permute.xlu0 %734
      %736 = vrot.lane.b32.xlu0 %v291, 6
      %v737 = vpop.permute.xlu0 %736
      %738 = vrot.lane.b32.xlu0 %v292, 6
      %v739 = vpop.permute.xlu0 %738
      %740 = vrot.lane.b32.xlu0 %v293, 6
      %v741 = vpop.permute.xlu0 %740
      %742 = vrot.lane.b32.xlu0 %v294, 6
      %v743 = vpop.permute.xlu0 %742
      %744 = vrot.lane.b32.xlu0 %v295, 6
      %v745 = vpop.permute.xlu0 %744
      %746 = vrot.lane.b32.xlu0 %v296, 6
      %v747 = vpop.permute.xlu0 %746
      %748 = vrot.lane.b32.xlu0 %v297, 6
      %v749 = vpop.permute.xlu0 %748
      %750 = vrot.lane.b32.xlu0 %v298, 6
      %v751 = vpop.permute.xlu0 %750
      %752 = vrot.lane.b32.xlu0 %v299, 6
      %v753 = vpop.permute.xlu0 %752
      %754 = vrot.lane.b32.xlu0 %v300, 6
      %v755 = vpop.permute.xlu0 %754
      %756 = vrot.lane.b32.xlu0 %v301, 6
      %v757 = vpop.permute.xlu0 %756
      %758 = vrot.lane.b32.xlu0 %v302, 6
      %v759 = vpop.permute.xlu0 %758
      %760 = vrot.lane.b32.xlu0 %v303, 6
      %v761 = vpop.permute.xlu0 %760
      %762 = vrot.lane.b32.xlu0 %v304, 6
      %v763 = vpop.permute.xlu0 %762
      %764 = vrot.lane.b32.xlu0 %v305, 6
      %v765 = vpop.permute.xlu0 %764
      %766 = vrot.lane.b32.xlu0 %v306, 6
      %v767 = vpop.permute.xlu0 %766
      %768 = vrot.lane.b32.xlu0 %v307, 6
      %v769 = vpop.permute.xlu0 %768
      %770 = vrot.lane.b32.xlu0 %v308, 6
      %v771 = vpop.permute.xlu0 %770
      %772 = vrot.lane.b32.xlu0 %v309, 6
      %v773 = vpop.permute.xlu0 %772
      %774 = vrot.lane.b32.xlu0 %v310, 6
      %v775 = vpop.permute.xlu0 %774
      %776 = vrot.lane.b32.xlu0 %v311, 6
      %v777 = vpop.permute.xlu0 %776
      %778 = vrot.lane.b32.xlu0 %v312, 6
      %v779 = vpop.permute.xlu0 %778
      %780 = vrot.lane.b32.xlu0 %v313, 6
      %v781 = vpop.permute.xlu0 %780
      %782 = vrot.lane.b32.xlu0 %v314, 6
      %v783 = vpop.permute.xlu0 %782
      %784 = vrot.lane.b32.xlu0 %v315, 6
      %v785 = vpop.permute.xlu0 %784
      %858 = vrot.lane.b32.xlu0 %v317, 9
      %v859 = vpop.permute.xlu0 %858
      %860 = vrot.lane.b32.xlu0 %v318, 9
      %v861 = vpop.permute.xlu0 %860
      %862 = vrot.lane.b32.xlu0 %v319, 9
      %v863 = vpop.permute.xlu0 %862
      %864 = vrot.lane.b32.xlu0 %v320, 9
      %v865 = vpop.permute.xlu0 %864
      %866 = vrot.lane.b32.xlu0 %v321, 9
      %v867 = vpop.permute.xlu0 %866
      %868 = vrot.lane.b32.xlu0 %v322, 9
      %v869 = vpop.permute.xlu0 %868
      %870 = vrot.lane.b32.xlu0 %v323, 9
      %v871 = vpop.permute.xlu0 %870
      %872 = vrot.lane.b32.xlu0 %v324, 9
      %v873 = vpop.permute.xlu0 %872
      %874 = vrot.lane.b32.xlu0 %v325, 9
      %v875 = vpop.permute.xlu0 %874
      %876 = vrot.lane.b32.xlu0 %v326, 9
      %v877 = vpop.permute.xlu0 %876
      %878 = vrot.lane.b32.xlu0 %v327, 9
      %v879 = vpop.permute.xlu0 %878
      %880 = vrot.lane.b32.xlu0 %v328, 9
      %v881 = vpop.permute.xlu0 %880
      %882 = vrot.lane.b32.xlu0 %v329, 9
      %v883 = vpop.permute.xlu0 %882
      %884 = vrot.lane.b32.xlu0 %v330, 9
      %v885 = vpop.permute.xlu0 %884
      %886 = vrot.lane.b32.xlu0 %v331, 9
      %v887 = vpop.permute.xlu0 %886
      %888 = vrot.lane.b32.xlu0 %v332, 9
      %v889 = vpop.permute.xlu0 %888
      %890 = vrot.lane.b32.xlu0 %v333, 9
      %v891 = vpop.permute.xlu0 %890
      %892 = vrot.lane.b32.xlu0 %v334, 9
      %v893 = vpop.permute.xlu0 %892
      %894 = vrot.lane.b32.xlu0 %v335, 9
      %v895 = vpop.permute.xlu0 %894
      %896 = vrot.lane.b32.xlu0 %v336, 9
      %v897 = vpop.permute.xlu0 %896
      %898 = vrot.lane.b32.xlu0 %v337, 9
      %v899 = vpop.permute.xlu0 %898
      %900 = vrot.lane.b32.xlu0 %v338, 9
      %v901 = vpop.permute.xlu0 %900
      %902 = vrot.lane.b32.xlu0 %v339, 9
      %v903 = vpop.permute.xlu0 %902
      %904 = vrot.lane.b32.xlu0 %v340, 9
      %v905 = vpop.permute.xlu0 %904
      %906 = vrot.lane.b32.xlu0 %v341, 9
      %v907 = vpop.permute.xlu0 %906
      %908 = vrot.lane.b32.xlu0 %v342, 9
      %v909 = vpop.permute.xlu0 %908
      %910 = vrot.lane.b32.xlu0 %v343, 9
      %v911 = vpop.permute.xlu0 %910
      %912 = vrot.lane.b32.xlu0 %v344, 9
      %v913 = vpop.permute.xlu0 %912
      %914 = vrot.lane.b32.xlu0 %v345, 9
      %v915 = vpop.permute.xlu0 %914
      %916 = vrot.lane.b32.xlu0 %v346, 9
      %v917 = vpop.permute.xlu0 %916
      %918 = vrot.lane.b32.xlu0 %v347, 9
      %v919 = vpop.permute.xlu0 %918
      %920 = vrot.lane.b32.xlu0 %v348, 9
      %v921 = vpop.permute.xlu0 %920
      %922 = vrot.lane.b32.xlu0 %v349, 9
      %v923 = vpop.permute.xlu0 %922
      %924 = vrot.lane.b32.xlu0 %v350, 9
      %v925 = vpop.permute.xlu0 %924
      %926 = vrot.lane.b32.xlu0 %v351, 9
      %v927 = vpop.permute.xlu0 %926
      %928 = vrot.lane.b32.xlu0 %v352, 9
      %v929 = vpop.permute.xlu0 %928
      %1002 = vrot.lane.b32.xlu0 %v353, 12
      %v1003 = vpop.permute.xlu0 %1002
      %1004 = vrot.lane.b32.xlu0 %v354, 12
      %v1005 = vpop.permute.xlu0 %1004
      %1006 = vrot.lane.b32.xlu0 %v355, 12
      %v1007 = vpop.permute.xlu0 %1006
      %1008 = vrot.lane.b32.xlu0 %v356, 12
      %v1009 = vpop.permute.xlu0 %1008
      %1010 = vrot.lane.b32.xlu0 %v357, 12
      %v1011 = vpop.permute.xlu0 %1010
      %1012 = vrot.lane.b32.xlu0 %v358, 12
      %v1013 = vpop.permute.xlu0 %1012
      %1014 = vrot.lane.b32.xlu0 %v359, 12
      %v1015 = vpop.permute.xlu0 %1014
      %1016 = vrot.lane.b32.xlu0 %v360, 12
      %v1017 = vpop.permute.xlu0 %1016
      %1018 = vrot.lane.b32.xlu0 %v361, 12
      %v1019 = vpop.permute.xlu0 %1018
      %1020 = vrot.lane.b32.xlu0 %v362, 12
      %v1021 = vpop.permute.xlu0 %1020
      %1022 = vrot.lane.b32.xlu0 %v363, 12
      %v1023 = vpop.permute.xlu0 %1022
      %1024 = vrot.lane.b32.xlu0 %v364, 12
      %v1025 = vpop.permute.xlu0 %1024
      %1026 = vrot.lane.b32.xlu0 %v365, 12
      %v1027 = vpop.permute.xlu0 %1026
      %1028 = vrot.lane.b32.xlu0 %v366, 12
      %v1029 = vpop.permute.xlu0 %1028
      %1030 = vrot.lane.b32.xlu0 %v367, 12
      %v1031 = vpop.permute.xlu0 %1030
      %1032 = vrot.lane.b32.xlu0 %v368, 12
      %v1033 = vpop.permute.xlu0 %1032
      %1034 = vrot.lane.b32.xlu0 %v369, 12
      %v1035 = vpop.permute.xlu0 %1034
      %1036 = vrot.lane.b32.xlu0 %v370, 12
      %v1037 = vpop.permute.xlu0 %1036
      %1038 = vrot.lane.b32.xlu0 %v371, 12
      %v1039 = vpop.permute.xlu0 %1038
      %1040 = vrot.lane.b32.xlu0 %v372, 12
      %v1041 = vpop.permute.xlu0 %1040
      %1042 = vrot.lane.b32.xlu0 %v373, 12
      %v1043 = vpop.permute.xlu0 %1042
      %1044 = vrot.lane.b32.xlu0 %v374, 12
      %v1045 = vpop.permute.xlu0 %1044
      %1046 = vrot.lane.b32.xlu0 %v375, 12
      %v1047 = vpop.permute.xlu0 %1046
      %1048 = vrot.lane.b32.xlu0 %v376, 12
      %v1049 = vpop.permute.xlu0 %1048
      %1050 = vrot.lane.b32.xlu0 %v377, 12
      %v1051 = vpop.permute.xlu0 %1050
      %1052 = vrot.lane.b32.xlu0 %v378, 12
      %v1053 = vpop.permute.xlu0 %1052
      %1054 = vrot.lane.b32.xlu0 %v379, 12
      %v1055 = vpop.permute.xlu0 %1054
      %1056 = vrot.lane.b32.xlu0 %v380, 12
      %v1057 = vpop.permute.xlu0 %1056
      %1058 = vrot.lane.b32.xlu0 %v381, 12
      %v1059 = vpop.permute.xlu0 %1058
      %1060 = vrot.lane.b32.xlu0 %v382, 12
      %v1061 = vpop.permute.xlu0 %1060
      %1062 = vrot.lane.b32.xlu0 %v383, 12
      %v1063 = vpop.permute.xlu0 %1062
      %1064 = vrot.lane.b32.xlu0 %v384, 12
      %v1065 = vpop.permute.xlu0 %1064
      %1066 = vrot.lane.b32.xlu0 %v385, 12
      %v1067 = vpop.permute.xlu0 %1066
      %1068 = vrot.lane.b32.xlu0 %v386, 12
      %v1069 = vpop.permute.xlu0 %1068
      %1070 = vrot.lane.b32.xlu0 %v387, 12
      %v1071 = vpop.permute.xlu0 %1070
      %1072 = vrot.lane.b32.xlu0 %v388, 12
      %v1073 = vpop.permute.xlu0 %1072
      %1146 = vrot.lane.b32.xlu0 %v389, 15
      %v1147 = vpop.permute.xlu0 %1146
      %1148 = vrot.lane.b32.xlu0 %v390, 15
      %v1149 = vpop.permute.xlu0 %1148
      %1150 = vrot.lane.b32.xlu0 %v391, 15
      %v1151 = vpop.permute.xlu0 %1150
      %1152 = vrot.lane.b32.xlu0 %v392, 15
      %v1153 = vpop.permute.xlu0 %1152
      %1154 = vrot.lane.b32.xlu0 %v393, 15
      %v1155 = vpop.permute.xlu0 %1154
      %1156 = vrot.lane.b32.xlu0 %v394, 15
      %v1157 = vpop.permute.xlu0 %1156
      %1158 = vrot.lane.b32.xlu0 %v395, 15
      %v1159 = vpop.permute.xlu0 %1158
      %1160 = vrot.lane.b32.xlu0 %v396, 15
      %v1161 = vpop.permute.xlu0 %1160
      %1162 = vrot.lane.b32.xlu0 %v397, 15
      %v1163 = vpop.permute.xlu0 %1162
      %1164 = vrot.lane.b32.xlu0 %v398, 15
      %v1165 = vpop.permute.xlu0 %1164
      %1166 = vrot.lane.b32.xlu0 %v399, 15
      %v1167 = vpop.permute.xlu0 %1166
      %1168 = vrot.lane.b32.xlu0 %v400, 15
      %v1169 = vpop.permute.xlu0 %1168
      %1170 = vrot.lane.b32.xlu0 %v401, 15
      %v1171 = vpop.permute.xlu0 %1170
      %1172 = vrot.lane.b32.xlu0 %v402, 15
      %v1173 = vpop.permute.xlu0 %1172
      %1174 = vrot.lane.b32.xlu0 %v403, 15
      %v1175 = vpop.permute.xlu0 %1174
      %1176 = vrot.lane.b32.xlu0 %v404, 15
      %v1177 = vpop.permute.xlu0 %1176
      %1178 = vrot.lane.b32.xlu0 %v405, 15
      %v1179 = vpop.permute.xlu0 %1178
      %1180 = vrot.lane.b32.xlu0 %v406, 15
      %v1181 = vpop.permute.xlu0 %1180
      %1182 = vrot.lane.b32.xlu0 %v407, 15
      %v1183 = vpop.permute.xlu0 %1182
      %1184 = vrot.lane.b32.xlu0 %v408, 15
      %v1185 = vpop.permute.xlu0 %1184
      %1186 = vrot.lane.b32.xlu0 %v409, 15
      %v1187 = vpop.permute.xlu0 %1186
      %1188 = vrot.lane.b32.xlu0 %v410, 15
      %v1189 = vpop.permute.xlu0 %1188
      %1190 = vrot.lane.b32.xlu0 %v411, 15
      %v1191 = vpop.permute.xlu0 %1190
      %1192 = vrot.lane.b32.xlu0 %v412, 15
      %v1193 = vpop.permute.xlu0 %1192
      %1194 = vrot.lane.b32.xlu0 %v413, 15
      %v1195 = vpop.permute.xlu0 %1194
      %1196 = vrot.lane.b32.xlu0 %v414, 15
      %v1197 = vpop.permute.xlu0 %1196
      %1198 = vrot.lane.b32.xlu0 %v415, 15
      %v1199 = vpop.permute.xlu0 %1198
      %1200 = vrot.lane.b32.xlu0 %v416, 15
      %v1201 = vpop.permute.xlu0 %1200
      %1202 = vrot.lane.b32.xlu0 %v417, 15
      %v1203 = vpop.permute.xlu0 %1202
      %1204 = vrot.lane.b32.xlu0 %v418, 15
      %v1205 = vpop.permute.xlu0 %1204
      %1206 = vrot.lane.b32.xlu0 %v419, 15
      %v1207 = vpop.permute.xlu0 %1206
      %1208 = vrot.lane.b32.xlu0 %v420, 15
      %v1209 = vpop.permute.xlu0 %1208
      %1210 = vrot.lane.b32.xlu0 %v421, 15
      %v1211 = vpop.permute.xlu0 %1210
      %1212 = vrot.lane.b32.xlu0 %v422, 15
      %v1213 = vpop.permute.xlu0 %1212
      %1214 = vrot.lane.b32.xlu0 %v423, 15
      %v1215 = vpop.permute.xlu0 %1214
      %1216 = vrot.lane.b32.xlu0 %v424, 15
      %v1217 = vpop.permute.xlu0 %1216
      %1290 = vrot.lane.b32.xlu0 %v426, 18
      %v1291 = vpop.permute.xlu0 %1290
      %1292 = vrot.lane.b32.xlu0 %v427, 18
      %v1293 = vpop.permute.xlu0 %1292
      %1294 = vrot.lane.b32.xlu0 %v428, 18
      %v1295 = vpop.permute.xlu0 %1294
      %1296 = vrot.lane.b32.xlu0 %v429, 18
      %v1297 = vpop.permute.xlu0 %1296
      %1298 = vrot.lane.b32.xlu0 %v430, 18
      %v1299 = vpop.permute.xlu0 %1298
      %1300 = vrot.lane.b32.xlu0 %v431, 18
      %v1301 = vpop.permute.xlu0 %1300
      %1302 = vrot.lane.b32.xlu0 %v432, 18
      %v1303 = vpop.permute.xlu0 %1302
      %1304 = vrot.lane.b32.xlu0 %v433, 18
      %v1305 = vpop.permute.xlu0 %1304
      %1306 = vrot.lane.b32.xlu0 %v434, 18
      %v1307 = vpop.permute.xlu0 %1306
      %1308 = vrot.lane.b32.xlu0 %v435, 18
      %v1309 = vpop.permute.xlu0 %1308
      %1310 = vrot.lane.b32.xlu0 %v436, 18
      %v1311 = vpop.permute.xlu0 %1310
      %1312 = vrot.lane.b32.xlu0 %v437, 18
      %v1313 = vpop.permute.xlu0 %1312
      %1314 = vrot.lane.b32.xlu0 %v438, 18
      %v1315 = vpop.permute.xlu0 %1314
      %1316 = vrot.lane.b32.xlu0 %v439, 18
      %v1317 = vpop.permute.xlu0 %1316
      %1318 = vrot.lane.b32.xlu0 %v440, 18
      %v1319 = vpop.permute.xlu0 %1318
      %1320 = vrot.lane.b32.xlu0 %v441, 18
      %v1321 = vpop.permute.xlu0 %1320
      %1322 = vrot.lane.b32.xlu0 %v442, 18
      %v1323 = vpop.permute.xlu0 %1322
      %1324 = vrot.lane.b32.xlu0 %v443, 18
      %v1325 = vpop.permute.xlu0 %1324
      %1326 = vrot.lane.b32.xlu0 %v444, 18
      %v1327 = vpop.permute.xlu0 %1326
      %1328 = vrot.lane.b32.xlu0 %v445, 18
      %v1329 = vpop.permute.xlu0 %1328
      %1330 = vrot.lane.b32.xlu0 %v446, 18
      %v1331 = vpop.permute.xlu0 %1330
      %1332 = vrot.lane.b32.xlu0 %v447, 18
      %v1333 = vpop.permute.xlu0 %1332
      %1334 = vrot.lane.b32.xlu0 %v448, 18
      %v1335 = vpop.permute.xlu0 %1334
      %1336 = vrot.lane.b32.xlu0 %v449, 18
      %v1337 = vpop.permute.xlu0 %1336
      %1338 = vrot.lane.b32.xlu0 %v450, 18
      %v1339 = vpop.permute.xlu0 %1338
      %1340 = vrot.lane.b32.xlu0 %v451, 18
      %v1341 = vpop.permute.xlu0 %1340
      %1342 = vrot.lane.b32.xlu0 %v452, 18
      %v1343 = vpop.permute.xlu0 %1342
      %1344 = vrot.lane.b32.xlu0 %v453, 18
      %v1345 = vpop.permute.xlu0 %1344
      %1346 = vrot.lane.b32.xlu0 %v454, 18
      %v1347 = vpop.permute.xlu0 %1346
      %1348 = vrot.lane.b32.xlu0 %v455, 18
      %v1349 = vpop.permute.xlu0 %1348
      %1350 = vrot.lane.b32.xlu0 %v456, 18
      %v1351 = vpop.permute.xlu0 %1350
      %1352 = vrot.lane.b32.xlu0 %v457, 18
      %v1353 = vpop.permute.xlu0 %1352
      %1354 = vrot.lane.b32.xlu0 %v458, 18
      %v1355 = vpop.permute.xlu0 %1354
      %1356 = vrot.lane.b32.xlu0 %v459, 18
      %v1357 = vpop.permute.xlu0 %1356
      %1358 = vrot.lane.b32.xlu0 %v460, 18
      %v1359 = vpop.permute.xlu0 %1358
      %1360 = vrot.lane.b32.xlu0 %v461, 18
      %v1361 = vpop.permute.xlu0 %1360
      %1434 = vrot.lane.b32.xlu0 %v462, 21
      %v1435 = vpop.permute.xlu0 %1434
      %1436 = vrot.lane.b32.xlu0 %v463, 21
      %v1437 = vpop.permute.xlu0 %1436
      %1438 = vrot.lane.b32.xlu0 %v464, 21
      %v1439 = vpop.permute.xlu0 %1438
      %1440 = vrot.lane.b32.xlu0 %v465, 21
      %v1441 = vpop.permute.xlu0 %1440
      %1442 = vrot.lane.b32.xlu0 %v466, 21
      %v1443 = vpop.permute.xlu0 %1442
      %1444 = vrot.lane.b32.xlu0 %v467, 21
      %v1445 = vpop.permute.xlu0 %1444
      %1446 = vrot.lane.b32.xlu0 %v468, 21
      %v1447 = vpop.permute.xlu0 %1446
      %1448 = vrot.lane.b32.xlu0 %v469, 21
      %v1449 = vpop.permute.xlu0 %1448
      %1450 = vrot.lane.b32.xlu0 %v470, 21
      %v1451 = vpop.permute.xlu0 %1450
      %1452 = vrot.lane.b32.xlu0 %v471, 21
      %v1453 = vpop.permute.xlu0 %1452
      %1454 = vrot.lane.b32.xlu0 %v472, 21
      %v1455 = vpop.permute.xlu0 %1454
      %1456 = vrot.lane.b32.xlu0 %v473, 21
      %v1457 = vpop.permute.xlu0 %1456
      %1458 = vrot.lane.b32.xlu0 %v474, 21
      %v1459 = vpop.permute.xlu0 %1458
      %1460 = vrot.lane.b32.xlu0 %v475, 21
      %v1461 = vpop.permute.xlu0 %1460
      %1462 = vrot.lane.b32.xlu0 %v476, 21
      %v1463 = vpop.permute.xlu0 %1462
      %1464 = vrot.lane.b32.xlu0 %v477, 21
      %v1465 = vpop.permute.xlu0 %1464
      %1466 = vrot.lane.b32.xlu0 %v478, 21
      %v1467 = vpop.permute.xlu0 %1466
      %1468 = vrot.lane.b32.xlu0 %v479, 21
      %v1469 = vpop.permute.xlu0 %1468
      %1470 = vrot.lane.b32.xlu0 %v480, 21
      %v1471 = vpop.permute.xlu0 %1470
      %1472 = vrot.lane.b32.xlu0 %v481, 21
      %v1473 = vpop.permute.xlu0 %1472
      %1474 = vrot.lane.b32.xlu0 %v482, 21
      %v1475 = vpop.permute.xlu0 %1474
      %1476 = vrot.lane.b32.xlu0 %v483, 21
      %v1477 = vpop.permute.xlu0 %1476
      %1478 = vrot.lane.b32.xlu0 %v484, 21
      %v1479 = vpop.permute.xlu0 %1478
      %1480 = vrot.lane.b32.xlu0 %v485, 21
      %v1481 = vpop.permute.xlu0 %1480
      %1482 = vrot.lane.b32.xlu0 %v486, 21
      %v1483 = vpop.permute.xlu0 %1482
      %1484 = vrot.lane.b32.xlu0 %v487, 21
      %v1485 = vpop.permute.xlu0 %1484
      %1486 = vrot.lane.b32.xlu0 %v488, 21
      %v1487 = vpop.permute.xlu0 %1486
      %1488 = vrot.lane.b32.xlu0 %v489, 21
      %v1489 = vpop.permute.xlu0 %1488
      %1490 = vrot.lane.b32.xlu0 %v490, 21
      %v1491 = vpop.permute.xlu0 %1490
      %1492 = vrot.lane.b32.xlu0 %v491, 21
      %v1493 = vpop.permute.xlu0 %1492
      %1494 = vrot.lane.b32.xlu0 %v492, 21
      %v1495 = vpop.permute.xlu0 %1494
      %1496 = vrot.lane.b32.xlu0 %v493, 21
      %v1497 = vpop.permute.xlu0 %1496
      %1498 = vrot.lane.b32.xlu0 %v494, 21
      %v1499 = vpop.permute.xlu0 %1498
      %1500 = vrot.lane.b32.xlu0 %v495, 21
      %v1501 = vpop.permute.xlu0 %1500
      %1502 = vrot.lane.b32.xlu0 %v496, 21
      %v1503 = vpop.permute.xlu0 %1502
      %1504 = vrot.lane.b32.xlu0 %v497, 21
      %v1505 = vpop.permute.xlu0 %1504
      %1578 = vrot.lane.b32.xlu0 %v498, 24
      %v1579 = vpop.permute.xlu0 %1578
      %1580 = vrot.lane.b32.xlu0 %v499, 24
      %v1581 = vpop.permute.xlu0 %1580
      %1582 = vrot.lane.b32.xlu0 %v500, 24
      %v1583 = vpop.permute.xlu0 %1582
      %1584 = vrot.lane.b32.xlu0 %v501, 24
      %v1585 = vpop.permute.xlu0 %1584
      %1586 = vrot.lane.b32.xlu0 %v502, 24
      %v1587 = vpop.permute.xlu0 %1586
      %1588 = vrot.lane.b32.xlu0 %v503, 24
      %v1589 = vpop.permute.xlu0 %1588
      %1590 = vrot.lane.b32.xlu0 %v504, 24
      %v1591 = vpop.permute.xlu0 %1590
      %1592 = vrot.lane.b32.xlu0 %v505, 24
      %v1593 = vpop.permute.xlu0 %1592
      %1594 = vrot.lane.b32.xlu0 %v506, 24
      %v1595 = vpop.permute.xlu0 %1594
      %1596 = vrot.lane.b32.xlu0 %v507, 24
      %v1597 = vpop.permute.xlu0 %1596
      %1598 = vrot.lane.b32.xlu0 %v508, 24
      %v1599 = vpop.permute.xlu0 %1598
      %1600 = vrot.lane.b32.xlu0 %v509, 24
      %v1601 = vpop.permute.xlu0 %1600
      %1602 = vrot.lane.b32.xlu0 %v510, 24
      %v1603 = vpop.permute.xlu0 %1602
      %1604 = vrot.lane.b32.xlu0 %v511, 24
      %v1605 = vpop.permute.xlu0 %1604
      %1606 = vrot.lane.b32.xlu0 %v512, 24
      %v1607 = vpop.permute.xlu0 %1606
      %1608 = vrot.lane.b32.xlu0 %v513, 24
      %v1609 = vpop.permute.xlu0 %1608
      %1610 = vrot.lane.b32.xlu0 %v514, 24
      %v1611 = vpop.permute.xlu0 %1610
      %1612 = vrot.lane.b32.xlu0 %v515, 24
      %v1613 = vpop.permute.xlu0 %1612
      %1614 = vrot.lane.b32.xlu0 %v516, 24
      %v1615 = vpop.permute.xlu0 %1614
      %1616 = vrot.lane.b32.xlu0 %v517, 24
      %v1617 = vpop.permute.xlu0 %1616
      %1618 = vrot.lane.b32.xlu0 %v518, 24
      %v1619 = vpop.permute.xlu0 %1618
      %1620 = vrot.lane.b32.xlu0 %v519, 24
      %v1621 = vpop.permute.xlu0 %1620
      %1622 = vrot.lane.b32.xlu0 %v520, 24
      %v1623 = vpop.permute.xlu0 %1622
      %1624 = vrot.lane.b32.xlu0 %v521, 24
      %v1625 = vpop.permute.xlu0 %1624
      %1626 = vrot.lane.b32.xlu0 %v522, 24
      %v1627 = vpop.permute.xlu0 %1626
      %1628 = vrot.lane.b32.xlu0 %v523, 24
      %v1629 = vpop.permute.xlu0 %1628
      %1630 = vrot.lane.b32.xlu0 %v524, 24
      %v1631 = vpop.permute.xlu0 %1630
      %1632 = vrot.lane.b32.xlu0 %v525, 24
      %v1633 = vpop.permute.xlu0 %1632
      %1634 = vrot.lane.b32.xlu0 %v526, 24
      %v1635 = vpop.permute.xlu0 %1634
      %1636 = vrot.lane.b32.xlu0 %v527, 24
      %v1637 = vpop.permute.xlu0 %1636
      %1638 = vrot.lane.b32.xlu0 %v528, 24
      %v1639 = vpop.permute.xlu0 %1638
      %1640 = vrot.lane.b32.xlu0 %v529, 24
      %v1641 = vpop.permute.xlu0 %1640
      %1642 = vrot.lane.b32.xlu0 %v530, 24
      %v1643 = vpop.permute.xlu0 %1642
      %1644 = vrot.lane.b32.xlu0 %v531, 24
      %v1645 = vpop.permute.xlu0 %1644
      %1646 = vrot.lane.b32.xlu0 %v532, 24
      %v1647 = vpop.permute.xlu0 %1646
      %1648 = vrot.lane.b32.xlu0 %v533, 24
      %v1649 = vpop.permute.xlu0 %1648
      %vm1686 = vcmask 23552
      %v1687 = vsel %vm1686, %v208, %v571
      %v1688 = vsel %vm1686, %v209, %v573
      %v1689 = vsel %vm1686, %v210, %v575
      %v1690 = vsel %vm1686, %v211, %v577
      %v1691 = vsel %vm1686, %v212, %v579
      %v1692 = vsel %vm1686, %v213, %v581
      %v1693 = vsel %vm1686, %v214, %v583
      %v1694 = vsel %vm1686, %v215, %v585
      %v1695 = vsel %vm1686, %v216, %v587
      %v1696 = vsel %vm1686, %v217, %v589
      %v1697 = vsel %vm1686, %v218, %v591
      %v1698 = vsel %vm1686, %v219, %v593
      %v1699 = vsel %vm1686, %v220, %v595
      %v1700 = vsel %vm1686, %v221, %v597
      %v1701 = vsel %vm1686, %v222, %v599
      %v1702 = vsel %vm1686, %v223, %v601
      %v1703 = vsel %vm1686, %v224, %v603
      %v1704 = vsel %vm1686, %v225, %v605
      %v1705 = vsel %vm1686, %v226, %v607
      %v1706 = vsel %vm1686, %v227, %v609
      %v1707 = vsel %vm1686, %v228, %v611
      %v1708 = vsel %vm1686, %v229, %v613
      %v1709 = vsel %vm1686, %v230, %v615
      %v1710 = vsel %vm1686, %v231, %v617
      %v1711 = vsel %vm1686, %v232, %v619
      %v1712 = vsel %vm1686, %v233, %v621
      %v1713 = vsel %vm1686, %v234, %v623
      %v1714 = vsel %vm1686, %v235, %v625
      %v1715 = vsel %vm1686, %v236, %v627
      %v1716 = vsel %vm1686, %v237, %v629
      %v1717 = vsel %vm1686, %v238, %v631
      %v1718 = vsel %vm1686, %v239, %v633
      %v1719 = vsel %vm1686, %v240, %v635
      %v1720 = vsel %vm1686, %v241, %v637
      %v1721 = vsel %vm1686, %v242, %v639
      %v1722 = vsel %vm1686, %v243, %v641
      %vm1723 = vcmask 48128
      %v1724 = vsel %vm1723, %v1687, %v715
      %v1725 = vsel %vm1723, %v1688, %v717
      %v1726 = vsel %vm1723, %v1689, %v719
      %v1727 = vsel %vm1723, %v1690, %v721
      %v1728 = vsel %vm1723, %v1691, %v723
      %v1729 = vsel %vm1723, %v1692, %v725
      %v1730 = vsel %vm1723, %v1693, %v727
      %v1731 = vsel %vm1723, %v1694, %v729
      %v1732 = vsel %vm1723, %v1695, %v731
      %v1733 = vsel %vm1723, %v1696, %v733
      %v1734 = vsel %vm1723, %v1697, %v735
      %v1735 = vsel %vm1723, %v1698, %v737
      %v1736 = vsel %vm1723, %v1699, %v739
      %v1737 = vsel %vm1723, %v1700, %v741
      %v1738 = vsel %vm1723, %v1701, %v743
      %v1739 = vsel %vm1723, %v1702, %v745
      %v1740 = vsel %vm1723, %v1703, %v747
      %v1741 = vsel %vm1723, %v1704, %v749
      %v1742 = vsel %vm1723, %v1705, %v751
      %v1743 = vsel %vm1723, %v1706, %v753
      %v1744 = vsel %vm1723, %v1707, %v755
      %v1745 = vsel %vm1723, %v1708, %v757
      %v1746 = vsel %vm1723, %v1709, %v759
      %v1747 = vsel %vm1723, %v1710, %v761
      %v1748 = vsel %vm1723, %v1711, %v763
      %v1749 = vsel %vm1723, %v1712, %v765
      %v1750 = vsel %vm1723, %v1713, %v767
      %v1751 = vsel %vm1723, %v1714, %v769
      %v1752 = vsel %vm1723, %v1715, %v771
      %v1753 = vsel %vm1723, %v1716, %v773
      %v1754 = vsel %vm1723, %v1717, %v775
      %v1755 = vsel %vm1723, %v1718, %v777
      %v1756 = vsel %vm1723, %v1719, %v779
      %v1757 = vsel %vm1723, %v1720, %v781
      %v1758 = vsel %vm1723, %v1721, %v783
      %v1759 = vsel %vm1723, %v1722, %v785
      %vm1760 = vcmask 72704
      %v1761 = vsel %vm1760, %v1724, %v859
      %v1762 = vsel %vm1760, %v1725, %v861
      %v1763 = vsel %vm1760, %v1726, %v863
      %v1764 = vsel %vm1760, %v1727, %v865
      %v1765 = vsel %vm1760, %v1728, %v867
      %v1766 = vsel %vm1760, %v1729, %v869
      %v1767 = vsel %vm1760, %v1730, %v871
      %v1768 = vsel %vm1760, %v1731, %v873
      %v1769 = vsel %vm1760, %v1732, %v875
      %v1770 = vsel %vm1760, %v1733, %v877
      %v1771 = vsel %vm1760, %v1734, %v879
      %v1772 = vsel %vm1760, %v1735, %v881
      %v1773 = vsel %vm1760, %v1736, %v883
      %v1774 = vsel %vm1760, %v1737, %v885
      %v1775 = vsel %vm1760, %v1738, %v887
      %v1776 = vsel %vm1760, %v1739, %v889
      %v1777 = vsel %vm1760, %v1740, %v891
      %v1778 = vsel %vm1760, %v1741, %v893
      %v1779 = vsel %vm1760, %v1742, %v895
      %v1780 = vsel %vm1760, %v1743, %v897
      %v1781 = vsel %vm1760, %v1744, %v899
      %v1782 = vsel %vm1760, %v1745, %v901
      %v1783 = vsel %vm1760, %v1746, %v903
      %v1784 = vsel %vm1760, %v1747, %v905
      %v1785 = vsel %vm1760, %v1748, %v907
      %v1786 = vsel %vm1760, %v1749, %v909
      %v1787 = vsel %vm1760, %v1750, %v911
      %v1788 = vsel %vm1760, %v1751, %v913
      %v1789 = vsel %vm1760, %v1752, %v915
      %v1790 = vsel %vm1760, %v1753, %v917
      %v1791 = vsel %vm1760, %v1754, %v919
      %v1792 = vsel %vm1760, %v1755, %v921
      %v1793 = vsel %vm1760, %v1756, %v923
      %v1794 = vsel %vm1760, %v1757, %v925
      %v1795 = vsel %vm1760, %v1758, %v927
      %v1796 = vsel %vm1760, %v1759, %v929
      %vm1797 = vcmask 97280
      %v1798 = vsel %vm1797, %v1761, %v1003
      %v1799 = vsel %vm1797, %v1762, %v1005
      %v1800 = vsel %vm1797, %v1763, %v1007
      %v1801 = vsel %vm1797, %v1764, %v1009
      %v1802 = vsel %vm1797, %v1765, %v1011
      %v1803 = vsel %vm1797, %v1766, %v1013
      %v1804 = vsel %vm1797, %v1767, %v1015
      %v1805 = vsel %vm1797, %v1768, %v1017
      %v1806 = vsel %vm1797, %v1769, %v1019
      %v1807 = vsel %vm1797, %v1770, %v1021
      %v1808 = vsel %vm1797, %v1771, %v1023
      %v1809 = vsel %vm1797, %v1772, %v1025
      %v1810 = vsel %vm1797, %v1773, %v1027
      %v1811 = vsel %vm1797, %v1774, %v1029
      %v1812 = vsel %vm1797, %v1775, %v1031
      %v1813 = vsel %vm1797, %v1776, %v1033
      %v1814 = vsel %vm1797, %v1777, %v1035
      %v1815 = vsel %vm1797, %v1778, %v1037
      %v1816 = vsel %vm1797, %v1779, %v1039
      %v1817 = vsel %vm1797, %v1780, %v1041
      %v1818 = vsel %vm1797, %v1781, %v1043
      %v1819 = vsel %vm1797, %v1782, %v1045
      %v1820 = vsel %vm1797, %v1783, %v1047
      %v1821 = vsel %vm1797, %v1784, %v1049
      %v1822 = vsel %vm1797, %v1785, %v1051
      %v1823 = vsel %vm1797, %v1786, %v1053
      %v1824 = vsel %vm1797, %v1787, %v1055
      %v1825 = vsel %vm1797, %v1788, %v1057
      %v1826 = vsel %vm1797, %v1789, %v1059
      %v1827 = vsel %vm1797, %v1790, %v1061
      %v1828 = vsel %vm1797, %v1791, %v1063
      %v1829 = vsel %vm1797, %v1792, %v1065
      %v1830 = vsel %vm1797, %v1793, %v1067
      %v1831 = vsel %vm1797, %v1794, %v1069
      %v1832 = vsel %vm1797, %v1795, %v1071
      %v1833 = vsel %vm1797, %v1796, %v1073
      %vm1834 = vcmask 121856
      %v1835 = vsel %vm1834, %v1798, %v1147
      %v1836 = vsel %vm1834, %v1799, %v1149
      %v1837 = vsel %vm1834, %v1800, %v1151
      %v1838 = vsel %vm1834, %v1801, %v1153
      %v1839 = vsel %vm1834, %v1802, %v1155
      %v1840 = vsel %vm1834, %v1803, %v1157
      %v1841 = vsel %vm1834, %v1804, %v1159
      %v1842 = vsel %vm1834, %v1805, %v1161
      %v1843 = vsel %vm1834, %v1806, %v1163
      %v1844 = vsel %vm1834, %v1807, %v1165
      %v1845 = vsel %vm1834, %v1808, %v1167
      %v1846 = vsel %vm1834, %v1809, %v1169
      %v1847 = vsel %vm1834, %v1810, %v1171
      %v1848 = vsel %vm1834, %v1811, %v1173
      %v1849 = vsel %vm1834, %v1812, %v1175
      %v1850 = vsel %vm1834, %v1813, %v1177
      %v1851 = vsel %vm1834, %v1814, %v1179
      %v1852 = vsel %vm1834, %v1815, %v1181
      %v1853 = vsel %vm1834, %v1816, %v1183
      %v1854 = vsel %vm1834, %v1817, %v1185
      %v1855 = vsel %vm1834, %v1818, %v1187
      %v1856 = vsel %vm1834, %v1819, %v1189
      %v1857 = vsel %vm1834, %v1820, %v1191
      %v1858 = vsel %vm1834, %v1821, %v1193
      %v1859 = vsel %vm1834, %v1822, %v1195
      %v1860 = vsel %vm1834, %v1823, %v1197
      %v1861 = vsel %vm1834, %v1824, %v1199
      %v1862 = vsel %vm1834, %v1825, %v1201
      %v1863 = vsel %vm1834, %v1826, %v1203
      %v1864 = vsel %vm1834, %v1827, %v1205
      %v1865 = vsel %vm1834, %v1828, %v1207
      %v1866 = vsel %vm1834, %v1829, %v1209
      %v1867 = vsel %vm1834, %v1830, %v1211
      %v1868 = vsel %vm1834, %v1831, %v1213
      %v1869 = vsel %vm1834, %v1832, %v1215
      %v1870 = vsel %vm1834, %v1833, %v1217
      %vm1871 = vcmask 146432
      %v1872 = vsel %vm1871, %v1835, %v1291
      %v1873 = vsel %vm1871, %v1836, %v1293
      %v1874 = vsel %vm1871, %v1837, %v1295
      %v1875 = vsel %vm1871, %v1838, %v1297
      %v1876 = vsel %vm1871, %v1839, %v1299
      %v1877 = vsel %vm1871, %v1840, %v1301
      %v1878 = vsel %vm1871, %v1841, %v1303
      %v1879 = vsel %vm1871, %v1842, %v1305
      %v1880 = vsel %vm1871, %v1843, %v1307
      %v1881 = vsel %vm1871, %v1844, %v1309
      %v1882 = vsel %vm1871, %v1845, %v1311
      %v1883 = vsel %vm1871, %v1846, %v1313
      %v1884 = vsel %vm1871, %v1847, %v1315
      %v1885 = vsel %vm1871, %v1848, %v1317
      %v1886 = vsel %vm1871, %v1849, %v1319
      %v1887 = vsel %vm1871, %v1850, %v1321
      %v1888 = vsel %vm1871, %v1851, %v1323
      %v1889 = vsel %vm1871, %v1852, %v1325
      %v1890 = vsel %vm1871, %v1853, %v1327
      %v1891 = vsel %vm1871, %v1854, %v1329
      %v1892 = vsel %vm1871, %v1855, %v1331
      %v1893 = vsel %vm1871, %v1856, %v1333
      %v1894 = vsel %vm1871, %v1857, %v1335
      %v1895 = vsel %vm1871, %v1858, %v1337
      %v1896 = vsel %vm1871, %v1859, %v1339
      %v1897 = vsel %vm1871, %v1860, %v1341
      %v1898 = vsel %vm1871, %v1861, %v1343
      %v1899 = vsel %vm1871, %v1862, %v1345
      %v1900 = vsel %vm1871, %v1863, %v1347
      %v1901 = vsel %vm1871, %v1864, %v1349
      %v1902 = vsel %vm1871, %v1865, %v1351
      %v1903 = vsel %vm1871, %v1866, %v1353
      %v1904 = vsel %vm1871, %v1867, %v1355
      %v1905 = vsel %vm1871, %v1868, %v1357
      %v1906 = vsel %vm1871, %v1869, %v1359
      %v1907 = vsel %vm1871, %v1870, %v1361
      %vm1908 = vcmask 171008
      %v1909 = vsel %vm1908, %v1872, %v1435
      %v1910 = vsel %vm1908, %v1873, %v1437
      %v1911 = vsel %vm1908, %v1874, %v1439
      %v1912 = vsel %vm1908, %v1875, %v1441
      %v1913 = vsel %vm1908, %v1876, %v1443
      %v1914 = vsel %vm1908, %v1877, %v1445
      %v1915 = vsel %vm1908, %v1878, %v1447
      %v1916 = vsel %vm1908, %v1879, %v1449
      %v1917 = vsel %vm1908, %v1880, %v1451
      %v1918 = vsel %vm1908, %v1881, %v1453
      %v1919 = vsel %vm1908, %v1882, %v1455
      %v1920 = vsel %vm1908, %v1883, %v1457
      %v1921 = vsel %vm1908, %v1884, %v1459
      %v1922 = vsel %vm1908, %v1885, %v1461
      %v1923 = vsel %vm1908, %v1886, %v1463
      %v1924 = vsel %vm1908, %v1887, %v1465
      %v1925 = vsel %vm1908, %v1888, %v1467
      %v1926 = vsel %vm1908, %v1889, %v1469
      %v1927 = vsel %vm1908, %v1890, %v1471
      %v1928 = vsel %vm1908, %v1891, %v1473
      %v1929 = vsel %vm1908, %v1892, %v1475
      %v1930 = vsel %vm1908, %v1893, %v1477
      %v1931 = vsel %vm1908, %v1894, %v1479
      %v1932 = vsel %vm1908, %v1895, %v1481
      %v1933 = vsel %vm1908, %v1896, %v1483
      %v1934 = vsel %vm1908, %v1897, %v1485
      %v1935 = vsel %vm1908, %v1898, %v1487
      %v1936 = vsel %vm1908, %v1899, %v1489
      %v1937 = vsel %vm1908, %v1900, %v1491
      %v1938 = vsel %vm1908, %v1901, %v1493
      %v1939 = vsel %vm1908, %v1902, %v1495
      %v1940 = vsel %vm1908, %v1903, %v1497
      %v1941 = vsel %vm1908, %v1904, %v1499
      %v1942 = vsel %vm1908, %v1905, %v1501
      %v1943 = vsel %vm1908, %v1906, %v1503
      %v1944 = vsel %vm1908, %v1907, %v1505
      %vm1945 = vcmask 195584
      %v1946 = vsel %vm1945, %v1909, %v1579
      %v1947 = vsel %vm1945, %v1910, %v1581
      %v1948 = vsel %vm1945, %v1911, %v1583
      %v1949 = vsel %vm1945, %v1912, %v1585
      %v1950 = vsel %vm1945, %v1913, %v1587
      %v1951 = vsel %vm1945, %v1914, %v1589
      %v1952 = vsel %vm1945, %v1915, %v1591
      %v1953 = vsel %vm1945, %v1916, %v1593
      %v1954 = vsel %vm1945, %v1917, %v1595
      %v1955 = vsel %vm1945, %v1918, %v1597
      %v1956 = vsel %vm1945, %v1919, %v1599
      %v1957 = vsel %vm1945, %v1920, %v1601
      %v1958 = vsel %vm1945, %v1921, %v1603
      %v1959 = vsel %vm1945, %v1922, %v1605
      %v1960 = vsel %vm1945, %v1923, %v1607
      %v1961 = vsel %vm1945, %v1924, %v1609
      %v1962 = vsel %vm1945, %v1925, %v1611
      %v1963 = vsel %vm1945, %v1926, %v1613
      %v1964 = vsel %vm1945, %v1927, %v1615
      %v1965 = vsel %vm1945, %v1928, %v1617
      %v1966 = vsel %vm1945, %v1929, %v1619
      %v1967 = vsel %vm1945, %v1930, %v1621
      %v1968 = vsel %vm1945, %v1931, %v1623
      %v1969 = vsel %vm1945, %v1932, %v1625
      %v1970 = vsel %vm1945, %v1933, %v1627
      %v1971 = vsel %vm1945, %v1934, %v1629
      %v1972 = vsel %vm1945, %v1935, %v1631
      %v1973 = vsel %vm1945, %v1936, %v1633
      %v1974 = vsel %vm1945, %v1937, %v1635
      %v1975 = vsel %vm1945, %v1938, %v1637
      %v1976 = vsel %vm1945, %v1939, %v1639
      %v1977 = vsel %vm1945, %v1940, %v1641
      %v1978 = vsel %vm1945, %v1941, %v1643
      %v1979 = vsel %vm1945, %v1942, %v1645
      %v1980 = vsel %vm1945, %v1943, %v1647
      %v1981 = vsel %vm1945, %v1944, %v1649
      %v1982 = vld [vmem:[%s1] sm:$0xff]
      %v1983 = vld [vmem:[%s1 + $0x8] sm:$0xff]
      %v1984 = vld [vmem:[%s1 + $0x10] sm:$0xff]
      %v1985 = vld [vmem:[%s1 + $0x18] sm:$0x7]
      %vm1986 = vcmask 220160
      %v1988 = vsel %vm1986, %v1946, 0
      %v1991 = vsel %vm1986, %v1947, 0
      %v1994 = vsel %vm1986, %v1948, 0
      %v1997 = vsel %vm1986, %v1949, 0
      %v2000 = vsel %vm1986, %v1950, 0
      %v2003 = vsel %vm1986, %v1951, 0
      %v2006 = vsel %vm1986, %v1952, 0
      %v2009 = vsel %vm1986, %v1953, 0
      %v2012 = vsel %vm1986, %v1954, 0
      %v2015 = vsel %vm1986, %v1955, 0
      %v2018 = vsel %vm1986, %v1956, 0
      %v2021 = vsel %vm1986, %v1957, 0
      %v2024 = vsel %vm1986, %v1958, 0
      %v2027 = vsel %vm1986, %v1959, 0
      %v2030 = vsel %vm1986, %v1960, 0
      %v2033 = vsel %vm1986, %v1961, 0
      %v2036 = vsel %vm1986, %v1962, 0
      %v2039 = vsel %vm1986, %v1963, 0
      %v2042 = vsel %vm1986, %v1964, 0
      %v2045 = vsel %vm1986, %v1965, 0
      %v2048 = vsel %vm1986, %v1966, 0
      %v2051 = vsel %vm1986, %v1967, 0
      %v2054 = vsel %vm1986, %v1968, 0
      %v2057 = vsel %vm1986, %v1969, 0
      %v2060 = vsel %vm1986, %v1970, 0
      %v2063 = vsel %vm1986, %v1971, 0
      %v2066 = vsel %vm1986, %v1972, 0
      %v2069 = vsel %vm1986, %v1973, 0
      %v2072 = vsel %vm1986, %v1974, 0
      %v2075 = vsel %vm1986, %v1975, 0
      %v2078 = vsel %vm1986, %v1976, 0
      %v2081 = vsel %vm1986, %v1977, 0
      %v2084 = vsel %vm1986, %v1978, 0
      %v2087 = vsel %vm1986, %v1979, 0
      %v2090 = vsel %vm1986, %v1980, 0
      %v2093 = vsel %vm1986, %v1981, 0
      %vm2095 = vcmask 1042432
      %v2097 = vsel %vm2095, %v1985, 0
      %2099 = vmatprep.subr.mxu0 0.0
      %2100 = vmatpush1.msra.mxu0 0.0
      %2101 = vmatprep.subr.mxu0 0.0
      %2102 = vmatpush1.msra.mxu0 0.0
      %2103 = vmatprep.subr.mxu0 0.0
      %2104 = vmatpush1.msra.mxu0 0.0
      %2105 = vmatprep.subr.mxu0 0.0
      %2106 = vmatpush1.msra.mxu0 0.0
      %2107 = vmatprep.subr.mxu0 0.0
      %2108 = vmatpush1.msra.mxu0 0.0
      %2109 = vmatprep.subr.mxu0 0.0
      %2110 = vmatpush1.msra.mxu0 0.0
      %2111 = vmatprep.subr.mxu0 0.0
      %2112 = vmatpush1.msra.mxu0 0.0
      %2113 = vmatprep.subr.mxu0 0.0
      %2114 = vmatpush1.msra.mxu0 0.0
      %2115 = vmatprep.subr.mxu0 0.0
      %2116 = vmatpush1.msra.mxu0 0.0
      %2117 = vmatprep.subr.mxu0 0.0
      %2118 = vmatpush1.msra.mxu0 0.0
      %2119 = vmatprep.subr.mxu0 0.0
      %2120 = vmatpush1.msra.mxu0 0.0
      %2121 = vmatprep.subr.mxu0 0.0
      %2122 = vmatpush1.msra.mxu0 0.0
      %2123 = vmatprep.subr.mxu0 0.0
      %2124 = vmatpush1.msra.mxu0 %v2097
      %2125 = vmatprep.subr.mxu0 0.0
      %2126 = vmatpush1.msra.mxu0 %v1984
      %2127 = vmatprep.subr.mxu0 0.0
      %2128 = vmatpush1.msra.mxu0 %v1983
      %2129 = vmatprep.subr.mxu0 0.0
      %2130 = vmatpush1.msra.mxu0 %v1982
      %2131 = vmatprep.subr.mxu0 0.0
      %2132 = vmatpush2.msra.mxu0 0.0
      %2133 = vmatprep.subr.mxu0 0.0
      %2134 = vmatpush2.msra.mxu0 0.0
      %2135 = vmatprep.subr.mxu0 0.0
      %2136 = vmatpush2.msra.mxu0 0.0
      %2137 = vmatprep.subr.mxu0 0.0
      %2138 = vmatpush2.msra.mxu0 0.0
      %2139 = vmatprep.subr.mxu0 0.0
      %2140 = vmatpush2.msra.mxu0 0.0
      %2141 = vmatprep.subr.mxu0 0.0
      %2142 = vmatpush2.msra.mxu0 0.0
      %2143 = vmatprep.subr.mxu0 0.0
      %2144 = vmatpush2.msra.mxu0 0.0
      %2145 = vmatprep.subr.mxu0 0.0
      %2146 = vmatpush2.msra.mxu0 0.0
      %2147 = vmatprep.subr.mxu0 0.0
      %2148 = vmatpush2.msra.mxu0 0.0
      %2149 = vmatprep.subr.mxu0 0.0
      %2150 = vmatpush2.msra.mxu0 0.0
      %2151 = vmatprep.subr.mxu0 0.0
      %2152 = vmatpush2.msra.mxu0 0.0
      %2153 = vmatprep.subr.mxu0 0.0
      %2154 = vmatpush2.msra.mxu0 0.0
      %2155 = vmatprep.subr.mxu0 0.0
      %2156 = vmatpush2.msra.mxu0 0.0
      %2157 = vmatprep.subr.mxu0 0.0
      %2158 = vmatpush2.msra.mxu0 0.0
      %2159 = vmatprep.subr.mxu0 0.0
      %2160 = vmatpush2.msra.mxu0 0.0
      %2161 = vmatprep.subr.mxu0 0.0
      %2162 = vmatpush2.msra.mxu0 0.0
      %2163 = vmatprep.mubr.f32.mxu0 0.0
      %2164 = vmatmul.mubr.f32.gmra.mxu0 %v1988
      %v2165 = vpop.f32.mrf.mxu0
      %v2166 = vadd.f32 0.0, %v2165
      %v2167 = vpop.f32.mrf.mxu0
      %2168 = vmatprep.mubr.f32.mxu0 0.0
      %2169 = vmatmul.mubr.f32.gmra.mxu0 %v1991
      %v2170 = vpop.f32.mrf.mxu0
      %v2171 = vadd.f32 0.0, %v2170
      %v2172 = vpop.f32.mrf.mxu0
      %2173 = vmatprep.mubr.f32.mxu0 0.0
      %2174 = vmatmul.mubr.f32.gmra.mxu0 %v1994
      %v2175 = vpop.f32.mrf.mxu0
      %v2176 = vadd.f32 0.0, %v2175
      %v2177 = vpop.f32.mrf.mxu0
      %2178 = vmatprep.mubr.f32.mxu0 0.0
      %2179 = vmatmul.mubr.f32.gmra.mxu0 %v1997
      %v2180 = vpop.f32.mrf.mxu0
      %v2181 = vadd.f32 0.0, %v2180
      %v2182 = vpop.f32.mrf.mxu0
      %2183 = vmatprep.mubr.f32.mxu0 0.0
      %2184 = vmatmul.mubr.f32.gmra.mxu0 %v2000
      %v2185 = vpop.f32.mrf.mxu0
      %v2186 = vadd.f32 0.0, %v2185
      %v2187 = vpop.f32.mrf.mxu0
      %2188 = vmatprep.mubr.f32.mxu0 0.0
      %2189 = vmatmul.mubr.f32.gmra.mxu0 %v2003
      %v2190 = vpop.f32.mrf.mxu0
      %v2191 = vadd.f32 0.0, %v2190
      %v2192 = vpop.f32.mrf.mxu0
      %2193 = vmatprep.mubr.f32.mxu0 0.0
      %2194 = vmatmul.mubr.f32.gmra.mxu0 %v2006
      %v2195 = vpop.f32.mrf.mxu0
      %v2196 = vadd.f32 0.0, %v2195
      %v2197 = vpop.f32.mrf.mxu0
      %2198 = vmatprep.mubr.f32.mxu0 0.0
      %2199 = vmatmul.mubr.f32.gmra.mxu0 %v2009
      %v2200 = vpop.f32.mrf.mxu0
      %v2201 = vadd.f32 0.0, %v2200
      %v2202 = vpop.f32.mrf.mxu0
      %2203 = vmatprep.mubr.f32.mxu0 0.0
      %2204 = vmatmul.mubr.f32.gmra.mxu0 %v2012
      %v2205 = vpop.f32.mrf.mxu0
      %v2206 = vadd.f32 0.0, %v2205
      %v2207 = vpop.f32.mrf.mxu0
      %2208 = vmatprep.mubr.f32.mxu0 0.0
      %2209 = vmatmul.mubr.f32.gmra.mxu0 %v2015
      %v2210 = vpop.f32.mrf.mxu0
      %v2211 = vadd.f32 0.0, %v2210
      %v2212 = vpop.f32.mrf.mxu0
      %2213 = vmatprep.mubr.f32.mxu0 0.0
      %2214 = vmatmul.mubr.f32.gmra.mxu0 %v2018
      %v2215 = vpop.f32.mrf.mxu0
      %v2216 = vadd.f32 0.0, %v2215
      %v2217 = vpop.f32.mrf.mxu0
      %2218 = vmatprep.mubr.f32.mxu0 0.0
      %2219 = vmatmul.mubr.f32.gmra.mxu0 %v2021
      %v2220 = vpop.f32.mrf.mxu0
      %v2221 = vadd.f32 0.0, %v2220
      %v2222 = vpop.f32.mrf.mxu0
      %2223 = vmatprep.mubr.f32.mxu0 0.0
      %2224 = vmatmul.mubr.f32.gmra.mxu0 %v2024
      %v2225 = vpop.f32.mrf.mxu0
      %v2226 = vadd.f32 0.0, %v2225
      %v2227 = vpop.f32.mrf.mxu0
      %2228 = vmatprep.mubr.f32.mxu0 0.0
      %2229 = vmatmul.mubr.f32.gmra.mxu0 %v2027
      %v2230 = vpop.f32.mrf.mxu0
      %v2231 = vadd.f32 0.0, %v2230
      %v2232 = vpop.f32.mrf.mxu0
      %2233 = vmatprep.mubr.f32.mxu0 0.0
      %2234 = vmatmul.mubr.f32.gmra.mxu0 %v2030
      %v2235 = vpop.f32.mrf.mxu0
      %v2236 = vadd.f32 0.0, %v2235
      %v2237 = vpop.f32.mrf.mxu0
      %2238 = vmatprep.mubr.f32.mxu0 0.0
      %2239 = vmatmul.mubr.f32.gmra.mxu0 %v2033
      %v2240 = vpop.f32.mrf.mxu0
      %v2241 = vadd.f32 0.0, %v2240
      %v2242 = vpop.f32.mrf.mxu0
      %2243 = vmatprep.mubr.f32.mxu0 0.0
      %2244 = vmatmul.mubr.f32.gmra.mxu0 %v2036
      %v2245 = vpop.f32.mrf.mxu0
      %v2246 = vadd.f32 0.0, %v2245
      %v2247 = vpop.f32.mrf.mxu0
      %2248 = vmatprep.mubr.f32.mxu0 0.0
      %2249 = vmatmul.mubr.f32.gmra.mxu0 %v2039
      %v2250 = vpop.f32.mrf.mxu0
      %v2251 = vadd.f32 0.0, %v2250
      %v2252 = vpop.f32.mrf.mxu0
      %2253 = vmatprep.mubr.f32.mxu0 0.0
      %2254 = vmatmul.mubr.f32.gmra.mxu0 %v2042
      %v2255 = vpop.f32.mrf.mxu0
      %v2256 = vadd.f32 0.0, %v2255
      %v2257 = vpop.f32.mrf.mxu0
      %2258 = vmatprep.mubr.f32.mxu0 0.0
      %2259 = vmatmul.mubr.f32.gmra.mxu0 %v2045
      %v2260 = vpop.f32.mrf.mxu0
      %v2261 = vadd.f32 0.0, %v2260
      %v2262 = vpop.f32.mrf.mxu0
      %2263 = vmatprep.mubr.f32.mxu0 0.0
      %2264 = vmatmul.mubr.f32.gmra.mxu0 %v2048
      %v2265 = vpop.f32.mrf.mxu0
      %v2266 = vadd.f32 0.0, %v2265
      %v2267 = vpop.f32.mrf.mxu0
      %2268 = vmatprep.mubr.f32.mxu0 0.0
      %2269 = vmatmul.mubr.f32.gmra.mxu0 %v2051
      %v2270 = vpop.f32.mrf.mxu0
      %v2271 = vadd.f32 0.0, %v2270
      %v2272 = vpop.f32.mrf.mxu0
      %2273 = vmatprep.mubr.f32.mxu0 0.0
      %2274 = vmatmul.mubr.f32.gmra.mxu0 %v2054
      %v2275 = vpop.f32.mrf.mxu0
      %v2276 = vadd.f32 0.0, %v2275
      %v2277 = vpop.f32.mrf.mxu0
      %2278 = vmatprep.mubr.f32.mxu0 0.0
      %2279 = vmatmul.mubr.f32.gmra.mxu0 %v2057
      %v2280 = vpop.f32.mrf.mxu0
      %v2281 = vadd.f32 0.0, %v2280
      %v2282 = vpop.f32.mrf.mxu0
      %2283 = vmatprep.mubr.f32.mxu0 0.0
      %2284 = vmatmul.mubr.f32.gmra.mxu0 %v2060
      %v2285 = vpop.f32.mrf.mxu0
      %v2286 = vadd.f32 0.0, %v2285
      %v2287 = vpop.f32.mrf.mxu0
      %2288 = vmatprep.mubr.f32.mxu0 0.0
      %2289 = vmatmul.mubr.f32.gmra.mxu0 %v2063
      %v2290 = vpop.f32.mrf.mxu0
      %v2291 = vadd.f32 0.0, %v2290
      %v2292 = vpop.f32.mrf.mxu0
      %2293 = vmatprep.mubr.f32.mxu0 0.0
      %2294 = vmatmul.mubr.f32.gmra.mxu0 %v2066
      %v2295 = vpop.f32.mrf.mxu0
      %v2296 = vadd.f32 0.0, %v2295
      %v2297 = vpop.f32.mrf.mxu0
      %2298 = vmatprep.mubr.f32.mxu0 0.0
      %2299 = vmatmul.mubr.f32.gmra.mxu0 %v2069
      %v2300 = vpop.f32.mrf.mxu0
      %v2301 = vadd.f32 0.0, %v2300
      %v2302 = vpop.f32.mrf.mxu0
      %2303 = vmatprep.mubr.f32.mxu0 0.0
      %2304 = vmatmul.mubr.f32.gmra.mxu0 %v2072
      %v2305 = vpop.f32.mrf.mxu0
      %v2306 = vadd.f32 0.0, %v2305
      %v2307 = vpop.f32.mrf.mxu0
      %2308 = vmatprep.mubr.f32.mxu0 0.0
      %2309 = vmatmul.mubr.f32.gmra.mxu0 %v2075
      %v2310 = vpop.f32.mrf.mxu0
      %v2311 = vadd.f32 0.0, %v2310
      %v2312 = vpop.f32.mrf.mxu0
      %2313 = vmatprep.mubr.f32.mxu0 0.0
      %2314 = vmatmul.mubr.f32.gmra.mxu0 %v2078
      %v2315 = vpop.f32.mrf.mxu0
      %v2316 = vadd.f32 0.0, %v2315
      %v2317 = vpop.f32.mrf.mxu0
      %2318 = vmatprep.mubr.f32.mxu0 0.0
      %2319 = vmatmul.mubr.f32.gmra.mxu0 %v2081
      %v2320 = vpop.f32.mrf.mxu0
      %v2321 = vadd.f32 0.0, %v2320
      %v2322 = vpop.f32.mrf.mxu0
      %2323 = vmatprep.mubr.f32.mxu0 0.0
      %2324 = vmatmul.mubr.f32.gmra.mxu0 %v2084
      %v2325 = vpop.f32.mrf.mxu0
      %v2326 = vadd.f32 0.0, %v2325
      %v2327 = vpop.f32.mrf.mxu0
      %2328 = vmatprep.mubr.f32.mxu0 0.0
      %2329 = vmatmul.mubr.f32.gmra.mxu0 %v2087
      %v2330 = vpop.f32.mrf.mxu0
      %v2331 = vadd.f32 0.0, %v2330
      %v2332 = vpop.f32.mrf.mxu0
      %2333 = vmatprep.mubr.f32.mxu0 0.0
      %2334 = vmatmul.mubr.f32.gmra.mxu0 %v2090
      %v2335 = vpop.f32.mrf.mxu0
      %v2336 = vadd.f32 0.0, %v2335
      %v2337 = vpop.f32.mrf.mxu0
      %2338 = vmatprep.mubr.f32.mxu0 0.0
      %2339 = vmatmul.mubr.f32.gmra.mxu0 %v2093
      %v2340 = vpop.f32.mrf.mxu0
      %v2341 = vadd.f32 0.0, %v2340
      %v2342 = vpop.f32.mrf.mxu0
      %2343 = vdwg.mxu0
      %v2344 = vmax.f32 %v2166, 0.0
      %v2345 = vmax.f32 %v2171, 0.0
      %v2346 = vmax.f32 %v2176, 0.0
      %v2347 = vmax.f32 %v2181, 0.0
      %v2348 = vmax.f32 %v2186, 0.0
      %v2349 = vmax.f32 %v2191, 0.0
      %v2350 = vmax.f32 %v2196, 0.0
      %v2351 = vmax.f32 %v2201, 0.0
      %v2352 = vmax.f32 %v2206, 0.0
      %v2353 = vmax.f32 %v2211, 0.0
      %v2354 = vmax.f32 %v2216, 0.0
      %v2355 = vmax.f32 %v2221, 0.0
      %v2356 = vmax.f32 %v2226, 0.0
      %v2357 = vmax.f32 %v2231, 0.0
      %v2358 = vmax.f32 %v2236, 0.0
      %v2359 = vmax.f32 %v2241, 0.0
      %v2360 = vmax.f32 %v2246, 0.0
      %v2361 = vmax.f32 %v2251, 0.0
      %v2362 = vmax.f32 %v2256, 0.0
      %v2363 = vmax.f32 %v2261, 0.0
      %v2364 = vmax.f32 %v2266, 0.0
      %v2365 = vmax.f32 %v2271, 0.0
      %v2366 = vmax.f32 %v2276, 0.0
      %v2367 = vmax.f32 %v2281, 0.0
      %v2368 = vmax.f32 %v2286, 0.0
      %v2369 = vmax.f32 %v2291, 0.0
      %v2370 = vmax.f32 %v2296, 0.0
      %v2371 = vmax.f32 %v2301, 0.0
      %v2372 = vmax.f32 %v2306, 0.0
      %v2373 = vmax.f32 %v2311, 0.0
      %v2374 = vmax.f32 %v2316, 0.0
      %v2375 = vmax.f32 %v2321, 0.0
      %v2376 = vmax.f32 %v2326, 0.0
      %v2377 = vmax.f32 %v2331, 0.0
      %v2378 = vmax.f32 %v2336, 0.0
      %v2379 = vmax.f32 %v2341, 0.0
      %v2380 = vlaneseq
      %v2381 = vshrl.u32 %v2380, 7
      %v2382 = vadd.s32 %v2381, 8
      %v2383 = vadd.s32 %v2381, 16
      %v2384 = vadd.s32 %v2381, 24
      %v2385 = vadd.s32 %v2381, 32
      %v2386 = vadd.s32 %v2381, 40
      %v2387 = vadd.s32 %v2381, 48
      %v2388 = vadd.s32 %v2381, 56
      %v2389 = vadd.s32 %v2381, 64
      %v2390 = vadd.s32 %v2381, 72
      %v2391 = vadd.s32 %v2381, 80
      %v2392 = vadd.s32 %v2381, 88
      %v2393 = vadd.s32 %v2381, 96
      %v2394 = vadd.s32 %v2381, 104
      %v2395 = vadd.s32 %v2381, 112
      %v2396 = vadd.s32 %v2381, 120
      %v2397 = vadd.s32 %v2381, 128
      %v2398 = vadd.s32 %v2381, 136
      %v2399 = vadd.s32 %v2381, 144
      %v2400 = vadd.s32 %v2381, 152
      %v2401 = vadd.s32 %v2381, 160
      %v2402 = vadd.s32 %v2381, 168
      %v2403 = vadd.s32 %v2381, 176
      %v2404 = vadd.s32 %v2381, 184
      %v2405 = vadd.s32 %v2381, 192
      %v2406 = vadd.s32 %v2381, 200
      %v2407 = vadd.s32 %v2381, 208
      %v2408 = vadd.s32 %v2381, 216
      %v2409 = vadd.s32 %v2381, 224
      %v2410 = vadd.s32 %v2381, 232
      %v2411 = vadd.s32 %v2381, 240
      %v2412 = vadd.s32 %v2381, 248
      %v2413 = vadd.s32 %v2381, 256
      %v2414 = vadd.s32 %v2381, 264
      %v2415 = vadd.s32 %v2381, 272
      %v2416 = vadd.s32 %v2381, 280
      %p2417 = scmp.eq.s32.totalorder %s19, 0
      %s2418 = scalar_select %p2417, 16, 0
      %s2419 = smul.u32 %s19, 16
      %s2420 = ssub.s32 17, %s2419
      %s2421 = smul.u32 %s2420, 16
      %v2422 = vstv %s2418
      %vm2423 = vcmp.ge.s32.totalorder %v2381, %v2422
      %vm2424 = vcmp.ge.s32.totalorder %v2382, %v2422
      %vm2425 = vcmp.ge.s32.totalorder %v2383, %v2422
      %vm2426 = vcmp.ge.s32.totalorder %v2384, %v2422
      %vm2427 = vcmp.ge.s32.totalorder %v2385, %v2422
      %vm2428 = vcmp.ge.s32.totalorder %v2386, %v2422
      %vm2429 = vcmp.ge.s32.totalorder %v2387, %v2422
      %vm2430 = vcmp.ge.s32.totalorder %v2388, %v2422
      %vm2431 = vcmp.ge.s32.totalorder %v2389, %v2422
      %vm2432 = vcmp.ge.s32.totalorder %v2390, %v2422
      %vm2433 = vcmp.ge.s32.totalorder %v2391, %v2422
      %vm2434 = vcmp.ge.s32.totalorder %v2392, %v2422
      %vm2435 = vcmp.ge.s32.totalorder %v2393, %v2422
      %vm2436 = vcmp.ge.s32.totalorder %v2394, %v2422
      %vm2437 = vcmp.ge.s32.totalorder %v2395, %v2422
      %vm2438 = vcmp.ge.s32.totalorder %v2396, %v2422
      %vm2439 = vcmp.ge.s32.totalorder %v2397, %v2422
      %vm2440 = vcmp.ge.s32.totalorder %v2398, %v2422
      %vm2441 = vcmp.ge.s32.totalorder %v2399, %v2422
      %vm2442 = vcmp.ge.s32.totalorder %v2400, %v2422
      %vm2443 = vcmp.ge.s32.totalorder %v2401, %v2422
      %vm2444 = vcmp.ge.s32.totalorder %v2402, %v2422
      %vm2445 = vcmp.ge.s32.totalorder %v2403, %v2422
      %vm2446 = vcmp.ge.s32.totalorder %v2404, %v2422
      %vm2447 = vcmp.ge.s32.totalorder %v2405, %v2422
      %vm2448 = vcmp.ge.s32.totalorder %v2406, %v2422
      %vm2449 = vcmp.ge.s32.totalorder %v2407, %v2422
      %vm2450 = vcmp.ge.s32.totalorder %v2408, %v2422
      %vm2451 = vcmp.ge.s32.totalorder %v2409, %v2422
      %vm2452 = vcmp.ge.s32.totalorder %v2410, %v2422
      %vm2453 = vcmp.ge.s32.totalorder %v2411, %v2422
      %vm2454 = vcmp.ge.s32.totalorder %v2412, %v2422
      %vm2455 = vcmp.ge.s32.totalorder %v2413, %v2422
      %vm2456 = vcmp.ge.s32.totalorder %v2414, %v2422
      %vm2457 = vcmp.ge.s32.totalorder %v2415, %v2422
      %vm2458 = vcmp.ge.s32.totalorder %v2416, %v2422
      %v2459 = vstv %s2421
      %vm2460 = vcmp.lt.s32.totalorder %v2381, %v2459
      %vm2461 = vcmp.lt.s32.totalorder %v2382, %v2459
      %vm2462 = vcmp.lt.s32.totalorder %v2383, %v2459
      %vm2463 = vcmp.lt.s32.totalorder %v2384, %v2459
      %vm2464 = vcmp.lt.s32.totalorder %v2385, %v2459
      %vm2465 = vcmp.lt.s32.totalorder %v2386, %v2459
      %vm2466 = vcmp.lt.s32.totalorder %v2387, %v2459
      %vm2467 = vcmp.lt.s32.totalorder %v2388, %v2459
      %vm2468 = vcmp.lt.s32.totalorder %v2389, %v2459
      %vm2469 = vcmp.lt.s32.totalorder %v2390, %v2459
      %vm2470 = vcmp.lt.s32.totalorder %v2391, %v2459
      %vm2471 = vcmp.lt.s32.totalorder %v2392, %v2459
      %vm2472 = vcmp.lt.s32.totalorder %v2393, %v2459
      %vm2473 = vcmp.lt.s32.totalorder %v2394, %v2459
      %vm2474 = vcmp.lt.s32.totalorder %v2395, %v2459
      %vm2475 = vcmp.lt.s32.totalorder %v2396, %v2459
      %vm2476 = vcmp.lt.s32.totalorder %v2397, %v2459
      %vm2477 = vcmp.lt.s32.totalorder %v2398, %v2459
      %vm2478 = vcmp.lt.s32.totalorder %v2399, %v2459
      %vm2479 = vcmp.lt.s32.totalorder %v2400, %v2459
      %vm2480 = vcmp.lt.s32.totalorder %v2401, %v2459
      %vm2481 = vcmp.lt.s32.totalorder %v2402, %v2459
      %vm2482 = vcmp.lt.s32.totalorder %v2403, %v2459
      %vm2483 = vcmp.lt.s32.totalorder %v2404, %v2459
      %vm2484 = vcmp.lt.s32.totalorder %v2405, %v2459
      %vm2485 = vcmp.lt.s32.totalorder %v2406, %v2459
      %vm2486 = vcmp.lt.s32.totalorder %v2407, %v2459
      %vm2487 = vcmp.lt.s32.totalorder %v2408, %v2459
      %vm2488 = vcmp.lt.s32.totalorder %v2409, %v2459
      %vm2489 = vcmp.lt.s32.totalorder %v2410, %v2459
      %vm2490 = vcmp.lt.s32.totalorder %v2411, %v2459
      %vm2491 = vcmp.lt.s32.totalorder %v2412, %v2459
      %vm2492 = vcmp.lt.s32.totalorder %v2413, %v2459
      %vm2493 = vcmp.lt.s32.totalorder %v2414, %v2459
      %vm2494 = vcmp.lt.s32.totalorder %v2415, %v2459
      %vm2495 = vcmp.lt.s32.totalorder %v2416, %v2459
      %vm2496 = vmand %vm2423, %vm2460
      %vm2497 = vmand %vm2424, %vm2461
      %vm2498 = vmand %vm2425, %vm2462
      %vm2499 = vmand %vm2426, %vm2463
      %vm2500 = vmand %vm2427, %vm2464
      %vm2501 = vmand %vm2428, %vm2465
      %vm2502 = vmand %vm2429, %vm2466
      %vm2503 = vmand %vm2430, %vm2467
      %vm2504 = vmand %vm2431, %vm2468
      %vm2505 = vmand %vm2432, %vm2469
      %vm2506 = vmand %vm2433, %vm2470
      %vm2507 = vmand %vm2434, %vm2471
      %vm2508 = vmand %vm2435, %vm2472
      %vm2509 = vmand %vm2436, %vm2473
      %vm2510 = vmand %vm2437, %vm2474
      %vm2511 = vmand %vm2438, %vm2475
      %vm2512 = vmand %vm2439, %vm2476
      %vm2513 = vmand %vm2440, %vm2477
      %vm2514 = vmand %vm2441, %vm2478
      %vm2515 = vmand %vm2442, %vm2479
      %vm2516 = vmand %vm2443, %vm2480
      %vm2517 = vmand %vm2444, %vm2481
      %vm2518 = vmand %vm2445, %vm2482
      %vm2519 = vmand %vm2446, %vm2483
      %vm2520 = vmand %vm2447, %vm2484
      %vm2521 = vmand %vm2448, %vm2485
      %vm2522 = vmand %vm2449, %vm2486
      %vm2523 = vmand %vm2450, %vm2487
      %vm2524 = vmand %vm2451, %vm2488
      %vm2525 = vmand %vm2452, %vm2489
      %vm2526 = vmand %vm2453, %vm2490
      %vm2527 = vmand %vm2454, %vm2491
      %vm2528 = vmand %vm2455, %vm2492
      %vm2529 = vmand %vm2456, %vm2493
      %vm2530 = vmand %vm2457, %vm2494
      %vm2531 = vmand %vm2458, %vm2495
      %v2532 = vsel %vm2496, 1, 0
      %v2533 = vsel %vm2497, 1, 0
      %v2534 = vsel %vm2498, 1, 0
      %v2535 = vsel %vm2499, 1, 0
      %v2536 = vsel %vm2500, 1, 0
      %v2537 = vsel %vm2501, 1, 0
      %v2538 = vsel %vm2502, 1, 0
      %v2539 = vsel %vm2503, 1, 0
      %v2540 = vsel %vm2504, 1, 0
      %v2541 = vsel %vm2505, 1, 0
      %v2542 = vsel %vm2506, 1, 0
      %v2543 = vsel %vm2507, 1, 0
      %v2544 = vsel %vm2508, 1, 0
      %v2545 = vsel %vm2509, 1, 0
      %v2546 = vsel %vm2510, 1, 0
      %v2547 = vsel %vm2511, 1, 0
      %v2548 = vsel %vm2512, 1, 0
      %v2549 = vsel %vm2513, 1, 0
      %v2550 = vsel %vm2514, 1, 0
      %v2551 = vsel %vm2515, 1, 0
      %v2552 = vsel %vm2516, 1, 0
      %v2553 = vsel %vm2517, 1, 0
      %v2554 = vsel %vm2518, 1, 0
      %v2555 = vsel %vm2519, 1, 0
      %v2556 = vsel %vm2520, 1, 0
      %v2557 = vsel %vm2521, 1, 0
      %v2558 = vsel %vm2522, 1, 0
      %v2559 = vsel %vm2523, 1, 0
      %v2560 = vsel %vm2524, 1, 0
      %v2561 = vsel %vm2525, 1, 0
      %v2562 = vsel %vm2526, 1, 0
      %v2563 = vsel %vm2527, 1, 0
      %v2564 = vsel %vm2528, 1, 0
      %v2565 = vsel %vm2529, 1, 0
      %v2566 = vsel %vm2530, 1, 0
      %v2567 = vsel %vm2531, 1, 0
      %vm2568 = vcmp.eq.s32.totalorder %v2532, 1
      %vm2569 = vcmp.eq.s32.totalorder %v2533, 1
      %vm2570 = vcmp.eq.s32.totalorder %v2534, 1
      %vm2571 = vcmp.eq.s32.totalorder %v2535, 1
      %vm2572 = vcmp.eq.s32.totalorder %v2536, 1
      %vm2573 = vcmp.eq.s32.totalorder %v2537, 1
      %vm2574 = vcmp.eq.s32.totalorder %v2538, 1
      %vm2575 = vcmp.eq.s32.totalorder %v2539, 1
      %vm2576 = vcmp.eq.s32.totalorder %v2540, 1
      %vm2577 = vcmp.eq.s32.totalorder %v2541, 1
      %vm2578 = vcmp.eq.s32.totalorder %v2542, 1
      %vm2579 = vcmp.eq.s32.totalorder %v2543, 1
      %vm2580 = vcmp.eq.s32.totalorder %v2544, 1
      %vm2581 = vcmp.eq.s32.totalorder %v2545, 1
      %vm2582 = vcmp.eq.s32.totalorder %v2546, 1
      %vm2583 = vcmp.eq.s32.totalorder %v2547, 1
      %vm2584 = vcmp.eq.s32.totalorder %v2548, 1
      %vm2585 = vcmp.eq.s32.totalorder %v2549, 1
      %vm2586 = vcmp.eq.s32.totalorder %v2550, 1
      %vm2587 = vcmp.eq.s32.totalorder %v2551, 1
      %vm2588 = vcmp.eq.s32.totalorder %v2552, 1
      %vm2589 = vcmp.eq.s32.totalorder %v2553, 1
      %vm2590 = vcmp.eq.s32.totalorder %v2554, 1
      %vm2591 = vcmp.eq.s32.totalorder %v2555, 1
      %vm2592 = vcmp.eq.s32.totalorder %v2556, 1
      %vm2593 = vcmp.eq.s32.totalorder %v2557, 1
      %vm2594 = vcmp.eq.s32.totalorder %v2558, 1
      %vm2595 = vcmp.eq.s32.totalorder %v2559, 1
      %vm2596 = vcmp.eq.s32.totalorder %v2560, 1
      %vm2597 = vcmp.eq.s32.totalorder %v2561, 1
      %vm2598 = vcmp.eq.s32.totalorder %v2562, 1
      %vm2599 = vcmp.eq.s32.totalorder %v2563, 1
      %vm2600 = vcmp.eq.s32.totalorder %v2564, 1
      %vm2601 = vcmp.eq.s32.totalorder %v2565, 1
      %vm2602 = vcmp.eq.s32.totalorder %v2566, 1
      %vm2603 = vcmp.eq.s32.totalorder %v2567, 1
      %v2604 = vsel %vm2568, %v2344, 0.0
      %v2605 = vsel %vm2569, %v2345, 0.0
      %v2606 = vsel %vm2570, %v2346, 0.0
      %v2607 = vsel %vm2571, %v2347, 0.0
      %v2608 = vsel %vm2572, %v2348, 0.0
      %v2609 = vsel %vm2573, %v2349, 0.0
      %v2610 = vsel %vm2574, %v2350, 0.0
      %v2611 = vsel %vm2575, %v2351, 0.0
      %v2612 = vsel %vm2576, %v2352, 0.0
      %v2613 = vsel %vm2577, %v2353, 0.0
      %v2614 = vsel %vm2578, %v2354, 0.0
      %v2615 = vsel %vm2579, %v2355, 0.0
      %v2616 = vsel %vm2580, %v2356, 0.0
      %v2617 = vsel %vm2581, %v2357, 0.0
      %v2618 = vsel %vm2582, %v2358, 0.0
      %v2619 = vsel %vm2583, %v2359, 0.0
      %v2620 = vsel %vm2584, %v2360, 0.0
      %v2621 = vsel %vm2585, %v2361, 0.0
      %v2622 = vsel %vm2586, %v2362, 0.0
      %v2623 = vsel %vm2587, %v2363, 0.0
      %v2624 = vsel %vm2588, %v2364, 0.0
      %v2625 = vsel %vm2589, %v2365, 0.0
      %v2626 = vsel %vm2590, %v2366, 0.0
      %v2627 = vsel %vm2591, %v2367, 0.0
      %v2628 = vsel %vm2592, %v2368, 0.0
      %v2629 = vsel %vm2593, %v2369, 0.0
      %v2630 = vsel %vm2594, %v2370, 0.0
      %v2631 = vsel %vm2595, %v2371, 0.0
      %v2632 = vsel %vm2596, %v2372, 0.0
      %v2633 = vsel %vm2597, %v2373, 0.0
      %v2634 = vsel %vm2598, %v2374, 0.0
      %v2635 = vsel %vm2599, %v2375, 0.0
      %v2636 = vsel %vm2600, %v2376, 0.0
      %v2637 = vsel %vm2601, %v2377, 0.0
      %v2638 = vsel %vm2602, %v2378, 0.0
      %v2639 = vsel %vm2603, %v2379, 0.0
      %v2640 = vld [vmem:[%s2] sm:$0xff]
      %v2641 = vld [vmem:[%s2 + $0x8] sm:$0xff]
      %v2642 = vld [vmem:[%s2 + $0x10] sm:$0xff]
      %v2643 = vld [vmem:[%s2 + $0x18] sm:$0xff]
      %v2644 = vld [vmem:[%s2 + $0x20] sm:$0xff]
      %v2645 = vld [vmem:[%s2 + $0x28] sm:$0xff]
      %v2646 = vld [vmem:[%s2 + $0x30] sm:$0xff]
      %v2647 = vld [vmem:[%s2 + $0x38] sm:$0xff]
      %vm2648 = vcmask 523264
      %v2650 = vsel %vm2648, %v2604, 0
      %v2653 = vsel %vm2648, %v2605, 0
      %v2656 = vsel %vm2648, %v2606, 0
      %v2659 = vsel %vm2648, %v2607, 0
      %v2662 = vsel %vm2648, %v2608, 0
      %v2665 = vsel %vm2648, %v2609, 0
      %v2668 = vsel %vm2648, %v2610, 0
      %v2671 = vsel %vm2648, %v2611, 0
      %v2674 = vsel %vm2648, %v2612, 0
      %v2677 = vsel %vm2648, %v2613, 0
      %v2680 = vsel %vm2648, %v2614, 0
      %v2683 = vsel %vm2648, %v2615, 0
      %v2686 = vsel %vm2648, %v2616, 0
      %v2689 = vsel %vm2648, %v2617, 0
      %v2692 = vsel %vm2648, %v2618, 0
      %v2695 = vsel %vm2648, %v2619, 0
      %v2698 = vsel %vm2648, %v2620, 0
      %v2701 = vsel %vm2648, %v2621, 0
      %v2704 = vsel %vm2648, %v2622, 0
      %v2707 = vsel %vm2648, %v2623, 0
      %v2710 = vsel %vm2648, %v2624, 0
      %v2713 = vsel %vm2648, %v2625, 0
      %v2716 = vsel %vm2648, %v2626, 0
      %v2719 = vsel %vm2648, %v2627, 0
      %v2722 = vsel %vm2648, %v2628, 0
      %v2725 = vsel %vm2648, %v2629, 0
      %v2728 = vsel %vm2648, %v2630, 0
      %v2731 = vsel %vm2648, %v2631, 0
      %v2734 = vsel %vm2648, %v2632, 0
      %v2737 = vsel %vm2648, %v2633, 0
      %v2740 = vsel %vm2648, %v2634, 0
      %v2743 = vsel %vm2648, %v2635, 0
      %v2746 = vsel %vm2648, %v2636, 0
      %v2749 = vsel %vm2648, %v2637, 0
      %v2752 = vsel %vm2648, %v2638, 0
      %v2755 = vsel %vm2648, %v2639, 0
      %2757 = vmatprep.subr.mxu0 0.0
      %2758 = vmatpush1.msra.mxu0 0.0
      %2759 = vmatprep.subr.mxu0 0.0
      %2760 = vmatpush1.msra.mxu0 0.0
      %2761 = vmatprep.subr.mxu0 0.0
      %2762 = vmatpush1.msra.mxu0 0.0
      %2763 = vmatprep.subr.mxu0 0.0
      %2764 = vmatpush1.msra.mxu0 0.0
      %2765 = vmatprep.subr.mxu0 0.0
      %2766 = vmatpush1.msra.mxu0 0.0
      %2767 = vmatprep.subr.mxu0 0.0
      %2768 = vmatpush1.msra.mxu0 0.0
      %2769 = vmatprep.subr.mxu0 0.0
      %2770 = vmatpush1.msra.mxu0 0.0
      %2771 = vmatprep.subr.mxu0 0.0
      %2772 = vmatpush1.msra.mxu0 0.0
      %2773 = vmatprep.subr.mxu0 0.0
      %2774 = vmatpush1.msra.mxu0 %v2647
      %2775 = vmatprep.subr.mxu0 0.0
      %2776 = vmatpush1.msra.mxu0 %v2646
      %2777 = vmatprep.subr.mxu0 0.0
      %2778 = vmatpush1.msra.mxu0 %v2645
      %2779 = vmatprep.subr.mxu0 0.0
      %2780 = vmatpush1.msra.mxu0 %v2644
      %2781 = vmatprep.subr.mxu0 0.0
      %2782 = vmatpush1.msra.mxu0 %v2643
      %2783 = vmatprep.subr.mxu0 0.0
      %2784 = vmatpush1.msra.mxu0 %v2642
      %2785 = vmatprep.subr.mxu0 0.0
      %2786 = vmatpush1.msra.mxu0 %v2641
      %2787 = vmatprep.subr.mxu0 0.0
      %2788 = vmatpush1.msra.mxu0 %v2640
      %2789 = vmatprep.subr.mxu0 0.0
      %2790 = vmatpush2.msra.mxu0 0.0
      %2791 = vmatprep.subr.mxu0 0.0
      %2792 = vmatpush2.msra.mxu0 0.0
      %2793 = vmatprep.subr.mxu0 0.0
      %2794 = vmatpush2.msra.mxu0 0.0
      %2795 = vmatprep.subr.mxu0 0.0
      %2796 = vmatpush2.msra.mxu0 0.0
      %2797 = vmatprep.subr.mxu0 0.0
      %2798 = vmatpush2.msra.mxu0 0.0
      %2799 = vmatprep.subr.mxu0 0.0
      %2800 = vmatpush2.msra.mxu0 0.0
      %2801 = vmatprep.subr.mxu0 0.0
      %2802 = vmatpush2.msra.mxu0 0.0
      %2803 = vmatprep.subr.mxu0 0.0
      %2804 = vmatpush2.msra.mxu0 0.0
      %2805 = vmatprep.subr.mxu0 0.0
      %2806 = vmatpush2.msra.mxu0 0.0
      %2807 = vmatprep.subr.mxu0 0.0
      %2808 = vmatpush2.msra.mxu0 0.0
      %2809 = vmatprep.subr.mxu0 0.0
      %2810 = vmatpush2.msra.mxu0 0.0
      %2811 = vmatprep.subr.mxu0 0.0
      %2812 = vmatpush2.msra.mxu0 0.0
      %2813 = vmatprep.subr.mxu0 0.0
      %2814 = vmatpush2.msra.mxu0 0.0
      %2815 = vmatprep.subr.mxu0 0.0
      %2816 = vmatpush2.msra.mxu0 0.0
      %2817 = vmatprep.subr.mxu0 0.0
      %2818 = vmatpush2.msra.mxu0 0.0
      %2819 = vmatprep.subr.mxu0 0.0
      %2820 = vmatpush2.msra.mxu0 0.0
      %2821 = vmatprep.mubr.f32.mxu0 0.0
      %2822 = vmatmul.mubr.f32.gmra.mxu0 %v2650
      %v2823 = vpop.f32.mrf.mxu0
      %v2824 = vadd.f32 0.0, %v2823
      %v2825 = vpop.f32.mrf.mxu0
      %2826 = vmatprep.mubr.f32.mxu0 0.0
      %2827 = vmatmul.mubr.f32.gmra.mxu0 %v2653
      %v2828 = vpop.f32.mrf.mxu0
      %v2829 = vadd.f32 0.0, %v2828
      %v2830 = vpop.f32.mrf.mxu0
      %2831 = vmatprep.mubr.f32.mxu0 0.0
      %2832 = vmatmul.mubr.f32.gmra.mxu0 %v2656
      %v2833 = vpop.f32.mrf.mxu0
      %v2834 = vadd.f32 0.0, %v2833
      %v2835 = vpop.f32.mrf.mxu0
      %2836 = vmatprep.mubr.f32.mxu0 0.0
      %2837 = vmatmul.mubr.f32.gmra.mxu0 %v2659
      %v2838 = vpop.f32.mrf.mxu0
      %v2839 = vadd.f32 0.0, %v2838
      %v2840 = vpop.f32.mrf.mxu0
      %2841 = vmatprep.mubr.f32.mxu0 0.0
      %2842 = vmatmul.mubr.f32.gmra.mxu0 %v2662
      %v2843 = vpop.f32.mrf.mxu0
      %v2844 = vadd.f32 0.0, %v2843
      %v2845 = vpop.f32.mrf.mxu0
      %2846 = vmatprep.mubr.f32.mxu0 0.0
      %2847 = vmatmul.mubr.f32.gmra.mxu0 %v2665
      %v2848 = vpop.f32.mrf.mxu0
      %v2849 = vadd.f32 0.0, %v2848
      %v2850 = vpop.f32.mrf.mxu0
      %2851 = vmatprep.mubr.f32.mxu0 0.0
      %2852 = vmatmul.mubr.f32.gmra.mxu0 %v2668
      %v2853 = vpop.f32.mrf.mxu0
      %v2854 = vadd.f32 0.0, %v2853
      %v2855 = vpop.f32.mrf.mxu0
      %2856 = vmatprep.mubr.f32.mxu0 0.0
      %2857 = vmatmul.mubr.f32.gmra.mxu0 %v2671
      %v2858 = vpop.f32.mrf.mxu0
      %v2859 = vadd.f32 0.0, %v2858
      %v2860 = vpop.f32.mrf.mxu0
      %2861 = vmatprep.mubr.f32.mxu0 0.0
      %2862 = vmatmul.mubr.f32.gmra.mxu0 %v2674
      %v2863 = vpop.f32.mrf.mxu0
      %v2864 = vadd.f32 0.0, %v2863
      %v2865 = vpop.f32.mrf.mxu0
      %2866 = vmatprep.mubr.f32.mxu0 0.0
      %2867 = vmatmul.mubr.f32.gmra.mxu0 %v2677
      %v2868 = vpop.f32.mrf.mxu0
      %v2869 = vadd.f32 0.0, %v2868
      %v2870 = vpop.f32.mrf.mxu0
      %2871 = vmatprep.mubr.f32.mxu0 0.0
      %2872 = vmatmul.mubr.f32.gmra.mxu0 %v2680
      %v2873 = vpop.f32.mrf.mxu0
      %v2874 = vadd.f32 0.0, %v2873
      %v2875 = vpop.f32.mrf.mxu0
      %2876 = vmatprep.mubr.f32.mxu0 0.0
      %2877 = vmatmul.mubr.f32.gmra.mxu0 %v2683
      %v2878 = vpop.f32.mrf.mxu0
      %v2879 = vadd.f32 0.0, %v2878
      %v2880 = vpop.f32.mrf.mxu0
      %2881 = vmatprep.mubr.f32.mxu0 0.0
      %2882 = vmatmul.mubr.f32.gmra.mxu0 %v2686
      %v2883 = vpop.f32.mrf.mxu0
      %v2884 = vadd.f32 0.0, %v2883
      %v2885 = vpop.f32.mrf.mxu0
      %2886 = vmatprep.mubr.f32.mxu0 0.0
      %2887 = vmatmul.mubr.f32.gmra.mxu0 %v2689
      %v2888 = vpop.f32.mrf.mxu0
      %v2889 = vadd.f32 0.0, %v2888
      %v2890 = vpop.f32.mrf.mxu0
      %2891 = vmatprep.mubr.f32.mxu0 0.0
      %2892 = vmatmul.mubr.f32.gmra.mxu0 %v2692
      %v2893 = vpop.f32.mrf.mxu0
      %v2894 = vadd.f32 0.0, %v2893
      %v2895 = vpop.f32.mrf.mxu0
      %2896 = vmatprep.mubr.f32.mxu0 0.0
      %2897 = vmatmul.mubr.f32.gmra.mxu0 %v2695
      %v2898 = vpop.f32.mrf.mxu0
      %v2899 = vadd.f32 0.0, %v2898
      %v2900 = vpop.f32.mrf.mxu0
      %2901 = vmatprep.mubr.f32.mxu0 0.0
      %2902 = vmatmul.mubr.f32.gmra.mxu0 %v2698
      %v2903 = vpop.f32.mrf.mxu0
      %v2904 = vadd.f32 0.0, %v2903
      %v2905 = vpop.f32.mrf.mxu0
      %2906 = vmatprep.mubr.f32.mxu0 0.0
      %2907 = vmatmul.mubr.f32.gmra.mxu0 %v2701
      %v2908 = vpop.f32.mrf.mxu0
      %v2909 = vadd.f32 0.0, %v2908
      %v2910 = vpop.f32.mrf.mxu0
      %2911 = vmatprep.mubr.f32.mxu0 0.0
      %2912 = vmatmul.mubr.f32.gmra.mxu0 %v2704
      %v2913 = vpop.f32.mrf.mxu0
      %v2914 = vadd.f32 0.0, %v2913
      %v2915 = vpop.f32.mrf.mxu0
      %2916 = vmatprep.mubr.f32.mxu0 0.0
      %2917 = vmatmul.mubr.f32.gmra.mxu0 %v2707
      %v2918 = vpop.f32.mrf.mxu0
      %v2919 = vadd.f32 0.0, %v2918
      %v2920 = vpop.f32.mrf.mxu0
      %2921 = vmatprep.mubr.f32.mxu0 0.0
      %2922 = vmatmul.mubr.f32.gmra.mxu0 %v2710
      %v2923 = vpop.f32.mrf.mxu0
      %v2924 = vadd.f32 0.0, %v2923
      %v2925 = vpop.f32.mrf.mxu0
      %2926 = vmatprep.mubr.f32.mxu0 0.0
      %2927 = vmatmul.mubr.f32.gmra.mxu0 %v2713
      %v2928 = vpop.f32.mrf.mxu0
      %v2929 = vadd.f32 0.0, %v2928
      %v2930 = vpop.f32.mrf.mxu0
      %2931 = vmatprep.mubr.f32.mxu0 0.0
      %2932 = vmatmul.mubr.f32.gmra.mxu0 %v2716
      %v2933 = vpop.f32.mrf.mxu0
      %v2934 = vadd.f32 0.0, %v2933
      %v2935 = vpop.f32.mrf.mxu0
      %2936 = vmatprep.mubr.f32.mxu0 0.0
      %2937 = vmatmul.mubr.f32.gmra.mxu0 %v2719
      %v2938 = vpop.f32.mrf.mxu0
      %v2939 = vadd.f32 0.0, %v2938
      %v2940 = vpop.f32.mrf.mxu0
      %2941 = vmatprep.mubr.f32.mxu0 0.0
      %2942 = vmatmul.mubr.f32.gmra.mxu0 %v2722
      %v2943 = vpop.f32.mrf.mxu0
      %v2944 = vadd.f32 0.0, %v2943
      %v2945 = vpop.f32.mrf.mxu0
      %2946 = vmatprep.mubr.f32.mxu0 0.0
      %2947 = vmatmul.mubr.f32.gmra.mxu0 %v2725
      %v2948 = vpop.f32.mrf.mxu0
      %v2949 = vadd.f32 0.0, %v2948
      %v2950 = vpop.f32.mrf.mxu0
      %2951 = vmatprep.mubr.f32.mxu0 0.0
      %2952 = vmatmul.mubr.f32.gmra.mxu0 %v2728
      %v2953 = vpop.f32.mrf.mxu0
      %v2954 = vadd.f32 0.0, %v2953
      %v2955 = vpop.f32.mrf.mxu0
      %2956 = vmatprep.mubr.f32.mxu0 0.0
      %2957 = vmatmul.mubr.f32.gmra.mxu0 %v2731
      %v2958 = vpop.f32.mrf.mxu0
      %v2959 = vadd.f32 0.0, %v2958
      %v2960 = vpop.f32.mrf.mxu0
      %2961 = vmatprep.mubr.f32.mxu0 0.0
      %2962 = vmatmul.mubr.f32.gmra.mxu0 %v2734
      %v2963 = vpop.f32.mrf.mxu0
      %v2964 = vadd.f32 0.0, %v2963
      %v2965 = vpop.f32.mrf.mxu0
      %2966 = vmatprep.mubr.f32.mxu0 0.0
      %2967 = vmatmul.mubr.f32.gmra.mxu0 %v2737
      %v2968 = vpop.f32.mrf.mxu0
      %v2969 = vadd.f32 0.0, %v2968
      %v2970 = vpop.f32.mrf.mxu0
      %2971 = vmatprep.mubr.f32.mxu0 0.0
      %2972 = vmatmul.mubr.f32.gmra.mxu0 %v2740
      %v2973 = vpop.f32.mrf.mxu0
      %v2974 = vadd.f32 0.0, %v2973
      %v2975 = vpop.f32.mrf.mxu0
      %2976 = vmatprep.mubr.f32.mxu0 0.0
      %2977 = vmatmul.mubr.f32.gmra.mxu0 %v2743
      %v2978 = vpop.f32.mrf.mxu0
      %v2979 = vadd.f32 0.0, %v2978
      %v2980 = vpop.f32.mrf.mxu0
      %2981 = vmatprep.mubr.f32.mxu0 0.0
      %2982 = vmatmul.mubr.f32.gmra.mxu0 %v2746
      %v2983 = vpop.f32.mrf.mxu0
      %v2984 = vadd.f32 0.0, %v2983
      %v2985 = vpop.f32.mrf.mxu0
      %2986 = vmatprep.mubr.f32.mxu0 0.0
      %2987 = vmatmul.mubr.f32.gmra.mxu0 %v2749
      %v2988 = vpop.f32.mrf.mxu0
      %v2989 = vadd.f32 0.0, %v2988
      %v2990 = vpop.f32.mrf.mxu0
      %2991 = vmatprep.mubr.f32.mxu0 0.0
      %2992 = vmatmul.mubr.f32.gmra.mxu0 %v2752
      %v2993 = vpop.f32.mrf.mxu0
      %v2994 = vadd.f32 0.0, %v2993
      %v2995 = vpop.f32.mrf.mxu0
      %2996 = vmatprep.mubr.f32.mxu0 0.0
      %2997 = vmatmul.mubr.f32.gmra.mxu0 %v2755
      %v2998 = vpop.f32.mrf.mxu0
      %v2999 = vadd.f32 0.0, %v2998
      %v3000 = vpop.f32.mrf.mxu0
      %3001 = vdwg.mxu0
      %vm3002 = vcmask 212992
      %3003 = vst.msk [vmem:[#allocation2] sm:$0x1] %vm3002, 0.0
      %3004 = vst.msk [vmem:[#allocation2 + $0x18] sm:$0x1] %vm3002, 0.0
      %3005 = vst.msk [vmem:[#allocation2 + $0x30] sm:$0x1] %vm3002, 0.0
      %3006 = vst.msk [vmem:[#allocation2 + $0x48] sm:$0x1] %vm3002, 0.0
      %3007 = vst.msk [vmem:[#allocation2 + $0x60] sm:$0x1] %vm3002, 0.0
      %3008 = vst.msk [vmem:[#allocation2 + $0x78] sm:$0x1] %vm3002, 0.0
      %3009 = vst.msk [vmem:[#allocation2 + $0x90] sm:$0x1] %vm3002, 0.0
      %3010 = vst.msk [vmem:[#allocation2 + $0xa8] sm:$0x1] %vm3002, 0.0
      %3011 = vst.msk [vmem:[#allocation2 + $0xc0] sm:$0x1] %vm3002, 0.0
      %3012 = vst.msk [vmem:[#allocation2 + $0xd8] sm:$0x1] %vm3002, 0.0
      %3013 = vst.msk [vmem:[#allocation2 + $0xf0] sm:$0x1] %vm3002, 0.0
      %3014 = vst.msk [vmem:[#allocation2 + $0x108] sm:$0x1] %vm3002, 0.0
      %3015 = vst.msk [vmem:[#allocation2 + $0x120] sm:$0x1] %vm3002, 0.0
      %3016 = vst.msk [vmem:[#allocation2 + $0x138] sm:$0x1] %vm3002, 0.0
      %3017 = vst.msk [vmem:[#allocation2 + $0x150] sm:$0x1] %vm3002, 0.0
      %3018 = vst.msk [vmem:[#allocation2 + $0x168] sm:$0x1] %vm3002, 0.0
      %3019 = vst.msk [vmem:[#allocation2 + $0x180] sm:$0x1] %vm3002, 0.0
      %3020 = vst.msk [vmem:[#allocation2 + $0x198] sm:$0x1] %vm3002, 0.0
      %3021 = vst.msk [vmem:[#allocation2 + $0x11] sm:$0x1] %vm3002, 0.0
      %3022 = vst.msk [vmem:[#allocation2 + $0x29] sm:$0x1] %vm3002, 0.0
      %3023 = vst.msk [vmem:[#allocation2 + $0x41] sm:$0x1] %vm3002, 0.0
      %3024 = vst.msk [vmem:[#allocation2 + $0x59] sm:$0x1] %vm3002, 0.0
      %3025 = vst.msk [vmem:[#allocation2 + $0x71] sm:$0x1] %vm3002, 0.0
      %3026 = vst.msk [vmem:[#allocation2 + $0x89] sm:$0x1] %vm3002, 0.0
      %3027 = vst.msk [vmem:[#allocation2 + $0xa1] sm:$0x1] %vm3002, 0.0
      %3028 = vst.msk [vmem:[#allocation2 + $0xb9] sm:$0x1] %vm3002, 0.0
      %3029 = vst.msk [vmem:[#allocation2 + $0xd1] sm:$0x1] %vm3002, 0.0
      %3030 = vst.msk [vmem:[#allocation2 + $0xe9] sm:$0x1] %vm3002, 0.0
      %3031 = vst.msk [vmem:[#allocation2 + $0x101] sm:$0x1] %vm3002, 0.0
      %3032 = vst.msk [vmem:[#allocation2 + $0x119] sm:$0x1] %vm3002, 0.0
      %3033 = vst.msk [vmem:[#allocation2 + $0x131] sm:$0x1] %vm3002, 0.0
      %3034 = vst.msk [vmem:[#allocation2 + $0x149] sm:$0x1] %vm3002, 0.0
      %3035 = vst.msk [vmem:[#allocation2 + $0x161] sm:$0x1] %vm3002, 0.0
      %3036 = vst.msk [vmem:[#allocation2 + $0x179] sm:$0x1] %vm3002, 0.0
      %3037 = vst.msk [vmem:[#allocation2 + $0x191] sm:$0x1] %vm3002, 0.0
      %3038 = vst.msk [vmem:[#allocation2 + $0x1a9] sm:$0x1] %vm3002, 0.0
      %3039 = vst.msk [vmem:[#allocation2 + $0x1] sm:$0xff] %vm1986, %v2824
      %3040 = vst.msk [vmem:[#allocation2 + $0x9] sm:$0xff] %vm1986, %v2829
      %3041 = vst.msk [vmem:[#allocation2 + $0x19] sm:$0xff] %vm1986, %v2834
      %3042 = vst.msk [vmem:[#allocation2 + $0x21] sm:$0xff] %vm1986, %v2839
      %3043 = vst.msk [vmem:[#allocation2 + $0x31] sm:$0xff] %vm1986, %v2844
      %3044 = vst.msk [vmem:[#allocation2 + $0x39] sm:$0xff] %vm1986, %v2849
      %3045 = vst.msk [vmem:[#allocation2 + $0x49] sm:$0xff] %vm1986, %v2854
      %3046 = vst.msk [vmem:[#allocation2 + $0x51] sm:$0xff] %vm1986, %v2859
      %3047 = vst.msk [vmem:[#allocation2 + $0x61] sm:$0xff] %vm1986, %v2864
      %3048 = vst.msk [vmem:[#allocation2 + $0x69] sm:$0xff] %vm1986, %v2869
      %3049 = vst.msk [vmem:[#allocation2 + $0x79] sm:$0xff] %vm1986, %v2874
      %3050 = vst.msk [vmem:[#allocation2 + $0x81] sm:$0xff] %vm1986, %v2879
      %3051 = vst.msk [vmem:[#allocation2 + $0x91] sm:$0xff] %vm1986, %v2884
      %3052 = vst.msk [vmem:[#allocation2 + $0x99] sm:$0xff] %vm1986, %v2889
      %3053 = vst.msk [vmem:[#allocation2 + $0xa9] sm:$0xff] %vm1986, %v2894
      %3054 = vst.msk [vmem:[#allocation2 + $0xb1] sm:$0xff] %vm1986, %v2899
      %3055 = vst.msk [vmem:[#allocation2 + $0xc1] sm:$0xff] %vm1986, %v2904
      %3056 = vst.msk [vmem:[#allocation2 + $0xc9] sm:$0xff] %vm1986, %v2909
      %3057 = vst.msk [vmem:[#allocation2 + $0xd9] sm:$0xff] %vm1986, %v2914
      %3058 = vst.msk [vmem:[#allocation2 + $0xe1] sm:$0xff] %vm1986, %v2919
      %3059 = vst.msk [vmem:[#allocation2 + $0xf1] sm:$0xff] %vm1986, %v2924
      %3060 = vst.msk [vmem:[#allocation2 + $0xf9] sm:$0xff] %vm1986, %v2929
      %3061 = vst.msk [vmem:[#allocation2 + $0x109] sm:$0xff] %vm1986, %v2934
      %3062 = vst.msk [vmem:[#allocation2 + $0x111] sm:$0xff] %vm1986, %v2939
      %3063 = vst.msk [vmem:[#allocation2 + $0x121] sm:$0xff] %vm1986, %v2944
      %3064 = vst.msk [vmem:[#allocation2 + $0x129] sm:$0xff] %vm1986, %v2949
      %3065 = vst.msk [vmem:[#allocation2 + $0x139] sm:$0xff] %vm1986, %v2954
      %3066 = vst.msk [vmem:[#allocation2 + $0x141] sm:$0xff] %vm1986, %v2959
      %3067 = vst.msk [vmem:[#allocation2 + $0x151] sm:$0xff] %vm1986, %v2964
      %3068 = vst.msk [vmem:[#allocation2 + $0x159] sm:$0xff] %vm1986, %v2969
      %3069 = vst.msk [vmem:[#allocation2 + $0x169] sm:$0xff] %vm1986, %v2974
      %3070 = vst.msk [vmem:[#allocation2 + $0x171] sm:$0xff] %vm1986, %v2979
      %3071 = vst.msk [vmem:[#allocation2 + $0x181] sm:$0xff] %vm1986, %v2984
      %3072 = vst.msk [vmem:[#allocation2 + $0x189] sm:$0xff] %vm1986, %v2989
      %3073 = vst.msk [vmem:[#allocation2 + $0x199] sm:$0xff] %vm1986, %v2994
      %3074 = vst.msk [vmem:[#allocation2 + $0x1a1] sm:$0xff] %vm1986, %v2999
      %v3075 = vld [vmem:[%s425 + $0x2] sm:$0xff]
      %v3076 = vld [vmem:[%s425 + $0xa] sm:$0xff]
      %v3077 = vld [vmem:[%s425 + $0x1a] sm:$0xff]
      %v3078 = vld [vmem:[%s425 + $0x22] sm:$0xff]
      %v3079 = vld [vmem:[%s425 + $0x32] sm:$0xff]
      %v3080 = vld [vmem:[%s425 + $0x3a] sm:$0xff]
      %v3081 = vld [vmem:[%s425 + $0x4a] sm:$0xff]
      %v3082 = vld [vmem:[%s425 + $0x52] sm:$0xff]
      %v3083 = vld [vmem:[%s425 + $0x62] sm:$0xff]
      %v3084 = vld [vmem:[%s425 + $0x6a] sm:$0xff]
      %v3085 = vld [vmem:[%s425 + $0x7a] sm:$0xff]
      %v3086 = vld [vmem:[%s425 + $0x82] sm:$0xff]
      %v3087 = vld [vmem:[%s425 + $0x92] sm:$0xff]
      %v3088 = vld [vmem:[%s425 + $0x9a] sm:$0xff]
      %v3089 = vld [vmem:[%s425 + $0xaa] sm:$0xff]
      %v3090 = vld [vmem:[%s425 + $0xb2] sm:$0xff]
      %v3091 = vld [vmem:[%s425 + $0xc2] sm:$0xff]
      %v3092 = vld [vmem:[%s425 + $0xca] sm:$0xff]
      %v3093 = vld [vmem:[%s425 + $0xda] sm:$0xff]
      %v3094 = vld [vmem:[%s425 + $0xe2] sm:$0xff]
      %v3095 = vld [vmem:[%s425 + $0xf2] sm:$0xff]
      %v3096 = vld [vmem:[%s425 + $0xfa] sm:$0xff]
      %v3097 = vld [vmem:[%s425 + $0x10a] sm:$0xff]
      %v3098 = vld [vmem:[%s425 + $0x112] sm:$0xff]
      %v3099 = vld [vmem:[%s425 + $0x122] sm:$0xff]
      %v3100 = vld [vmem:[%s425 + $0x12a] sm:$0xff]
      %v3101 = vld [vmem:[%s425 + $0x13a] sm:$0xff]
      %v3102 = vld [vmem:[%s425 + $0x142] sm:$0xff]
      %v3103 = vld [vmem:[%s425 + $0x152] sm:$0xff]
      %v3104 = vld [vmem:[%s425 + $0x15a] sm:$0xff]
      %v3105 = vld [vmem:[%s425 + $0x16a] sm:$0xff]
      %v3106 = vld [vmem:[%s425 + $0x172] sm:$0xff]
      %v3107 = vld [vmem:[#allocation2] sm:$0xff]
      %v3108 = vld [vmem:[#allocation2 + $0x8] sm:$0xff]
      %v3109 = vld [vmem:[#allocation2 + $0x18] sm:$0xff]
      %v3110 = vld [vmem:[#allocation2 + $0x20] sm:$0xff]
      %v3111 = vld [vmem:[#allocation2 + $0x30] sm:$0xff]
      %v3112 = vld [vmem:[#allocation2 + $0x38] sm:$0xff]
      %v3113 = vld [vmem:[#allocation2 + $0x48] sm:$0xff]
      %v3114 = vld [vmem:[#allocation2 + $0x50] sm:$0xff]
      %v3115 = vld [vmem:[#allocation2 + $0x60] sm:$0xff]
      %v3116 = vld [vmem:[#allocation2 + $0x68] sm:$0xff]
      %v3117 = vld [vmem:[#allocation2 + $0x78] sm:$0xff]
      %v3118 = vld [vmem:[#allocation2 + $0x80] sm:$0xff]
      %v3119 = vld [vmem:[#allocation2 + $0x90] sm:$0xff]
      %v3120 = vld [vmem:[#allocation2 + $0x98] sm:$0xff]
      %v3121 = vld [vmem:[#allocation2 + $0xa8] sm:$0xff]
      %v3122 = vld [vmem:[#allocation2 + $0xb0] sm:$0xff]
      %v3123 = vld [vmem:[#allocation2 + $0xc0] sm:$0xff]
      %v3124 = vld [vmem:[#allocation2 + $0xc8] sm:$0xff]
      %v3125 = vld [vmem:[#allocation2 + $0xd8] sm:$0xff]
      %v3126 = vld [vmem:[#allocation2 + $0xe0] sm:$0xff]
      %v3127 = vld [vmem:[#allocation2 + $0xf0] sm:$0xff]
      %v3128 = vld [vmem:[#allocation2 + $0xf8] sm:$0xff]
      %v3129 = vld [vmem:[#allocation2 + $0x108] sm:$0xff]
      %v3130 = vld [vmem:[#allocation2 + $0x110] sm:$0xff]
      %v3131 = vld [vmem:[#allocation2 + $0x120] sm:$0xff]
      %v3132 = vld [vmem:[#allocation2 + $0x128] sm:$0xff]
      %v3133 = vld [vmem:[#allocation2 + $0x138] sm:$0xff]
      %v3134 = vld [vmem:[#allocation2 + $0x140] sm:$0xff]
      %v3135 = vld [vmem:[#allocation2 + $0x150] sm:$0xff]
      %v3136 = vld [vmem:[#allocation2 + $0x158] sm:$0xff]
      %v3137 = vld [vmem:[#allocation2 + $0x168] sm:$0xff]
      %v3138 = vld [vmem:[#allocation2 + $0x170] sm:$0xff]
      %v3139 = vadd.f32 %v3075, %v3107
      %v3140 = vadd.f32 %v3076, %v3108
      %v3141 = vadd.f32 %v3077, %v3109
      %v3142 = vadd.f32 %v3078, %v3110
      %v3143 = vadd.f32 %v3079, %v3111
      %v3144 = vadd.f32 %v3080, %v3112
      %v3145 = vadd.f32 %v3081, %v3113
      %v3146 = vadd.f32 %v3082, %v3114
      %v3147 = vadd.f32 %v3083, %v3115
      %v3148 = vadd.f32 %v3084, %v3116
      %v3149 = vadd.f32 %v3085, %v3117
      %v3150 = vadd.f32 %v3086, %v3118
      %v3151 = vadd.f32 %v3087, %v3119
      %v3152 = vadd.f32 %v3088, %v3120
      %v3153 = vadd.f32 %v3089, %v3121
      %v3154 = vadd.f32 %v3090, %v3122
      %v3155 = vadd.f32 %v3091, %v3123
      %v3156 = vadd.f32 %v3092, %v3124
      %v3157 = vadd.f32 %v3093, %v3125
      %v3158 = vadd.f32 %v3094, %v3126
      %v3159 = vadd.f32 %v3095, %v3127
      %v3160 = vadd.f32 %v3096, %v3128
      %v3161 = vadd.f32 %v3097, %v3129
      %v3162 = vadd.f32 %v3098, %v3130
      %v3163 = vadd.f32 %v3099, %v3131
      %v3164 = vadd.f32 %v3100, %v3132
      %v3165 = vadd.f32 %v3101, %v3133
      %v3166 = vadd.f32 %v3102, %v3134
      %v3167 = vadd.f32 %v3103, %v3135
      %v3168 = vadd.f32 %v3104, %v3136
      %v3169 = vadd.f32 %v3105, %v3137
      %v3170 = vadd.f32 %v3106, %v3138
      %v3171 = vld [vmem:[#allocation2 + $0x1] sm:$0xff]
      %v3172 = vld [vmem:[#allocation2 + $0x9] sm:$0xff]
      %v3173 = vld [vmem:[#allocation2 + $0x19] sm:$0xff]
      %v3174 = vld [vmem:[#allocation2 + $0x21] sm:$0xff]
      %v3175 = vld [vmem:[#allocation2 + $0x31] sm:$0xff]
      %v3176 = vld [vmem:[#allocation2 + $0x39] sm:$0xff]
      %v3177 = vld [vmem:[#allocation2 + $0x49] sm:$0xff]
      %v3178 = vld [vmem:[#allocation2 + $0x51] sm:$0xff]
      %v3179 = vld [vmem:[#allocation2 + $0x61] sm:$0xff]
      %v3180 = vld [vmem:[#allocation2 + $0x69] sm:$0xff]
      %v3181 = vld [vmem:[#allocation2 + $0x79] sm:$0xff]
      %v3182 = vld [vmem:[#allocation2 + $0x81] sm:$0xff]
      %v3183 = vld [vmem:[#allocation2 + $0x91] sm:$0xff]
      %v3184 = vld [vmem:[#allocation2 + $0x99] sm:$0xff]
      %v3185 = vld [vmem:[#allocation2 + $0xa9] sm:$0xff]
      %v3186 = vld [vmem:[#allocation2 + $0xb1] sm:$0xff]
      %v3187 = vld [vmem:[#allocation2 + $0xc1] sm:$0xff]
      %v3188 = vld [vmem:[#allocation2 + $0xc9] sm:$0xff]
      %v3189 = vld [vmem:[#allocation2 + $0xd9] sm:$0xff]
      %v3190 = vld [vmem:[#allocation2 + $0xe1] sm:$0xff]
      %v3191 = vld [vmem:[#allocation2 + $0xf1] sm:$0xff]
      %v3192 = vld [vmem:[#allocation2 + $0xf9] sm:$0xff]
      %v3193 = vld [vmem:[#allocation2 + $0x109] sm:$0xff]
      %v3194 = vld [vmem:[#allocation2 + $0x111] sm:$0xff]
      %v3195 = vld [vmem:[#allocation2 + $0x121] sm:$0xff]
      %v3196 = vld [vmem:[#allocation2 + $0x129] sm:$0xff]
      %v3197 = vld [vmem:[#allocation2 + $0x139] sm:$0xff]
      %v3198 = vld [vmem:[#allocation2 + $0x141] sm:$0xff]
      %v3199 = vld [vmem:[#allocation2 + $0x151] sm:$0xff]
      %v3200 = vld [vmem:[#allocation2 + $0x159] sm:$0xff]
      %v3201 = vld [vmem:[#allocation2 + $0x169] sm:$0xff]
      %v3202 = vld [vmem:[#allocation2 + $0x171] sm:$0xff]
      %3235 = vrot.lane.b32.xlu0 %v3171, 125
      %v3236 = vpop.permute.xlu0 %3235
      %3237 = vrot.lane.b32.xlu0 %v3172, 125
      %v3238 = vpop.permute.xlu0 %3237
      %3239 = vrot.lane.b32.xlu0 %v3173, 125
      %v3240 = vpop.permute.xlu0 %3239
      %3241 = vrot.lane.b32.xlu0 %v3174, 125
      %v3242 = vpop.permute.xlu0 %3241
      %3243 = vrot.lane.b32.xlu0 %v3175, 125
      %v3244 = vpop.permute.xlu0 %3243
      %3245 = vrot.lane.b32.xlu0 %v3176, 125
      %v3246 = vpop.permute.xlu0 %3245
      %3247 = vrot.lane.b32.xlu0 %v3177, 125
      %v3248 = vpop.permute.xlu0 %3247
      %3249 = vrot.lane.b32.xlu0 %v3178, 125
      %v3250 = vpop.permute.xlu0 %3249
      %3251 = vrot.lane.b32.xlu0 %v3179, 125
      %v3252 = vpop.permute.xlu0 %3251
      %3253 = vrot.lane.b32.xlu0 %v3180, 125
      %v3254 = vpop.permute.xlu0 %3253
      %3255 = vrot.lane.b32.xlu0 %v3181, 125
      %v3256 = vpop.permute.xlu0 %3255
      %3257 = vrot.lane.b32.xlu0 %v3182, 125
      %v3258 = vpop.permute.xlu0 %3257
      %3259 = vrot.lane.b32.xlu0 %v3183, 125
      %v3260 = vpop.permute.xlu0 %3259
      %3261 = vrot.lane.b32.xlu0 %v3184, 125
      %v3262 = vpop.permute.xlu0 %3261
      %3263 = vrot.lane.b32.xlu0 %v3185, 125
      %v3264 = vpop.permute.xlu0 %3263
      %3265 = vrot.lane.b32.xlu0 %v3186, 125
      %v3266 = vpop.permute.xlu0 %3265
      %3267 = vrot.lane.b32.xlu0 %v3187, 125
      %v3268 = vpop.permute.xlu0 %3267
      %3269 = vrot.lane.b32.xlu0 %v3188, 125
      %v3270 = vpop.permute.xlu0 %3269
      %3271 = vrot.lane.b32.xlu0 %v3189, 125
      %v3272 = vpop.permute.xlu0 %3271
      %3273 = vrot.lane.b32.xlu0 %v3190, 125
      %v3274 = vpop.permute.xlu0 %3273
      %3275 = vrot.lane.b32.xlu0 %v3191, 125
      %v3276 = vpop.permute.xlu0 %3275
      %3277 = vrot.lane.b32.xlu0 %v3192, 125
      %v3278 = vpop.permute.xlu0 %3277
      %3279 = vrot.lane.b32.xlu0 %v3193, 125
      %v3280 = vpop.permute.xlu0 %3279
      %3281 = vrot.lane.b32.xlu0 %v3194, 125
      %v3282 = vpop.permute.xlu0 %3281
      %3283 = vrot.lane.b32.xlu0 %v3195, 125
      %v3284 = vpop.permute.xlu0 %3283
      %3285 = vrot.lane.b32.xlu0 %v3196, 125
      %v3286 = vpop.permute.xlu0 %3285
      %3287 = vrot.lane.b32.xlu0 %v3197, 125
      %v3288 = vpop.permute.xlu0 %3287
      %3289 = vrot.lane.b32.xlu0 %v3198, 125
      %v3290 = vpop.permute.xlu0 %3289
      %3291 = vrot.lane.b32.xlu0 %v3199, 125
      %v3292 = vpop.permute.xlu0 %3291
      %3293 = vrot.lane.b32.xlu0 %v3200, 125
      %v3294 = vpop.permute.xlu0 %3293
      %3295 = vrot.lane.b32.xlu0 %v3201, 125
      %v3296 = vpop.permute.xlu0 %3295
      %3297 = vrot.lane.b32.xlu0 %v3202, 125
      %v3298 = vpop.permute.xlu0 %3297
      %v3331 = vadd.f32 %v3139, %v3236
      %v3332 = vadd.f32 %v3140, %v3238
      %v3333 = vadd.f32 %v3141, %v3240
      %v3334 = vadd.f32 %v3142, %v3242
      %v3335 = vadd.f32 %v3143, %v3244
      %v3336 = vadd.f32 %v3144, %v3246
      %v3337 = vadd.f32 %v3145, %v3248
      %v3338 = vadd.f32 %v3146, %v3250
      %v3339 = vadd.f32 %v3147, %v3252
      %v3340 = vadd.f32 %v3148, %v3254
      %v3341 = vadd.f32 %v3149, %v3256
      %v3342 = vadd.f32 %v3150, %v3258
      %v3343 = vadd.f32 %v3151, %v3260
      %v3344 = vadd.f32 %v3152, %v3262
      %v3345 = vadd.f32 %v3153, %v3264
      %v3346 = vadd.f32 %v3154, %v3266
      %v3347 = vadd.f32 %v3155, %v3268
      %v3348 = vadd.f32 %v3156, %v3270
      %v3349 = vadd.f32 %v3157, %v3272
      %v3350 = vadd.f32 %v3158, %v3274
      %v3351 = vadd.f32 %v3159, %v3276
      %v3352 = vadd.f32 %v3160, %v3278
      %v3353 = vadd.f32 %v3161, %v3280
      %v3354 = vadd.f32 %v3162, %v3282
      %v3355 = vadd.f32 %v3163, %v3284
      %v3356 = vadd.f32 %v3164, %v3286
      %v3357 = vadd.f32 %v3165, %v3288
      %v3358 = vadd.f32 %v3166, %v3290
      %v3359 = vadd.f32 %v3167, %v3292
      %v3360 = vadd.f32 %v3168, %v3294
      %v3361 = vadd.f32 %v3169, %v3296
      %v3362 = vadd.f32 %v3170, %v3298
      %v3363 = vld [vmem:[#allocation2 + $0x2] sm:$0xff]
      %v3364 = vld [vmem:[#allocation2 + $0xa] sm:$0xff]
      %v3365 = vld [vmem:[#allocation2 + $0x1a] sm:$0xff]
      %v3366 = vld [vmem:[#allocation2 + $0x22] sm:$0xff]
      %v3367 = vld [vmem:[#allocation2 + $0x32] sm:$0xff]
      %v3368 = vld [vmem:[#allocation2 + $0x3a] sm:$0xff]
      %v3369 = vld [vmem:[#allocation2 + $0x4a] sm:$0xff]
      %v3370 = vld [vmem:[#allocation2 + $0x52] sm:$0xff]
      %v3371 = vld [vmem:[#allocation2 + $0x62] sm:$0xff]
      %v3372 = vld [vmem:[#allocation2 + $0x6a] sm:$0xff]
      %v3373 = vld [vmem:[#allocation2 + $0x7a] sm:$0xff]
      %v3374 = vld [vmem:[#allocation2 + $0x82] sm:$0xff]
      %v3375 = vld [vmem:[#allocation2 + $0x92] sm:$0xff]
      %v3376 = vld [vmem:[#allocation2 + $0x9a] sm:$0xff]
      %v3377 = vld [vmem:[#allocation2 + $0xaa] sm:$0xff]
      %v3378 = vld [vmem:[#allocation2 + $0xb2] sm:$0xff]
      %v3379 = vld [vmem:[#allocation2 + $0xc2] sm:$0xff]
      %v3380 = vld [vmem:[#allocation2 + $0xca] sm:$0xff]
      %v3381 = vld [vmem:[#allocation2 + $0xda] sm:$0xff]
      %v3382 = vld [vmem:[#allocation2 + $0xe2] sm:$0xff]
      %v3383 = vld [vmem:[#allocation2 + $0xf2] sm:$0xff]
      %v3384 = vld [vmem:[#allocation2 + $0xfa] sm:$0xff]
      %v3385 = vld [vmem:[#allocation2 + $0x10a] sm:$0xff]
      %v3386 = vld [vmem:[#allocation2 + $0x112] sm:$0xff]
      %v3387 = vld [vmem:[#allocation2 + $0x122] sm:$0xff]
      %v3388 = vld [vmem:[#allocation2 + $0x12a] sm:$0xff]
      %v3389 = vld [vmem:[#allocation2 + $0x13a] sm:$0xff]
      %v3390 = vld [vmem:[#allocation2 + $0x142] sm:$0xff]
      %v3391 = vld [vmem:[#allocation2 + $0x152] sm:$0xff]
      %v3392 = vld [vmem:[#allocation2 + $0x15a] sm:$0xff]
      %v3393 = vld [vmem:[#allocation2 + $0x16a] sm:$0xff]
      %v3394 = vld [vmem:[#allocation2 + $0x172] sm:$0xff]
      %3427 = vrot.lane.b32.xlu0 %v3363, 122
      %v3428 = vpop.permute.xlu0 %3427
      %3429 = vrot.lane.b32.xlu0 %v3364, 122
      %v3430 = vpop.permute.xlu0 %3429
      %3431 = vrot.lane.b32.xlu0 %v3365, 122
      %v3432 = vpop.permute.xlu0 %3431
      %3433 = vrot.lane.b32.xlu0 %v3366, 122
      %v3434 = vpop.permute.xlu0 %3433
      %3435 = vrot.lane.b32.xlu0 %v3367, 122
      %v3436 = vpop.permute.xlu0 %3435
      %3437 = vrot.lane.b32.xlu0 %v3368, 122
      %v3438 = vpop.permute.xlu0 %3437
      %3439 = vrot.lane.b32.xlu0 %v3369, 122
      %v3440 = vpop.permute.xlu0 %3439
      %3441 = vrot.lane.b32.xlu0 %v3370, 122
      %v3442 = vpop.permute.xlu0 %3441
      %3443 = vrot.lane.b32.xlu0 %v3371, 122
      %v3444 = vpop.permute.xlu0 %3443
      %3445 = vrot.lane.b32.xlu0 %v3372, 122
      %v3446 = vpop.permute.xlu0 %3445
      %3447 = vrot.lane.b32.xlu0 %v3373, 122
      %v3448 = vpop.permute.xlu0 %3447
      %3449 = vrot.lane.b32.xlu0 %v3374, 122
      %v3450 = vpop.permute.xlu0 %3449
      %3451 = vrot.lane.b32.xlu0 %v3375, 122
      %v3452 = vpop.permute.xlu0 %3451
      %3453 = vrot.lane.b32.xlu0 %v3376, 122
      %v3454 = vpop.permute.xlu0 %3453
      %3455 = vrot.lane.b32.xlu0 %v3377, 122
      %v3456 = vpop.permute.xlu0 %3455
      %3457 = vrot.lane.b32.xlu0 %v3378, 122
      %v3458 = vpop.permute.xlu0 %3457
      %3459 = vrot.lane.b32.xlu0 %v3379, 122
      %v3460 = vpop.permute.xlu0 %3459
      %3461 = vrot.lane.b32.xlu0 %v3380, 122
      %v3462 = vpop.permute.xlu0 %3461
      %3463 = vrot.lane.b32.xlu0 %v3381, 122
      %v3464 = vpop.permute.xlu0 %3463
      %3465 = vrot.lane.b32.xlu0 %v3382, 122
      %v3466 = vpop.permute.xlu0 %3465
      %3467 = vrot.lane.b32.xlu0 %v3383, 122
      %v3468 = vpop.permute.xlu0 %3467
      %3469 = vrot.lane.b32.xlu0 %v3384, 122
      %v3470 = vpop.permute.xlu0 %3469
      %3471 = vrot.lane.b32.xlu0 %v3385, 122
      %v3472 = vpop.permute.xlu0 %3471
      %3473 = vrot.lane.b32.xlu0 %v3386, 122
      %v3474 = vpop.permute.xlu0 %3473
      %3475 = vrot.lane.b32.xlu0 %v3387, 122
      %v3476 = vpop.permute.xlu0 %3475
      %3477 = vrot.lane.b32.xlu0 %v3388, 122
      %v3478 = vpop.permute.xlu0 %3477
      %3479 = vrot.lane.b32.xlu0 %v3389, 122
      %v3480 = vpop.permute.xlu0 %3479
      %3481 = vrot.lane.b32.xlu0 %v3390, 122
      %v3482 = vpop.permute.xlu0 %3481
      %3483 = vrot.lane.b32.xlu0 %v3391, 122
      %v3484 = vpop.permute.xlu0 %3483
      %3485 = vrot.lane.b32.xlu0 %v3392, 122
      %v3486 = vpop.permute.xlu0 %3485
      %3487 = vrot.lane.b32.xlu0 %v3393, 122
      %v3488 = vpop.permute.xlu0 %3487
      %3489 = vrot.lane.b32.xlu0 %v3394, 122
      %v3490 = vpop.permute.xlu0 %3489
      %v3523 = vadd.f32 %v3331, %v3428
      %v3524 = vadd.f32 %v3332, %v3430
      %v3525 = vadd.f32 %v3333, %v3432
      %v3526 = vadd.f32 %v3334, %v3434
      %v3527 = vadd.f32 %v3335, %v3436
      %v3528 = vadd.f32 %v3336, %v3438
      %v3529 = vadd.f32 %v3337, %v3440
      %v3530 = vadd.f32 %v3338, %v3442
      %v3531 = vadd.f32 %v3339, %v3444
      %v3532 = vadd.f32 %v3340, %v3446
      %v3533 = vadd.f32 %v3341, %v3448
      %v3534 = vadd.f32 %v3342, %v3450
      %v3535 = vadd.f32 %v3343, %v3452
      %v3536 = vadd.f32 %v3344, %v3454
      %v3537 = vadd.f32 %v3345, %v3456
      %v3538 = vadd.f32 %v3346, %v3458
      %v3539 = vadd.f32 %v3347, %v3460
      %v3540 = vadd.f32 %v3348, %v3462
      %v3541 = vadd.f32 %v3349, %v3464
      %v3542 = vadd.f32 %v3350, %v3466
      %v3543 = vadd.f32 %v3351, %v3468
      %v3544 = vadd.f32 %v3352, %v3470
      %v3545 = vadd.f32 %v3353, %v3472
      %v3546 = vadd.f32 %v3354, %v3474
      %v3547 = vadd.f32 %v3355, %v3476
      %v3548 = vadd.f32 %v3356, %v3478
      %v3549 = vadd.f32 %v3357, %v3480
      %v3550 = vadd.f32 %v3358, %v3482
      %v3551 = vadd.f32 %v3359, %v3484
      %v3552 = vadd.f32 %v3360, %v3486
      %v3553 = vadd.f32 %v3361, %v3488
      %v3554 = vadd.f32 %v3362, %v3490
      %s3555 = scalar_lea.vmem [#allocation2], 24
      %v3556 = vld [vmem:[%s3555] sm:$0xff]
      %v3557 = vld [vmem:[%s3555 + $0x8] sm:$0xff]
      %v3558 = vld [vmem:[%s3555 + $0x18] sm:$0xff]
      %v3559 = vld [vmem:[%s3555 + $0x20] sm:$0xff]
      %v3560 = vld [vmem:[%s3555 + $0x30] sm:$0xff]
      %v3561 = vld [vmem:[%s3555 + $0x38] sm:$0xff]
      %v3562 = vld [vmem:[%s3555 + $0x48] sm:$0xff]
      %v3563 = vld [vmem:[%s3555 + $0x50] sm:$0xff]
      %v3564 = vld [vmem:[%s3555 + $0x60] sm:$0xff]
      %v3565 = vld [vmem:[%s3555 + $0x68] sm:$0xff]
      %v3566 = vld [vmem:[%s3555 + $0x78] sm:$0xff]
      %v3567 = vld [vmem:[%s3555 + $0x80] sm:$0xff]
      %v3568 = vld [vmem:[%s3555 + $0x90] sm:$0xff]
      %v3569 = vld [vmem:[%s3555 + $0x98] sm:$0xff]
      %v3570 = vld [vmem:[%s3555 + $0xa8] sm:$0xff]
      %v3571 = vld [vmem:[%s3555 + $0xb0] sm:$0xff]
      %v3572 = vld [vmem:[%s3555 + $0xc0] sm:$0xff]
      %v3573 = vld [vmem:[%s3555 + $0xc8] sm:$0xff]
      %v3574 = vld [vmem:[%s3555 + $0xd8] sm:$0xff]
      %v3575 = vld [vmem:[%s3555 + $0xe0] sm:$0xff]
      %v3576 = vld [vmem:[%s3555 + $0xf0] sm:$0xff]
      %v3577 = vld [vmem:[%s3555 + $0xf8] sm:$0xff]
      %v3578 = vld [vmem:[%s3555 + $0x108] sm:$0xff]
      %v3579 = vld [vmem:[%s3555 + $0x110] sm:$0xff]
      %v3580 = vld [vmem:[%s3555 + $0x120] sm:$0xff]
      %v3581 = vld [vmem:[%s3555 + $0x128] sm:$0xff]
      %v3582 = vld [vmem:[%s3555 + $0x138] sm:$0xff]
      %v3583 = vld [vmem:[%s3555 + $0x140] sm:$0xff]
      %v3584 = vld [vmem:[%s3555 + $0x150] sm:$0xff]
      %v3585 = vld [vmem:[%s3555 + $0x158] sm:$0xff]
      %v3586 = vld [vmem:[%s3555 + $0x168] sm:$0xff]
      %v3587 = vld [vmem:[%s3555 + $0x170] sm:$0xff]
      %3620 = vrot.lane.b32.xlu0 %v3556, 119
      %v3621 = vpop.permute.xlu0 %3620
      %3622 = vrot.lane.b32.xlu0 %v3557, 119
      %v3623 = vpop.permute.xlu0 %3622
      %3624 = vrot.lane.b32.xlu0 %v3558, 119
      %v3625 = vpop.permute.xlu0 %3624
      %3626 = vrot.lane.b32.xlu0 %v3559, 119
      %v3627 = vpop.permute.xlu0 %3626
      %3628 = vrot.lane.b32.xlu0 %v3560, 119
      %v3629 = vpop.permute.xlu0 %3628
      %3630 = vrot.lane.b32.xlu0 %v3561, 119
      %v3631 = vpop.permute.xlu0 %3630
      %3632 = vrot.lane.b32.xlu0 %v3562, 119
      %v3633 = vpop.permute.xlu0 %3632
      %3634 = vrot.lane.b32.xlu0 %v3563, 119
      %v3635 = vpop.permute.xlu0 %3634
      %3636 = vrot.lane.b32.xlu0 %v3564, 119
      %v3637 = vpop.permute.xlu0 %3636
      %3638 = vrot.lane.b32.xlu0 %v3565, 119
      %v3639 = vpop.permute.xlu0 %3638
      %3640 = vrot.lane.b32.xlu0 %v3566, 119
      %v3641 = vpop.permute.xlu0 %3640
      %3642 = vrot.lane.b32.xlu0 %v3567, 119
      %v3643 = vpop.permute.xlu0 %3642
      %3644 = vrot.lane.b32.xlu0 %v3568, 119
      %v3645 = vpop.permute.xlu0 %3644
      %3646 = vrot.lane.b32.xlu0 %v3569, 119
      %v3647 = vpop.permute.xlu0 %3646
      %3648 = vrot.lane.b32.xlu0 %v3570, 119
      %v3649 = vpop.permute.xlu0 %3648
      %3650 = vrot.lane.b32.xlu0 %v3571, 119
      %v3651 = vpop.permute.xlu0 %3650
      %3652 = vrot.lane.b32.xlu0 %v3572, 119
      %v3653 = vpop.permute.xlu0 %3652
      %3654 = vrot.lane.b32.xlu0 %v3573, 119
      %v3655 = vpop.permute.xlu0 %3654
      %3656 = vrot.lane.b32.xlu0 %v3574, 119
      %v3657 = vpop.permute.xlu0 %3656
      %3658 = vrot.lane.b32.xlu0 %v3575, 119
      %v3659 = vpop.permute.xlu0 %3658
      %3660 = vrot.lane.b32.xlu0 %v3576, 119
      %v3661 = vpop.permute.xlu0 %3660
      %3662 = vrot.lane.b32.xlu0 %v3577, 119
      %v3663 = vpop.permute.xlu0 %3662
      %3664 = vrot.lane.b32.xlu0 %v3578, 119
      %v3665 = vpop.permute.xlu0 %3664
      %3666 = vrot.lane.b32.xlu0 %v3579, 119
      %v3667 = vpop.permute.xlu0 %3666
      %3668 = vrot.lane.b32.xlu0 %v3580, 119
      %v3669 = vpop.permute.xlu0 %3668
      %3670 = vrot.lane.b32.xlu0 %v3581, 119
      %v3671 = vpop.permute.xlu0 %3670
      %3672 = vrot.lane.b32.xlu0 %v3582, 119
      %v3673 = vpop.permute.xlu0 %3672
      %3674 = vrot.lane.b32.xlu0 %v3583, 119
      %v3675 = vpop.permute.xlu0 %3674
      %3676 = vrot.lane.b32.xlu0 %v3584, 119
      %v3677 = vpop.permute.xlu0 %3676
      %3678 = vrot.lane.b32.xlu0 %v3585, 119
      %v3679 = vpop.permute.xlu0 %3678
      %3680 = vrot.lane.b32.xlu0 %v3586, 119
      %v3681 = vpop.permute.xlu0 %3680
      %3682 = vrot.lane.b32.xlu0 %v3587, 119
      %v3683 = vpop.permute.xlu0 %3682
      %v3716 = vadd.f32 %v3523, %v3621
      %v3717 = vadd.f32 %v3524, %v3623
      %v3718 = vadd.f32 %v3525, %v3625
      %v3719 = vadd.f32 %v3526, %v3627
      %v3720 = vadd.f32 %v3527, %v3629
      %v3721 = vadd.f32 %v3528, %v3631
      %v3722 = vadd.f32 %v3529, %v3633
      %v3723 = vadd.f32 %v3530, %v3635
      %v3724 = vadd.f32 %v3531, %v3637
      %v3725 = vadd.f32 %v3532, %v3639
      %v3726 = vadd.f32 %v3533, %v3641
      %v3727 = vadd.f32 %v3534, %v3643
      %v3728 = vadd.f32 %v3535, %v3645
      %v3729 = vadd.f32 %v3536, %v3647
      %v3730 = vadd.f32 %v3537, %v3649
      %v3731 = vadd.f32 %v3538, %v3651
      %v3732 = vadd.f32 %v3539, %v3653
      %v3733 = vadd.f32 %v3540, %v3655
      %v3734 = vadd.f32 %v3541, %v3657
      %v3735 = vadd.f32 %v3542, %v3659
      %v3736 = vadd.f32 %v3543, %v3661
      %v3737 = vadd.f32 %v3544, %v3663
      %v3738 = vadd.f32 %v3545, %v3665
      %v3739 = vadd.f32 %v3546, %v3667
      %v3740 = vadd.f32 %v3547, %v3669
      %v3741 = vadd.f32 %v3548, %v3671
      %v3742 = vadd.f32 %v3549, %v3673
      %v3743 = vadd.f32 %v3550, %v3675
      %v3744 = vadd.f32 %v3551, %v3677
      %v3745 = vadd.f32 %v3552, %v3679
      %v3746 = vadd.f32 %v3553, %v3681
      %v3747 = vadd.f32 %v3554, %v3683
      %v3748 = vld [vmem:[%s3555 + $0x1] sm:$0xff]
      %v3749 = vld [vmem:[%s3555 + $0x9] sm:$0xff]
      %v3750 = vld [vmem:[%s3555 + $0x19] sm:$0xff]
      %v3751 = vld [vmem:[%s3555 + $0x21] sm:$0xff]
      %v3752 = vld [vmem:[%s3555 + $0x31] sm:$0xff]
      %v3753 = vld [vmem:[%s3555 + $0x39] sm:$0xff]
      %v3754 = vld [vmem:[%s3555 + $0x49] sm:$0xff]
      %v3755 = vld [vmem:[%s3555 + $0x51] sm:$0xff]
      %v3756 = vld [vmem:[%s3555 + $0x61] sm:$0xff]
      %v3757 = vld [vmem:[%s3555 + $0x69] sm:$0xff]
      %v3758 = vld [vmem:[%s3555 + $0x79] sm:$0xff]
      %v3759 = vld [vmem:[%s3555 + $0x81] sm:$0xff]
      %v3760 = vld [vmem:[%s3555 + $0x91] sm:$0xff]
      %v3761 = vld [vmem:[%s3555 + $0x99] sm:$0xff]
      %v3762 = vld [vmem:[%s3555 + $0xa9] sm:$0xff]
      %v3763 = vld [vmem:[%s3555 + $0xb1] sm:$0xff]
      %v3764 = vld [vmem:[%s3555 + $0xc1] sm:$0xff]
      %v3765 = vld [vmem:[%s3555 + $0xc9] sm:$0xff]
      %v3766 = vld [vmem:[%s3555 + $0xd9] sm:$0xff]
      %v3767 = vld [vmem:[%s3555 + $0xe1] sm:$0xff]
      %v3768 = vld [vmem:[%s3555 + $0xf1] sm:$0xff]
      %v3769 = vld [vmem:[%s3555 + $0xf9] sm:$0xff]
      %v3770 = vld [vmem:[%s3555 + $0x109] sm:$0xff]
      %v3771 = vld [vmem:[%s3555 + $0x111] sm:$0xff]
      %v3772 = vld [vmem:[%s3555 + $0x121] sm:$0xff]
      %v3773 = vld [vmem:[%s3555 + $0x129] sm:$0xff]
      %v3774 = vld [vmem:[%s3555 + $0x139] sm:$0xff]
      %v3775 = vld [vmem:[%s3555 + $0x141] sm:$0xff]
      %v3776 = vld [vmem:[%s3555 + $0x151] sm:$0xff]
      %v3777 = vld [vmem:[%s3555 + $0x159] sm:$0xff]
      %v3778 = vld [vmem:[%s3555 + $0x169] sm:$0xff]
      %v3779 = vld [vmem:[%s3555 + $0x171] sm:$0xff]
      %3812 = vrot.lane.b32.xlu0 %v3748, 116
      %v3813 = vpop.permute.xlu0 %3812
      %3814 = vrot.lane.b32.xlu0 %v3749, 116
      %v3815 = vpop.permute.xlu0 %3814
      %3816 = vrot.lane.b32.xlu0 %v3750, 116
      %v3817 = vpop.permute.xlu0 %3816
      %3818 = vrot.lane.b32.xlu0 %v3751, 116
      %v3819 = vpop.permute.xlu0 %3818
      %3820 = vrot.lane.b32.xlu0 %v3752, 116
      %v3821 = vpop.permute.xlu0 %3820
      %3822 = vrot.lane.b32.xlu0 %v3753, 116
      %v3823 = vpop.permute.xlu0 %3822
      %3824 = vrot.lane.b32.xlu0 %v3754, 116
      %v3825 = vpop.permute.xlu0 %3824
      %3826 = vrot.lane.b32.xlu0 %v3755, 116
      %v3827 = vpop.permute.xlu0 %3826
      %3828 = vrot.lane.b32.xlu0 %v3756, 116
      %v3829 = vpop.permute.xlu0 %3828
      %3830 = vrot.lane.b32.xlu0 %v3757, 116
      %v3831 = vpop.permute.xlu0 %3830
      %3832 = vrot.lane.b32.xlu0 %v3758, 116
      %v3833 = vpop.permute.xlu0 %3832
      %3834 = vrot.lane.b32.xlu0 %v3759, 116
      %v3835 = vpop.permute.xlu0 %3834
      %3836 = vrot.lane.b32.xlu0 %v3760, 116
      %v3837 = vpop.permute.xlu0 %3836
      %3838 = vrot.lane.b32.xlu0 %v3761, 116
      %v3839 = vpop.permute.xlu0 %3838
      %3840 = vrot.lane.b32.xlu0 %v3762, 116
      %v3841 = vpop.permute.xlu0 %3840
      %3842 = vrot.lane.b32.xlu0 %v3763, 116
      %v3843 = vpop.permute.xlu0 %3842
      %3844 = vrot.lane.b32.xlu0 %v3764, 116
      %v3845 = vpop.permute.xlu0 %3844
      %3846 = vrot.lane.b32.xlu0 %v3765, 116
      %v3847 = vpop.permute.xlu0 %3846
      %3848 = vrot.lane.b32.xlu0 %v3766, 116
      %v3849 = vpop.permute.xlu0 %3848
      %3850 = vrot.lane.b32.xlu0 %v3767, 116
      %v3851 = vpop.permute.xlu0 %3850
      %3852 = vrot.lane.b32.xlu0 %v3768, 116
      %v3853 = vpop.permute.xlu0 %3852
      %3854 = vrot.lane.b32.xlu0 %v3769, 116
      %v3855 = vpop.permute.xlu0 %3854
      %3856 = vrot.lane.b32.xlu0 %v3770, 116
      %v3857 = vpop.permute.xlu0 %3856
      %3858 = vrot.lane.b32.xlu0 %v3771, 116
      %v3859 = vpop.permute.xlu0 %3858
      %3860 = vrot.lane.b32.xlu0 %v3772, 116
      %v3861 = vpop.permute.xlu0 %3860
      %3862 = vrot.lane.b32.xlu0 %v3773, 116
      %v3863 = vpop.permute.xlu0 %3862
      %3864 = vrot.lane.b32.xlu0 %v3774, 116
      %v3865 = vpop.permute.xlu0 %3864
      %3866 = vrot.lane.b32.xlu0 %v3775, 116
      %v3867 = vpop.permute.xlu0 %3866
      %3868 = vrot.lane.b32.xlu0 %v3776, 116
      %v3869 = vpop.permute.xlu0 %3868
      %3870 = vrot.lane.b32.xlu0 %v3777, 116
      %v3871 = vpop.permute.xlu0 %3870
      %3872 = vrot.lane.b32.xlu0 %v3778, 116
      %v3873 = vpop.permute.xlu0 %3872
      %3874 = vrot.lane.b32.xlu0 %v3779, 116
      %v3875 = vpop.permute.xlu0 %3874
      %v3908 = vadd.f32 %v3716, %v3813
      %v3909 = vadd.f32 %v3717, %v3815
      %v3910 = vadd.f32 %v3718, %v3817
      %v3911 = vadd.f32 %v3719, %v3819
      %v3912 = vadd.f32 %v3720, %v3821
      %v3913 = vadd.f32 %v3721, %v3823
      %v3914 = vadd.f32 %v3722, %v3825
      %v3915 = vadd.f32 %v3723, %v3827
      %v3916 = vadd.f32 %v3724, %v3829
      %v3917 = vadd.f32 %v3725, %v3831
      %v3918 = vadd.f32 %v3726, %v3833
      %v3919 = vadd.f32 %v3727, %v3835
      %v3920 = vadd.f32 %v3728, %v3837
      %v3921 = vadd.f32 %v3729, %v3839
      %v3922 = vadd.f32 %v3730, %v3841
      %v3923 = vadd.f32 %v3731, %v3843
      %v3924 = vadd.f32 %v3732, %v3845
      %v3925 = vadd.f32 %v3733, %v3847
      %v3926 = vadd.f32 %v3734, %v3849
      %v3927 = vadd.f32 %v3735, %v3851
      %v3928 = vadd.f32 %v3736, %v3853
      %v3929 = vadd.f32 %v3737, %v3855
      %v3930 = vadd.f32 %v3738, %v3857
      %v3931 = vadd.f32 %v3739, %v3859
      %v3932 = vadd.f32 %v3740, %v3861
      %v3933 = vadd.f32 %v3741, %v3863
      %v3934 = vadd.f32 %v3742, %v3865
      %v3935 = vadd.f32 %v3743, %v3867
      %v3936 = vadd.f32 %v3744, %v3869
      %v3937 = vadd.f32 %v3745, %v3871
      %v3938 = vadd.f32 %v3746, %v3873
      %v3939 = vadd.f32 %v3747, %v3875
      %v3940 = vld [vmem:[%s3555 + $0x2] sm:$0xff]
      %v3941 = vld [vmem:[%s3555 + $0xa] sm:$0xff]
      %v3942 = vld [vmem:[%s3555 + $0x1a] sm:$0xff]
      %v3943 = vld [vmem:[%s3555 + $0x22] sm:$0xff]
      %v3944 = vld [vmem:[%s3555 + $0x32] sm:$0xff]
      %v3945 = vld [vmem:[%s3555 + $0x3a] sm:$0xff]
      %v3946 = vld [vmem:[%s3555 + $0x4a] sm:$0xff]
      %v3947 = vld [vmem:[%s3555 + $0x52] sm:$0xff]
      %v3948 = vld [vmem:[%s3555 + $0x62] sm:$0xff]
      %v3949 = vld [vmem:[%s3555 + $0x6a] sm:$0xff]
      %v3950 = vld [vmem:[%s3555 + $0x7a] sm:$0xff]
      %v3951 = vld [vmem:[%s3555 + $0x82] sm:$0xff]
      %v3952 = vld [vmem:[%s3555 + $0x92] sm:$0xff]
      %v3953 = vld [vmem:[%s3555 + $0x9a] sm:$0xff]
      %v3954 = vld [vmem:[%s3555 + $0xaa] sm:$0xff]
      %v3955 = vld [vmem:[%s3555 + $0xb2] sm:$0xff]
      %v3956 = vld [vmem:[%s3555 + $0xc2] sm:$0xff]
      %v3957 = vld [vmem:[%s3555 + $0xca] sm:$0xff]
      %v3958 = vld [vmem:[%s3555 + $0xda] sm:$0xff]
      %v3959 = vld [vmem:[%s3555 + $0xe2] sm:$0xff]
      %v3960 = vld [vmem:[%s3555 + $0xf2] sm:$0xff]
      %v3961 = vld [vmem:[%s3555 + $0xfa] sm:$0xff]
      %v3962 = vld [vmem:[%s3555 + $0x10a] sm:$0xff]
      %v3963 = vld [vmem:[%s3555 + $0x112] sm:$0xff]
      %v3964 = vld [vmem:[%s3555 + $0x122] sm:$0xff]
      %v3965 = vld [vmem:[%s3555 + $0x12a] sm:$0xff]
      %v3966 = vld [vmem:[%s3555 + $0x13a] sm:$0xff]
      %v3967 = vld [vmem:[%s3555 + $0x142] sm:$0xff]
      %v3968 = vld [vmem:[%s3555 + $0x152] sm:$0xff]
      %v3969 = vld [vmem:[%s3555 + $0x15a] sm:$0xff]
      %v3970 = vld [vmem:[%s3555 + $0x16a] sm:$0xff]
      %v3971 = vld [vmem:[%s3555 + $0x172] sm:$0xff]
      %4004 = vrot.lane.b32.xlu0 %v3940, 113
      %v4005 = vpop.permute.xlu0 %4004
      %4006 = vrot.lane.b32.xlu0 %v3941, 113
      %v4007 = vpop.permute.xlu0 %4006
      %4008 = vrot.lane.b32.xlu0 %v3942, 113
      %v4009 = vpop.permute.xlu0 %4008
      %4010 = vrot.lane.b32.xlu0 %v3943, 113
      %v4011 = vpop.permute.xlu0 %4010
      %4012 = vrot.lane.b32.xlu0 %v3944, 113
      %v4013 = vpop.permute.xlu0 %4012
      %4014 = vrot.lane.b32.xlu0 %v3945, 113
      %v4015 = vpop.permute.xlu0 %4014
      %4016 = vrot.lane.b32.xlu0 %v3946, 113
      %v4017 = vpop.permute.xlu0 %4016
      %4018 = vrot.lane.b32.xlu0 %v3947, 113
      %v4019 = vpop.permute.xlu0 %4018
      %4020 = vrot.lane.b32.xlu0 %v3948, 113
      %v4021 = vpop.permute.xlu0 %4020
      %4022 = vrot.lane.b32.xlu0 %v3949, 113
      %v4023 = vpop.permute.xlu0 %4022
      %4024 = vrot.lane.b32.xlu0 %v3950, 113
      %v4025 = vpop.permute.xlu0 %4024
      %4026 = vrot.lane.b32.xlu0 %v3951, 113
      %v4027 = vpop.permute.xlu0 %4026
      %4028 = vrot.lane.b32.xlu0 %v3952, 113
      %v4029 = vpop.permute.xlu0 %4028
      %4030 = vrot.lane.b32.xlu0 %v3953, 113
      %v4031 = vpop.permute.xlu0 %4030
      %4032 = vrot.lane.b32.xlu0 %v3954, 113
      %v4033 = vpop.permute.xlu0 %4032
      %4034 = vrot.lane.b32.xlu0 %v3955, 113
      %v4035 = vpop.permute.xlu0 %4034
      %4036 = vrot.lane.b32.xlu0 %v3956, 113
      %v4037 = vpop.permute.xlu0 %4036
      %4038 = vrot.lane.b32.xlu0 %v3957, 113
      %v4039 = vpop.permute.xlu0 %4038
      %4040 = vrot.lane.b32.xlu0 %v3958, 113
      %v4041 = vpop.permute.xlu0 %4040
      %4042 = vrot.lane.b32.xlu0 %v3959, 113
      %v4043 = vpop.permute.xlu0 %4042
      %4044 = vrot.lane.b32.xlu0 %v3960, 113
      %v4045 = vpop.permute.xlu0 %4044
      %4046 = vrot.lane.b32.xlu0 %v3961, 113
      %v4047 = vpop.permute.xlu0 %4046
      %4048 = vrot.lane.b32.xlu0 %v3962, 113
      %v4049 = vpop.permute.xlu0 %4048
      %4050 = vrot.lane.b32.xlu0 %v3963, 113
      %v4051 = vpop.permute.xlu0 %4050
      %4052 = vrot.lane.b32.xlu0 %v3964, 113
      %v4053 = vpop.permute.xlu0 %4052
      %4054 = vrot.lane.b32.xlu0 %v3965, 113
      %v4055 = vpop.permute.xlu0 %4054
      %4056 = vrot.lane.b32.xlu0 %v3966, 113
      %v4057 = vpop.permute.xlu0 %4056
      %4058 = vrot.lane.b32.xlu0 %v3967, 113
      %v4059 = vpop.permute.xlu0 %4058
      %4060 = vrot.lane.b32.xlu0 %v3968, 113
      %v4061 = vpop.permute.xlu0 %4060
      %4062 = vrot.lane.b32.xlu0 %v3969, 113
      %v4063 = vpop.permute.xlu0 %4062
      %4064 = vrot.lane.b32.xlu0 %v3970, 113
      %v4065 = vpop.permute.xlu0 %4064
      %4066 = vrot.lane.b32.xlu0 %v3971, 113
      %v4067 = vpop.permute.xlu0 %4066
      %v4100 = vadd.f32 %v3908, %v4005
      %v4101 = vadd.f32 %v3909, %v4007
      %v4102 = vadd.f32 %v3910, %v4009
      %v4103 = vadd.f32 %v3911, %v4011
      %v4104 = vadd.f32 %v3912, %v4013
      %v4105 = vadd.f32 %v3913, %v4015
      %v4106 = vadd.f32 %v3914, %v4017
      %v4107 = vadd.f32 %v3915, %v4019
      %v4108 = vadd.f32 %v3916, %v4021
      %v4109 = vadd.f32 %v3917, %v4023
      %v4110 = vadd.f32 %v3918, %v4025
      %v4111 = vadd.f32 %v3919, %v4027
      %v4112 = vadd.f32 %v3920, %v4029
      %v4113 = vadd.f32 %v3921, %v4031
      %v4114 = vadd.f32 %v3922, %v4033
      %v4115 = vadd.f32 %v3923, %v4035
      %v4116 = vadd.f32 %v3924, %v4037
      %v4117 = vadd.f32 %v3925, %v4039
      %v4118 = vadd.f32 %v3926, %v4041
      %v4119 = vadd.f32 %v3927, %v4043
      %v4120 = vadd.f32 %v3928, %v4045
      %v4121 = vadd.f32 %v3929, %v4047
      %v4122 = vadd.f32 %v3930, %v4049
      %v4123 = vadd.f32 %v3931, %v4051
      %v4124 = vadd.f32 %v3932, %v4053
      %v4125 = vadd.f32 %v3933, %v4055
      %v4126 = vadd.f32 %v3934, %v4057
      %v4127 = vadd.f32 %v3935, %v4059
      %v4128 = vadd.f32 %v3936, %v4061
      %v4129 = vadd.f32 %v3937, %v4063
      %v4130 = vadd.f32 %v3938, %v4065
      %v4131 = vadd.f32 %v3939, %v4067
      %s4132 = scalar_lea.vmem [#allocation2], 48
      %v4133 = vld [vmem:[%s4132] sm:$0xff]
      %v4134 = vld [vmem:[%s4132 + $0x8] sm:$0xff]
      %v4135 = vld [vmem:[%s4132 + $0x18] sm:$0xff]
      %v4136 = vld [vmem:[%s4132 + $0x20] sm:$0xff]
      %v4137 = vld [vmem:[%s4132 + $0x30] sm:$0xff]
      %v4138 = vld [vmem:[%s4132 + $0x38] sm:$0xff]
      %v4139 = vld [vmem:[%s4132 + $0x48] sm:$0xff]
      %v4140 = vld [vmem:[%s4132 + $0x50] sm:$0xff]
      %v4141 = vld [vmem:[%s4132 + $0x60] sm:$0xff]
      %v4142 = vld [vmem:[%s4132 + $0x68] sm:$0xff]
      %v4143 = vld [vmem:[%s4132 + $0x78] sm:$0xff]
      %v4144 = vld [vmem:[%s4132 + $0x80] sm:$0xff]
      %v4145 = vld [vmem:[%s4132 + $0x90] sm:$0xff]
      %v4146 = vld [vmem:[%s4132 + $0x98] sm:$0xff]
      %v4147 = vld [vmem:[%s4132 + $0xa8] sm:$0xff]
      %v4148 = vld [vmem:[%s4132 + $0xb0] sm:$0xff]
      %v4149 = vld [vmem:[%s4132 + $0xc0] sm:$0xff]
      %v4150 = vld [vmem:[%s4132 + $0xc8] sm:$0xff]
      %v4151 = vld [vmem:[%s4132 + $0xd8] sm:$0xff]
      %v4152 = vld [vmem:[%s4132 + $0xe0] sm:$0xff]
      %v4153 = vld [vmem:[%s4132 + $0xf0] sm:$0xff]
      %v4154 = vld [vmem:[%s4132 + $0xf8] sm:$0xff]
      %v4155 = vld [vmem:[%s4132 + $0x108] sm:$0xff]
      %v4156 = vld [vmem:[%s4132 + $0x110] sm:$0xff]
      %v4157 = vld [vmem:[%s4132 + $0x120] sm:$0xff]
      %v4158 = vld [vmem:[%s4132 + $0x128] sm:$0xff]
      %v4159 = vld [vmem:[%s4132 + $0x138] sm:$0xff]
      %v4160 = vld [vmem:[%s4132 + $0x140] sm:$0xff]
      %v4161 = vld [vmem:[%s4132 + $0x150] sm:$0xff]
      %v4162 = vld [vmem:[%s4132 + $0x158] sm:$0xff]
      %v4163 = vld [vmem:[%s4132 + $0x168] sm:$0xff]
      %v4164 = vld [vmem:[%s4132 + $0x170] sm:$0xff]
      %4197 = vrot.lane.b32.xlu0 %v4133, 110
      %v4198 = vpop.permute.xlu0 %4197
      %4199 = vrot.lane.b32.xlu0 %v4134, 110
      %v4200 = vpop.permute.xlu0 %4199
      %4201 = vrot.lane.b32.xlu0 %v4135, 110
      %v4202 = vpop.permute.xlu0 %4201
      %4203 = vrot.lane.b32.xlu0 %v4136, 110
      %v4204 = vpop.permute.xlu0 %4203
      %4205 = vrot.lane.b32.xlu0 %v4137, 110
      %v4206 = vpop.permute.xlu0 %4205
      %4207 = vrot.lane.b32.xlu0 %v4138, 110
      %v4208 = vpop.permute.xlu0 %4207
      %4209 = vrot.lane.b32.xlu0 %v4139, 110
      %v4210 = vpop.permute.xlu0 %4209
      %4211 = vrot.lane.b32.xlu0 %v4140, 110
      %v4212 = vpop.permute.xlu0 %4211
      %4213 = vrot.lane.b32.xlu0 %v4141, 110
      %v4214 = vpop.permute.xlu0 %4213
      %4215 = vrot.lane.b32.xlu0 %v4142, 110
      %v4216 = vpop.permute.xlu0 %4215
      %4217 = vrot.lane.b32.xlu0 %v4143, 110
      %v4218 = vpop.permute.xlu0 %4217
      %4219 = vrot.lane.b32.xlu0 %v4144, 110
      %v4220 = vpop.permute.xlu0 %4219
      %4221 = vrot.lane.b32.xlu0 %v4145, 110
      %v4222 = vpop.permute.xlu0 %4221
      %4223 = vrot.lane.b32.xlu0 %v4146, 110
      %v4224 = vpop.permute.xlu0 %4223
      %4225 = vrot.lane.b32.xlu0 %v4147, 110
      %v4226 = vpop.permute.xlu0 %4225
      %4227 = vrot.lane.b32.xlu0 %v4148, 110
      %v4228 = vpop.permute.xlu0 %4227
      %4229 = vrot.lane.b32.xlu0 %v4149, 110
      %v4230 = vpop.permute.xlu0 %4229
      %4231 = vrot.lane.b32.xlu0 %v4150, 110
      %v4232 = vpop.permute.xlu0 %4231
      %4233 = vrot.lane.b32.xlu0 %v4151, 110
      %v4234 = vpop.permute.xlu0 %4233
      %4235 = vrot.lane.b32.xlu0 %v4152, 110
      %v4236 = vpop.permute.xlu0 %4235
      %4237 = vrot.lane.b32.xlu0 %v4153, 110
      %v4238 = vpop.permute.xlu0 %4237
      %4239 = vrot.lane.b32.xlu0 %v4154, 110
      %v4240 = vpop.permute.xlu0 %4239
      %4241 = vrot.lane.b32.xlu0 %v4155, 110
      %v4242 = vpop.permute.xlu0 %4241
      %4243 = vrot.lane.b32.xlu0 %v4156, 110
      %v4244 = vpop.permute.xlu0 %4243
      %4245 = vrot.lane.b32.xlu0 %v4157, 110
      %v4246 = vpop.permute.xlu0 %4245
      %4247 = vrot.lane.b32.xlu0 %v4158, 110
      %v4248 = vpop.permute.xlu0 %4247
      %4249 = vrot.lane.b32.xlu0 %v4159, 110
      %v4250 = vpop.permute.xlu0 %4249
      %4251 = vrot.lane.b32.xlu0 %v4160, 110
      %v4252 = vpop.permute.xlu0 %4251
      %4253 = vrot.lane.b32.xlu0 %v4161, 110
      %v4254 = vpop.permute.xlu0 %4253
      %4255 = vrot.lane.b32.xlu0 %v4162, 110
      %v4256 = vpop.permute.xlu0 %4255
      %4257 = vrot.lane.b32.xlu0 %v4163, 110
      %v4258 = vpop.permute.xlu0 %4257
      %4259 = vrot.lane.b32.xlu0 %v4164, 110
      %v4260 = vpop.permute.xlu0 %4259
      %v4293 = vadd.f32 %v4100, %v4198
      %v4294 = vadd.f32 %v4101, %v4200
      %v4295 = vadd.f32 %v4102, %v4202
      %v4296 = vadd.f32 %v4103, %v4204
      %v4297 = vadd.f32 %v4104, %v4206
      %v4298 = vadd.f32 %v4105, %v4208
      %v4299 = vadd.f32 %v4106, %v4210
      %v4300 = vadd.f32 %v4107, %v4212
      %v4301 = vadd.f32 %v4108, %v4214
      %v4302 = vadd.f32 %v4109, %v4216
      %v4303 = vadd.f32 %v4110, %v4218
      %v4304 = vadd.f32 %v4111, %v4220
      %v4305 = vadd.f32 %v4112, %v4222
      %v4306 = vadd.f32 %v4113, %v4224
      %v4307 = vadd.f32 %v4114, %v4226
      %v4308 = vadd.f32 %v4115, %v4228
      %v4309 = vadd.f32 %v4116, %v4230
      %v4310 = vadd.f32 %v4117, %v4232
      %v4311 = vadd.f32 %v4118, %v4234
      %v4312 = vadd.f32 %v4119, %v4236
      %v4313 = vadd.f32 %v4120, %v4238
      %v4314 = vadd.f32 %v4121, %v4240
      %v4315 = vadd.f32 %v4122, %v4242
      %v4316 = vadd.f32 %v4123, %v4244
      %v4317 = vadd.f32 %v4124, %v4246
      %v4318 = vadd.f32 %v4125, %v4248
      %v4319 = vadd.f32 %v4126, %v4250
      %v4320 = vadd.f32 %v4127, %v4252
      %v4321 = vadd.f32 %v4128, %v4254
      %v4322 = vadd.f32 %v4129, %v4256
      %v4323 = vadd.f32 %v4130, %v4258
      %v4324 = vadd.f32 %v4131, %v4260
      %v4325 = vld [vmem:[%s4132 + $0x1] sm:$0xff]
      %v4326 = vld [vmem:[%s4132 + $0x9] sm:$0xff]
      %v4327 = vld [vmem:[%s4132 + $0x19] sm:$0xff]
      %v4328 = vld [vmem:[%s4132 + $0x21] sm:$0xff]
      %v4329 = vld [vmem:[%s4132 + $0x31] sm:$0xff]
      %v4330 = vld [vmem:[%s4132 + $0x39] sm:$0xff]
      %v4331 = vld [vmem:[%s4132 + $0x49] sm:$0xff]
      %v4332 = vld [vmem:[%s4132 + $0x51] sm:$0xff]
      %v4333 = vld [vmem:[%s4132 + $0x61] sm:$0xff]
      %v4334 = vld [vmem:[%s4132 + $0x69] sm:$0xff]
      %v4335 = vld [vmem:[%s4132 + $0x79] sm:$0xff]
      %v4336 = vld [vmem:[%s4132 + $0x81] sm:$0xff]
      %v4337 = vld [vmem:[%s4132 + $0x91] sm:$0xff]
      %v4338 = vld [vmem:[%s4132 + $0x99] sm:$0xff]
      %v4339 = vld [vmem:[%s4132 + $0xa9] sm:$0xff]
      %v4340 = vld [vmem:[%s4132 + $0xb1] sm:$0xff]
      %v4341 = vld [vmem:[%s4132 + $0xc1] sm:$0xff]
      %v4342 = vld [vmem:[%s4132 + $0xc9] sm:$0xff]
      %v4343 = vld [vmem:[%s4132 + $0xd9] sm:$0xff]
      %v4344 = vld [vmem:[%s4132 + $0xe1] sm:$0xff]
      %v4345 = vld [vmem:[%s4132 + $0xf1] sm:$0xff]
      %v4346 = vld [vmem:[%s4132 + $0xf9] sm:$0xff]
      %v4347 = vld [vmem:[%s4132 + $0x109] sm:$0xff]
      %v4348 = vld [vmem:[%s4132 + $0x111] sm:$0xff]
      %v4349 = vld [vmem:[%s4132 + $0x121] sm:$0xff]
      %v4350 = vld [vmem:[%s4132 + $0x129] sm:$0xff]
      %v4351 = vld [vmem:[%s4132 + $0x139] sm:$0xff]
      %v4352 = vld [vmem:[%s4132 + $0x141] sm:$0xff]
      %v4353 = vld [vmem:[%s4132 + $0x151] sm:$0xff]
      %v4354 = vld [vmem:[%s4132 + $0x159] sm:$0xff]
      %v4355 = vld [vmem:[%s4132 + $0x169] sm:$0xff]
      %v4356 = vld [vmem:[%s4132 + $0x171] sm:$0xff]
      %4389 = vrot.lane.b32.xlu0 %v4325, 107
      %v4390 = vpop.permute.xlu0 %4389
      %4391 = vrot.lane.b32.xlu0 %v4326, 107
      %v4392 = vpop.permute.xlu0 %4391
      %4393 = vrot.lane.b32.xlu0 %v4327, 107
      %v4394 = vpop.permute.xlu0 %4393
      %4395 = vrot.lane.b32.xlu0 %v4328, 107
      %v4396 = vpop.permute.xlu0 %4395
      %4397 = vrot.lane.b32.xlu0 %v4329, 107
      %v4398 = vpop.permute.xlu0 %4397
      %4399 = vrot.lane.b32.xlu0 %v4330, 107
      %v4400 = vpop.permute.xlu0 %4399
      %4401 = vrot.lane.b32.xlu0 %v4331, 107
      %v4402 = vpop.permute.xlu0 %4401
      %4403 = vrot.lane.b32.xlu0 %v4332, 107
      %v4404 = vpop.permute.xlu0 %4403
      %4405 = vrot.lane.b32.xlu0 %v4333, 107
      %v4406 = vpop.permute.xlu0 %4405
      %4407 = vrot.lane.b32.xlu0 %v4334, 107
      %v4408 = vpop.permute.xlu0 %4407
      %4409 = vrot.lane.b32.xlu0 %v4335, 107
      %v4410 = vpop.permute.xlu0 %4409
      %4411 = vrot.lane.b32.xlu0 %v4336, 107
      %v4412 = vpop.permute.xlu0 %4411
      %4413 = vrot.lane.b32.xlu0 %v4337, 107
      %v4414 = vpop.permute.xlu0 %4413
      %4415 = vrot.lane.b32.xlu0 %v4338, 107
      %v4416 = vpop.permute.xlu0 %4415
      %4417 = vrot.lane.b32.xlu0 %v4339, 107
      %v4418 = vpop.permute.xlu0 %4417
      %4419 = vrot.lane.b32.xlu0 %v4340, 107
      %v4420 = vpop.permute.xlu0 %4419
      %4421 = vrot.lane.b32.xlu0 %v4341, 107
      %v4422 = vpop.permute.xlu0 %4421
      %4423 = vrot.lane.b32.xlu0 %v4342, 107
      %v4424 = vpop.permute.xlu0 %4423
      %4425 = vrot.lane.b32.xlu0 %v4343, 107
      %v4426 = vpop.permute.xlu0 %4425
      %4427 = vrot.lane.b32.xlu0 %v4344, 107
      %v4428 = vpop.permute.xlu0 %4427
      %4429 = vrot.lane.b32.xlu0 %v4345, 107
      %v4430 = vpop.permute.xlu0 %4429
      %4431 = vrot.lane.b32.xlu0 %v4346, 107
      %v4432 = vpop.permute.xlu0 %4431
      %4433 = vrot.lane.b32.xlu0 %v4347, 107
      %v4434 = vpop.permute.xlu0 %4433
      %4435 = vrot.lane.b32.xlu0 %v4348, 107
      %v4436 = vpop.permute.xlu0 %4435
      %4437 = vrot.lane.b32.xlu0 %v4349, 107
      %v4438 = vpop.permute.xlu0 %4437
      %4439 = vrot.lane.b32.xlu0 %v4350, 107
      %v4440 = vpop.permute.xlu0 %4439
      %4441 = vrot.lane.b32.xlu0 %v4351, 107
      %v4442 = vpop.permute.xlu0 %4441
      %4443 = vrot.lane.b32.xlu0 %v4352, 107
      %v4444 = vpop.permute.xlu0 %4443
      %4445 = vrot.lane.b32.xlu0 %v4353, 107
      %v4446 = vpop.permute.xlu0 %4445
      %4447 = vrot.lane.b32.xlu0 %v4354, 107
      %v4448 = vpop.permute.xlu0 %4447
      %4449 = vrot.lane.b32.xlu0 %v4355, 107
      %v4450 = vpop.permute.xlu0 %4449
      %4451 = vrot.lane.b32.xlu0 %v4356, 107
      %v4452 = vpop.permute.xlu0 %4451
      %v4485 = vadd.f32 %v4293, %v4390
      %v4486 = vadd.f32 %v4294, %v4392
      %v4487 = vadd.f32 %v4295, %v4394
      %v4488 = vadd.f32 %v4296, %v4396
      %v4489 = vadd.f32 %v4297, %v4398
      %v4490 = vadd.f32 %v4298, %v4400
      %v4491 = vadd.f32 %v4299, %v4402
      %v4492 = vadd.f32 %v4300, %v4404
      %v4493 = vadd.f32 %v4301, %v4406
      %v4494 = vadd.f32 %v4302, %v4408
      %v4495 = vadd.f32 %v4303, %v4410
      %v4496 = vadd.f32 %v4304, %v4412
      %v4497 = vadd.f32 %v4305, %v4414
      %v4498 = vadd.f32 %v4306, %v4416
      %v4499 = vadd.f32 %v4307, %v4418
      %v4500 = vadd.f32 %v4308, %v4420
      %v4501 = vadd.f32 %v4309, %v4422
      %v4502 = vadd.f32 %v4310, %v4424
      %v4503 = vadd.f32 %v4311, %v4426
      %v4504 = vadd.f32 %v4312, %v4428
      %v4505 = vadd.f32 %v4313, %v4430
      %v4506 = vadd.f32 %v4314, %v4432
      %v4507 = vadd.f32 %v4315, %v4434
      %v4508 = vadd.f32 %v4316, %v4436
      %v4509 = vadd.f32 %v4317, %v4438
      %v4510 = vadd.f32 %v4318, %v4440
      %v4511 = vadd.f32 %v4319, %v4442
      %v4512 = vadd.f32 %v4320, %v4444
      %v4513 = vadd.f32 %v4321, %v4446
      %v4514 = vadd.f32 %v4322, %v4448
      %v4515 = vadd.f32 %v4323, %v4450
      %v4516 = vadd.f32 %v4324, %v4452
      %v4517 = vld [vmem:[%s4132 + $0x2] sm:$0xff]
      %v4518 = vld [vmem:[%s4132 + $0xa] sm:$0xff]
      %v4519 = vld [vmem:[%s4132 + $0x1a] sm:$0xff]
      %v4520 = vld [vmem:[%s4132 + $0x22] sm:$0xff]
      %v4521 = vld [vmem:[%s4132 + $0x32] sm:$0xff]
      %v4522 = vld [vmem:[%s4132 + $0x3a] sm:$0xff]
      %v4523 = vld [vmem:[%s4132 + $0x4a] sm:$0xff]
      %v4524 = vld [vmem:[%s4132 + $0x52] sm:$0xff]
      %v4525 = vld [vmem:[%s4132 + $0x62] sm:$0xff]
      %v4526 = vld [vmem:[%s4132 + $0x6a] sm:$0xff]
      %v4527 = vld [vmem:[%s4132 + $0x7a] sm:$0xff]
      %v4528 = vld [vmem:[%s4132 + $0x82] sm:$0xff]
      %v4529 = vld [vmem:[%s4132 + $0x92] sm:$0xff]
      %v4530 = vld [vmem:[%s4132 + $0x9a] sm:$0xff]
      %v4531 = vld [vmem:[%s4132 + $0xaa] sm:$0xff]
      %v4532 = vld [vmem:[%s4132 + $0xb2] sm:$0xff]
      %v4533 = vld [vmem:[%s4132 + $0xc2] sm:$0xff]
      %v4534 = vld [vmem:[%s4132 + $0xca] sm:$0xff]
      %v4535 = vld [vmem:[%s4132 + $0xda] sm:$0xff]
      %v4536 = vld [vmem:[%s4132 + $0xe2] sm:$0xff]
      %v4537 = vld [vmem:[%s4132 + $0xf2] sm:$0xff]
      %v4538 = vld [vmem:[%s4132 + $0xfa] sm:$0xff]
      %v4539 = vld [vmem:[%s4132 + $0x10a] sm:$0xff]
      %v4540 = vld [vmem:[%s4132 + $0x112] sm:$0xff]
      %v4541 = vld [vmem:[%s4132 + $0x122] sm:$0xff]
      %v4542 = vld [vmem:[%s4132 + $0x12a] sm:$0xff]
      %v4543 = vld [vmem:[%s4132 + $0x13a] sm:$0xff]
      %v4544 = vld [vmem:[%s4132 + $0x142] sm:$0xff]
      %v4545 = vld [vmem:[%s4132 + $0x152] sm:$0xff]
      %v4546 = vld [vmem:[%s4132 + $0x15a] sm:$0xff]
      %v4547 = vld [vmem:[%s4132 + $0x16a] sm:$0xff]
      %v4548 = vld [vmem:[%s4132 + $0x172] sm:$0xff]
      %4581 = vrot.lane.b32.xlu0 %v4517, 104
      %v4582 = vpop.permute.xlu0 %4581
      %4583 = vrot.lane.b32.xlu0 %v4518, 104
      %v4584 = vpop.permute.xlu0 %4583
      %4585 = vrot.lane.b32.xlu0 %v4519, 104
      %v4586 = vpop.permute.xlu0 %4585
      %4587 = vrot.lane.b32.xlu0 %v4520, 104
      %v4588 = vpop.permute.xlu0 %4587
      %4589 = vrot.lane.b32.xlu0 %v4521, 104
      %v4590 = vpop.permute.xlu0 %4589
      %4591 = vrot.lane.b32.xlu0 %v4522, 104
      %v4592 = vpop.permute.xlu0 %4591
      %4593 = vrot.lane.b32.xlu0 %v4523, 104
      %v4594 = vpop.permute.xlu0 %4593
      %4595 = vrot.lane.b32.xlu0 %v4524, 104
      %v4596 = vpop.permute.xlu0 %4595
      %4597 = vrot.lane.b32.xlu0 %v4525, 104
      %v4598 = vpop.permute.xlu0 %4597
      %4599 = vrot.lane.b32.xlu0 %v4526, 104
      %v4600 = vpop.permute.xlu0 %4599
      %4601 = vrot.lane.b32.xlu0 %v4527, 104
      %v4602 = vpop.permute.xlu0 %4601
      %4603 = vrot.lane.b32.xlu0 %v4528, 104
      %v4604 = vpop.permute.xlu0 %4603
      %4605 = vrot.lane.b32.xlu0 %v4529, 104
      %v4606 = vpop.permute.xlu0 %4605
      %4607 = vrot.lane.b32.xlu0 %v4530, 104
      %v4608 = vpop.permute.xlu0 %4607
      %4609 = vrot.lane.b32.xlu0 %v4531, 104
      %v4610 = vpop.permute.xlu0 %4609
      %4611 = vrot.lane.b32.xlu0 %v4532, 104
      %v4612 = vpop.permute.xlu0 %4611
      %4613 = vrot.lane.b32.xlu0 %v4533, 104
      %v4614 = vpop.permute.xlu0 %4613
      %4615 = vrot.lane.b32.xlu0 %v4534, 104
      %v4616 = vpop.permute.xlu0 %4615
      %4617 = vrot.lane.b32.xlu0 %v4535, 104
      %v4618 = vpop.permute.xlu0 %4617
      %4619 = vrot.lane.b32.xlu0 %v4536, 104
      %v4620 = vpop.permute.xlu0 %4619
      %4621 = vrot.lane.b32.xlu0 %v4537, 104
      %v4622 = vpop.permute.xlu0 %4621
      %4623 = vrot.lane.b32.xlu0 %v4538, 104
      %v4624 = vpop.permute.xlu0 %4623
      %4625 = vrot.lane.b32.xlu0 %v4539, 104
      %v4626 = vpop.permute.xlu0 %4625
      %4627 = vrot.lane.b32.xlu0 %v4540, 104
      %v4628 = vpop.permute.xlu0 %4627
      %4629 = vrot.lane.b32.xlu0 %v4541, 104
      %v4630 = vpop.permute.xlu0 %4629
      %4631 = vrot.lane.b32.xlu0 %v4542, 104
      %v4632 = vpop.permute.xlu0 %4631
      %4633 = vrot.lane.b32.xlu0 %v4543, 104
      %v4634 = vpop.permute.xlu0 %4633
      %4635 = vrot.lane.b32.xlu0 %v4544, 104
      %v4636 = vpop.permute.xlu0 %4635
      %4637 = vrot.lane.b32.xlu0 %v4545, 104
      %v4638 = vpop.permute.xlu0 %4637
      %4639 = vrot.lane.b32.xlu0 %v4546, 104
      %v4640 = vpop.permute.xlu0 %4639
      %4641 = vrot.lane.b32.xlu0 %v4547, 104
      %v4642 = vpop.permute.xlu0 %4641
      %4643 = vrot.lane.b32.xlu0 %v4548, 104
      %v4644 = vpop.permute.xlu0 %4643
      %v4677 = vadd.f32 %v4485, %v4582
      %v4678 = vadd.f32 %v4486, %v4584
      %v4679 = vadd.f32 %v4487, %v4586
      %v4680 = vadd.f32 %v4488, %v4588
      %v4681 = vadd.f32 %v4489, %v4590
      %v4682 = vadd.f32 %v4490, %v4592
      %v4683 = vadd.f32 %v4491, %v4594
      %v4684 = vadd.f32 %v4492, %v4596
      %v4685 = vadd.f32 %v4493, %v4598
      %v4686 = vadd.f32 %v4494, %v4600
      %v4687 = vadd.f32 %v4495, %v4602
      %v4688 = vadd.f32 %v4496, %v4604
      %v4689 = vadd.f32 %v4497, %v4606
      %v4690 = vadd.f32 %v4498, %v4608
      %v4691 = vadd.f32 %v4499, %v4610
      %v4692 = vadd.f32 %v4500, %v4612
      %v4693 = vadd.f32 %v4501, %v4614
      %v4694 = vadd.f32 %v4502, %v4616
      %v4695 = vadd.f32 %v4503, %v4618
      %v4696 = vadd.f32 %v4504, %v4620
      %v4697 = vadd.f32 %v4505, %v4622
      %v4698 = vadd.f32 %v4506, %v4624
      %v4699 = vadd.f32 %v4507, %v4626
      %v4700 = vadd.f32 %v4508, %v4628
      %v4701 = vadd.f32 %v4509, %v4630
      %v4702 = vadd.f32 %v4510, %v4632
      %v4703 = vadd.f32 %v4511, %v4634
      %v4704 = vadd.f32 %v4512, %v4636
      %v4705 = vadd.f32 %v4513, %v4638
      %v4706 = vadd.f32 %v4514, %v4640
      %v4707 = vadd.f32 %v4515, %v4642
      %v4708 = vadd.f32 %v4516, %v4644
      %v4709 = vlaneseq
      %v4710 = vand.u32 %v4709, 127
      %vm4711 = vcmp.eq.s32.totalorder %v2381, %v4710
      %v4712 = vsel %vm4711, 1, 0
      %v4713 = vcvt.s32.f32 %v4712
      %v4715 = vsel %vm1686, %v4713, 0
      %v4718 = vsel %vm1686, %v4677, 0
      %v4721 = vsel %vm1686, %v4678, 0
      %v4724 = vsel %vm1686, %v4679, 0
      %v4727 = vsel %vm1686, %v4680, 0
      %v4730 = vsel %vm1686, %v4681, 0
      %v4733 = vsel %vm1686, %v4682, 0
      %v4736 = vsel %vm1686, %v4683, 0
      %v4739 = vsel %vm1686, %v4684, 0
      %v4742 = vsel %vm1686, %v4685, 0
      %v4745 = vsel %vm1686, %v4686, 0
      %v4748 = vsel %vm1686, %v4687, 0
      %v4751 = vsel %vm1686, %v4688, 0
      %v4754 = vsel %vm1686, %v4689, 0
      %v4757 = vsel %vm1686, %v4690, 0
      %v4760 = vsel %vm1686, %v4691, 0
      %v4763 = vsel %vm1686, %v4692, 0
      %v4766 = vsel %vm1686, %v4693, 0
      %v4769 = vsel %vm1686, %v4694, 0
      %v4772 = vsel %vm1686, %v4695, 0
      %v4775 = vsel %vm1686, %v4696, 0
      %v4778 = vsel %vm1686, %v4697, 0
      %v4781 = vsel %vm1686, %v4698, 0
      %v4784 = vsel %vm1686, %v4699, 0
      %v4787 = vsel %vm1686, %v4700, 0
      %v4790 = vsel %vm1686, %v4701, 0
      %v4793 = vsel %vm1686, %v4702, 0
      %v4796 = vsel %vm1686, %v4703, 0
      %v4799 = vsel %vm1686, %v4704, 0
      %v4802 = vsel %vm1686, %v4705, 0
      %v4805 = vsel %vm1686, %v4706, 0
      %v4808 = vsel %vm1686, %v4707, 0
      %v4811 = vsel %vm1686, %v4708, 0
      %4813 = vmatprep.subr.mxu0 0.0
      %4814 = vmatpush1.xpose.msra.mxu0 %v4763
      %4815 = vmatprep.subr.mxu0 0.0
      %4816 = vmatpush1.xpose.msra.mxu0 %v4760
      %4817 = vmatprep.subr.mxu0 0.0
      %4818 = vmatpush1.xpose.msra.mxu0 %v4757
      %4819 = vmatprep.subr.mxu0 0.0
      %4820 = vmatpush1.xpose.msra.mxu0 %v4754
      %4821 = vmatprep.subr.mxu0 0.0
      %4822 = vmatpush1.xpose.msra.mxu0 %v4751
      %4823 = vmatprep.subr.mxu0 0.0
      %4824 = vmatpush1.xpose.msra.mxu0 %v4748
      %4825 = vmatprep.subr.mxu0 0.0
      %4826 = vmatpush1.xpose.msra.mxu0 %v4745
      %4827 = vmatprep.subr.mxu0 0.0
      %4828 = vmatpush1.xpose.msra.mxu0 %v4742
      %4829 = vmatprep.subr.mxu0 0.0
      %4830 = vmatpush1.xpose.msra.mxu0 %v4739
      %4831 = vmatprep.subr.mxu0 0.0
      %4832 = vmatpush1.xpose.msra.mxu0 %v4736
      %4833 = vmatprep.subr.mxu0 0.0
      %4834 = vmatpush1.xpose.msra.mxu0 %v4733
      %4835 = vmatprep.subr.mxu0 0.0
      %4836 = vmatpush1.xpose.msra.mxu0 %v4730
      %4837 = vmatprep.subr.mxu0 0.0
      %4838 = vmatpush1.xpose.msra.mxu0 %v4727
      %4839 = vmatprep.subr.mxu0 0.0
      %4840 = vmatpush1.xpose.msra.mxu0 %v4724
      %4841 = vmatprep.subr.mxu0 0.0
      %4842 = vmatpush1.xpose.msra.mxu0 %v4721
      %4843 = vmatprep.subr.mxu0 0.0
      %4844 = vmatpush1.xpose.msra.mxu0 %v4718
      %4845 = vmatprep.subr.mxu0 0.0
      %4846 = vmatpush2.xpose.msra.mxu0 %v4811
      %4847 = vmatprep.subr.mxu0 0.0
      %4848 = vmatpush2.xpose.msra.mxu0 %v4808
      %4849 = vmatprep.subr.mxu0 0.0
      %4850 = vmatpush2.xpose.msra.mxu0 %v4805
      %4851 = vmatprep.subr.mxu0 0.0
      %4852 = vmatpush2.xpose.msra.mxu0 %v4802
      %4853 = vmatprep.subr.mxu0 0.0
      %4854 = vmatpush2.xpose.msra.mxu0 %v4799
      %4855 = vmatprep.subr.mxu0 0.0
      %4856 = vmatpush2.xpose.msra.mxu0 %v4796
      %4857 = vmatprep.subr.mxu0 0.0
      %4858 = vmatpush2.xpose.msra.mxu0 %v4793
      %4859 = vmatprep.subr.mxu0 0.0
      %4860 = vmatpush2.xpose.msra.mxu0 %v4790
      %4861 = vmatprep.subr.mxu0 0.0
      %4862 = vmatpush2.xpose.msra.mxu0 %v4787
      %4863 = vmatprep.subr.mxu0 0.0
      %4864 = vmatpush2.xpose.msra.mxu0 %v4784
      %4865 = vmatprep.subr.mxu0 0.0
      %4866 = vmatpush2.xpose.msra.mxu0 %v4781
      %4867 = vmatprep.subr.mxu0 0.0
      %4868 = vmatpush2.xpose.msra.mxu0 %v4778
      %4869 = vmatprep.subr.mxu0 0.0
      %4870 = vmatpush2.xpose.msra.mxu0 %v4775
      %4871 = vmatprep.subr.mxu0 0.0
      %4872 = vmatpush2.xpose.msra.mxu0 %v4772
      %4873 = vmatprep.subr.mxu0 0.0
      %4874 = vmatpush2.xpose.msra.mxu0 %v4769
      %4875 = vmatprep.subr.mxu0 0.0
      %4876 = vmatpush2.xpose.msra.mxu0 %v4766
      %4877 = vmatprep.mubr.f32.mxu0 0.0
      %4878 = vmatmul.mubr.f32.gmra.mxu0 %v4715
      %v4879 = vpop.f32.mrf.mxu0
      %v4880 = vadd.f32 0.0, %v4879
      %v4881 = vpop.f32.mrf.mxu0
      %v4882 = vadd.f32 0.0, %v4881
      %4883 = vdwg.mxu0
      %v4886 = vcombine.low %v4880, %v4882
      %4888 = vst [vmem:[%s206] sm:$0x77] %v4886
      %s4889 = smul.u32 2, %s19
      %p4890 = scmp.lt.s32.totalorder %s18, 1
      %s4891 = scalar_select %p4890, %s18, 1
      %p4892 = scmp.lt.s32.totalorder %s4889, 1
      %s4893 = scalar_select %p4892, %s4889, 1
      %s4894 = smul.addr %s4891, 2
      %s4895 = sadd.s32 %s4893, %s4894
      %s4896 = smul.addr %s4895, 4
      %s4897 = scalar_lea.vmem %s3, %s4896
      // Predicated region
      $region33: #{tpu_custom_call.1} parent=31 // pred_check
        %p4898 = pneg %p116
      $region34: #{tpu_custom_call.1} parent=31 // pred_check_branch
        %4900 = sbr.rel (%p4898) target = $region36
      $region35: #{tpu_custom_call.1} parent=31 // pred_region
        %s4901 = smul.u32 2, %s19
      $region36: #{tpu_custom_call.1} parent=31 // pred_fallthru
        _
    $region32: #{tpu_custom_call.1} parent=5 // pred_fallthru
      _
    %p4902 = scmp.le.s32.totalorder 2, %s9
    // Predicated region
    $region37: #{tpu_custom_call.1} parent=5 // pred_check
      %p4903 = pneg %p4902
    $region38: #{tpu_custom_call.1} parent=5 // pred_check_branch
      %4905 = sbr.rel (%p4903) target = $region40
    $region39: #{tpu_custom_call.1} parent=5 // pred_region
      %s4906 = ssub.s32 %s9, 2
      // Predicated region
      $region41: #{tpu_custom_call.1} parent=39 // pred_check
        %p4907 = pneg %p122
      $region42: #{tpu_custom_call.1} parent=39 // pred_check_branch
        %4909 = sbr.rel (%p4907) target = $region44
      $region43: #{tpu_custom_call.1} parent=39 // pred_region
        %s4910 = smul.u32 2, %s21
        %p4911 = scmp.lt.s32.totalorder %s20, 1
        %s4912 = scalar_select %p4911, %s20, 1
        %p4913 = scmp.lt.s32.totalorder %s4910, 1
        %s4914 = scalar_select %p4913, %s4910, 1
        %s4915 = smul.addr %s4912, 2
        %s4916 = sadd.s32 %s4914, %s4915
        %s4917 = smul.addr %s4916, 4
        %s4918 = scalar_lea.vmem %s3, %s4917
      $region44: #{tpu_custom_call.1} parent=39 // pred_fallthru
        _
    $region40: #{tpu_custom_call.1} parent=5 // pred_fallthru
      _
  $region6: #{tpu_custom_call.1} parent=0 // loop_footer
    %s13 = sadd.s32 1, %s9
  $region7: #{tpu_custom_call.1} parent=0 // loop_footer_branch
    %8 = sbr.rel target = $region3
  $region8: #{tpu_custom_call.1} parent=0 // loop_exit
    _

</llo_original>
